<compile_context>
chip_gen: v7x
topology: tpu7x:2x2x1
jax: 0.10.0
libtpu: 0.0.40
codegen_flags: <defaults>
</compile_context>

<pallas_src>
import functools

import jax
import jax.numpy as jnp
from jax.experimental import pallas as pl
from jax.experimental.pallas import tpu as pltpu


def _aspp_kernel(x_ref, w_ref, b_ref, o_ref, *, offsets, M):
    """Fused multi-rate dilated 3x3 conv for one image.

    x_ref: (1, Cin_p, Mp)    bf16  zero-padded image, spatial flattened (lanes)
    w_ref: (T, Cout, Cin_p)  bf16  per-distinct-tap weight matrices
    b_ref: (Cout, 1)         f32   summed biases of all branches
    o_ref: (1, Cout, M)            M = H * Wp (full padded rows; wrapper slices
                                   out the valid output columns)
    """
    acc = None
    # Statically unrolled tap loop: each tap is a contiguous lane-slice of the
    # flattened padded image fed straight into the MXU (no slab materialized),
    # accumulated in f32.
    for t, s in enumerate(offsets):
        part = jnp.dot(w_ref[t], x_ref[0, :, s:s + M],
                       preferred_element_type=jnp.float32)      # (Cout, M)
        acc = part if acc is None else acc + part

    acc = acc + b_ref[...]                                      # bias (f32)
    # Lane-dense store: last dim is M (multiple of 128-class), not Cout.
    o_ref[0] = acc.astype(o_ref.dtype)


def aspp_forward(x_nchw, weights, biases, rates, *, compute_dtype=jnp.bfloat16):
    """x_nchw: (N, Cin, H, W); weights: list of (Cout, Cin, 3, 3); biases: list of (Cout,)."""
    N, Cin, H, W = x_nchw.shape
    Cout = weights[0].shape[0]
    rates = tuple(int(r) for r in rates)
    pad = max(rates)
    out_dtype = x_nchw.dtype

    # Sublane packing of the compute dtype (bf16 -> 16, f32 -> 8): pad Cin so
    # every per-tap operand is whole sublane tiles.
    itemsize = jnp.dtype(compute_dtype).itemsize
    cin_align = 8 * (4 // itemsize)
    Cin_p = -(-Cin // cin_align) * cin_align

    # One extra zero row top/bottom keeps every flattened tap slice in bounds
    # (|dx| <= pad < Wp).  Garbage columns from cross-row reads only land in
    # the padded output columns, which the wrapper discards.
    ep = 1
    Wp = W + 2 * pad
    Hp = H + 2 * (pad + ep)
    Mp = Hp * Wp                 # flattened padded spatial extent (lane dim)
    M = H * Wp                   # rows computed per image (full padded width)

    # ---- glue (plain JAX): cast FIRST, then zero-pad + flatten spatial ----
    # (casting before the pad halves the HBM traffic of the padded copy).
    x_c = x_nchw.astype(compute_dtype)
    x_pad = jnp.pad(
        x_c, ((0, 0), (0, Cin_p - Cin), (pad + ep, pad + ep), (pad, pad)))
    x_flat = x_pad.reshape(N, Cin_p, Mp)
    # TODO(synk): move the halo fill into the kernel (DMA unpadded rows into a
    # VMEM scratch + memset halo) to remove this extra HBM round-trip entirely.

    # ---- pack weights: one (Cout, Cin) matrix per *distinct* tap offset ----
    # Offset of tap (rate r, ky, kx) into the flattened padded image:
    #   s = (pad + ep + (ky-1)*r) * Wp + (kx-1)*r
    # The centre tap of every rate maps to the same offset -> weights summed.
    tap_w = {}
    tap_order = []
    for w, r in zip(weights, rates):
        for ky in range(3):
            for kx in range(3):
                s = (pad + ep + (ky - 1) * r) * Wp + (kx - 1) * r
                wt = w[:, :, ky, kx]                       # (Cout, Cin)
                if s in tap_w:
                    tap_w[s] = tap_w[s] + wt
                else:
                    tap_w[s] = wt
                    tap_order.append(s)
    offsets = tuple(tap_order)
    T = len(offsets)

    w_stack = jnp.stack([tap_w[s] for s in offsets], axis=0)      # (T, Cout, Cin)
    w_stack = jnp.pad(w_stack, ((0, 0), (0, 0), (0, Cin_p - Cin)))
    w_packed = w_stack.astype(compute_dtype)                      # (T, Cout, Cin_p)
    # TODO(synk): at production sizes, block this along K (tap x Cin) as a
    # reduction grid axis instead of keeping the whole weight resident.

    b_sum = functools.reduce(lambda a, b: a + b, biases)
    b_sum = b_sum.reshape(Cout, 1).astype(jnp.float32)

    kernel = functools.partial(_aspp_kernel, offsets=offsets, M=M)

    # Advisory cost estimate (real FLOPs / bytes) for XLA scheduling.
    flops = 2 * N * T * Cout * Cin_p * M
    bytes_accessed = (N * Cin_p * Mp * itemsize
                      + T * Cout * Cin_p * itemsize
                      + Cout * 4
                      + N * Cout * M * jnp.dtype(out_dtype).itemsize)
    cost = pl.CostEstimate(flops=flops, transcendentals=0,
                           bytes_accessed=bytes_accessed)

    # Raise the scoped VMEM limit only when the resident blocks actually need
    # it (double-buffered input/weight/output blocks).
    block_bytes = (Cin_p * Mp * itemsize
                   + T * Cout * Cin_p * itemsize
                   + Cout * 4
                   + Cout * M * jnp.dtype(out_dtype).itemsize)
    vmem_limit = None
    if 2 * block_bytes > 24 * (1 << 20):
        vmem_limit = int(min(2.5 * block_bytes, 100 * (1 << 20)))

    out_flat = pl.pallas_call(
        kernel,
        out_shape=jax.ShapeDtypeStruct((N, Cout, M), out_dtype),
        grid_spec=pltpu.PrefetchScalarGridSpec(
            num_scalar_prefetch=0,
            grid=(N,),
            in_specs=[
                pl.BlockSpec((1, Cin_p, Mp), lambda n: (n, 0, 0)),
                pl.BlockSpec((T, Cout, Cin_p), lambda n: (0, 0, 0)),
                pl.BlockSpec((Cout, 1), lambda n: (0, 0)),
            ],
            out_specs=pl.BlockSpec((1, Cout, M), lambda n: (n, 0, 0)),
        ),
        compiler_params=pltpu.CompilerParams(
            dimension_semantics=("parallel",),
            vmem_limit_bytes=vmem_limit,
        ),
        cost_estimate=cost,
    )(x_flat, w_packed, b_sum)

    # (N, Cout, M) -> (N, Cout, H, Wp) -> keep valid columns; already NCHW.
    # NOTE: in a real pipeline this column slice should be fused into the
    # consumer instead of paying an extra full-output pass here.
    out = out_flat.reshape(N, Cout, H, Wp)[:, :, :, pad:pad + W]
    return out


def aspp_reference(x_nchw, weights, biases, rates):
    """Pure-JAX reference mirroring the PyTorch forward (for verification)."""
    out = None
    for w, b, r in zip(weights, biases, rates):
        y = jax.lax.conv_general_dilated(
            x_nchw, w,
            window_strides=(1, 1),
            padding=((r, r), (r, r)),
            rhs_dilation=(r, r),
            dimension_numbers=("NCHW", "OIHW", "NCHW"),
            preferred_element_type=jnp.float32,
        ) + b[None, :, None, None]
        out = y if out is None else out + y
    return out


if __name__ == "__main__":
    # Small deterministic setup.
    N, Cin, Cout, H, W = 2, 4, 8, 16, 16
    rates = (1, 2, 4)

    key = jax.random.PRNGKey(0)
    kx_, kb_, *kw = jax.random.split(key, 2 + len(rates))

    x = jax.random.normal(kx_, (N, Cin, H, W), dtype=jnp.float32)

    # PyTorch __init__: weight ~ Normal(0, 0.01); biases are 0 at init but the
    # forward works for any bias, so use small nonzero biases to exercise the
    # bias path in the test.
    weights = [
        0.01 * jax.random.normal(k, (Cout, Cin, 3, 3), dtype=jnp.float32)
        for k in kw
    ]
    bkeys = jax.random.split(kb_, len(rates))
    biases = [0.01 * jax.random.normal(k, (Cout,), dtype=jnp.float32)
              for k in bkeys]

    out = aspp_forward(x, weights, biases, rates)
    out = jax.block_until_ready(out)
    assert out.shape == (N, Cout, H, W)

    # Rigor: compare against an f32-accumulated reference evaluated on the
    # SAME bf16-rounded inputs/weights the kernel sees, with a tolerance that
    # is ~20x below a single-tap-sized error (so it catches offset/packing
    # bugs), while allowing the centre-tap pre-sum rounding difference.
    x_bf = x.astype(jnp.bfloat16).astype(jnp.float32)
    w_bf = [w.astype(jnp.bfloat16).astype(jnp.float32) for w in weights]
    ref = aspp_reference(x_bf, w_bf, biases, rates)
    assert jnp.allclose(out, ref, atol=2e-3, rtol=1e-3), \
        "mismatch vs bf16-matched reference conv"

    # Loose sanity check against the pure-f32 reference as well.
    ref_f32 = aspp_reference(x, weights, biases, rates)
    assert jnp.allclose(out, ref_f32, atol=1e-2, rtol=1e-2), \
        "mismatch vs f32 reference conv"

    print("KERNEL_OK")
</pallas_src>

<mosaic_0001>
module attributes {stable_mosaic.version = 11 : i64} {
  func.func @_aspp_kernel(%arg0: i32, %arg1: memref<1x16x624xbf16, #tpu.memory_space<vmem>>, %arg2: memref<25x8x16xbf16, #tpu.memory_space<vmem>>, %arg3: memref<8x1xf32, #tpu.memory_space<vmem>>, %arg4: memref<1x8x384xf32, #tpu.memory_space<vmem>>) attributes {dimension_semantics = [#tpu.dimension_semantics<parallel>], iteration_bounds = array<i64: 2>, scalar_prefetch = 0 : i64, scratch_operands = 0 : i64, tpu.core_type = #tpu.core_type<tc>, window_params = [{transform_indices = @transform_0, window_bounds = array<i64: 1, 16, 624>}, {pipeline_mode = #tpu.pipeline_mode<synchronous>, transform_indices = @transform_1, window_bounds = array<i64: 25, 8, 16>}, {pipeline_mode = #tpu.pipeline_mode<synchronous>, transform_indices = @transform_2, window_bounds = array<i64: 8, 1>}, {transform_indices = @transform_3, window_bounds = array<i64: 1, 8, 384>}]} {
    %c0 = arith.constant 0 : index
    %c0_0 = arith.constant 0 : index
    %c0_1 = arith.constant 0 : index
    %0 = vector.load %arg2[%c0, %c0_0, %c0_1] : memref<25x8x16xbf16, #tpu.memory_space<vmem>>, vector<1x8x16xbf16>
    %1 = vector.shape_cast %0 : vector<1x8x16xbf16> to vector<8x16xbf16>
    %c0_2 = arith.constant 0 : index
    %c0_3 = arith.constant 0 : index
    %c95 = arith.constant 95 : index
    %2 = vector.load %arg1[%c0_2, %c0_3, %c95] : memref<1x16x624xbf16, #tpu.memory_space<vmem>>, vector<1x16x384xbf16>
    %3 = vector.shape_cast %2 : vector<1x16x384xbf16> to vector<16x384xbf16>
    %cst = arith.constant dense<0.000000e+00> : vector<8x384xf32>
    %4 = tpu.matmul %1, %3, %cst {dimension_numbers = #tpu.dot_dimension_numbers<[1], [0], [0], [1], [0, 0, 1, 1], [], []>} : vector<8x16xbf16>, vector<16x384xbf16>, vector<8x384xf32> -> vector<8x384xf32>
    %c1 = arith.constant 1 : index
    %c0_4 = arith.constant 0 : index
    %c0_5 = arith.constant 0 : index
    %5 = vector.load %arg2[%c1, %c0_4, %c0_5] : memref<25x8x16xbf16, #tpu.memory_space<vmem>>, vector<1x8x16xbf16>
    %6 = vector.shape_cast %5 : vector<1x8x16xbf16> to vector<8x16xbf16>
    %c0_6 = arith.constant 0 : index
    %c0_7 = arith.constant 0 : index
    %c96 = arith.constant 96 : index
    %7 = vector.load %arg1[%c0_6, %c0_7, %c96] : memref<1x16x624xbf16, #tpu.memory_space<vmem>>, vector<1x16x384xbf16>
    %8 = vector.shape_cast %7 : vector<1x16x384xbf16> to vector<16x384xbf16>
    %cst_8 = arith.constant dense<0.000000e+00> : vector<8x384xf32>
    %9 = tpu.matmul %6, %8, %cst_8 {dimension_numbers = #tpu.dot_dimension_numbers<[1], [0], [0], [1], [0, 0, 1, 1], [], []>} : vector<8x16xbf16>, vector<16x384xbf16>, vector<8x384xf32> -> vector<8x384xf32>
    %10 = arith.addf %4, %9 : vector<8x384xf32>
    %c2 = arith.constant 2 : index
    %c0_9 = arith.constant 0 : index
    %c0_10 = arith.constant 0 : index
    %11 = vector.load %arg2[%c2, %c0_9, %c0_10] : memref<25x8x16xbf16, #tpu.memory_space<vmem>>, vector<1x8x16xbf16>
    %12 = vector.shape_cast %11 : vector<1x8x16xbf16> to vector<8x16xbf16>
    %c0_11 = arith.constant 0 : index
    %c0_12 = arith.constant 0 : index
    %c97 = arith.constant 97 : index
    %13 = vector.load %arg1[%c0_11, %c0_12, %c97] : memref<1x16x624xbf16, #tpu.memory_space<vmem>>, vector<1x16x384xbf16>
    %14 = vector.shape_cast %13 : vector<1x16x384xbf16> to vector<16x384xbf16>
    %cst_13 = arith.constant dense<0.000000e+00> : vector<8x384xf32>
    %15 = tpu.matmul %12, %14, %cst_13 {dimension_numbers = #tpu.dot_dimension_numbers<[1], [0], [0], [1], [0, 0, 1, 1], [], []>} : vector<8x16xbf16>, vector<16x384xbf16>, vector<8x384xf32> -> vector<8x384xf32>
    %16 = arith.addf %10, %15 : vector<8x384xf32>
    %c3 = arith.constant 3 : index
    %c0_14 = arith.constant 0 : index
    %c0_15 = arith.constant 0 : index
    %17 = vector.load %arg2[%c3, %c0_14, %c0_15] : memref<25x8x16xbf16, #tpu.memory_space<vmem>>, vector<1x8x16xbf16>
    %18 = vector.shape_cast %17 : vector<1x8x16xbf16> to vector<8x16xbf16>
    %c0_16 = arith.constant 0 : index
    %c0_17 = arith.constant 0 : index
    %c119 = arith.constant 119 : index
    %19 = vector.load %arg1[%c0_16, %c0_17, %c119] : memref<1x16x624xbf16, #tpu.memory_space<vmem>>, vector<1x16x384xbf16>
    %20 = vector.shape_cast %19 : vector<1x16x384xbf16> to vector<16x384xbf16>
    %cst_18 = arith.constant dense<0.000000e+00> : vector<8x384xf32>
    %21 = tpu.matmul %18, %20, %cst_18 {dimension_numbers = #tpu.dot_dimension_numbers<[1], [0], [0], [1], [0, 0, 1, 1], [], []>} : vector<8x16xbf16>, vector<16x384xbf16>, vector<8x384xf32> -> vector<8x384xf32>
    %22 = arith.addf %16, %21 : vector<8x384xf32>
    %c4 = arith.constant 4 : index
    %c0_19 = arith.constant 0 : index
    %c0_20 = arith.constant 0 : index
    %23 = vector.load %arg2[%c4, %c0_19, %c0_20] : memref<25x8x16xbf16, #tpu.memory_space<vmem>>, vector<1x8x16xbf16>
    %24 = vector.shape_cast %23 : vector<1x8x16xbf16> to vector<8x16xbf16>
    %c0_21 = arith.constant 0 : index
    %c0_22 = arith.constant 0 : index
    %c120 = arith.constant 120 : index
    %25 = vector.load %arg1[%c0_21, %c0_22, %c120] : memref<1x16x624xbf16, #tpu.memory_space<vmem>>, vector<1x16x384xbf16>
    %26 = vector.shape_cast %25 : vector<1x16x384xbf16> to vector<16x384xbf16>
    %cst_23 = arith.constant dense<0.000000e+00> : vector<8x384xf32>
    %27 = tpu.matmul %24, %26, %cst_23 {dimension_numbers = #tpu.dot_dimension_numbers<[1], [0], [0], [1], [0, 0, 1, 1], [], []>} : vector<8x16xbf16>, vector<16x384xbf16>, vector<8x384xf32> -> vector<8x384xf32>
    %28 = arith.addf %22, %27 : vector<8x384xf32>
    %c5 = arith.constant 5 : index
    %c0_24 = arith.constant 0 : index
    %c0_25 = arith.constant 0 : index
    %29 = vector.load %arg2[%c5, %c0_24, %c0_25] : memref<25x8x16xbf16, #tpu.memory_space<vmem>>, vector<1x8x16xbf16>
    %30 = vector.shape_cast %29 : vector<1x8x16xbf16> to vector<8x16xbf16>
    %c0_26 = arith.constant 0 : index
    %c0_27 = arith.constant 0 : index
    %c121 = arith.constant 121 : index
    %31 = vector.load %arg1[%c0_26, %c0_27, %c121] : memref<1x16x624xbf16, #tpu.memory_space<vmem>>, vector<1x16x384xbf16>
    %32 = vector.shape_cast %31 : vector<1x16x384xbf16> to vector<16x384xbf16>
    %cst_28 = arith.constant dense<0.000000e+00> : vector<8x384xf32>
    %33 = tpu.matmul %30, %32, %cst_28 {dimension_numbers = #tpu.dot_dimension_numbers<[1], [0], [0], [1], [0, 0, 1, 1], [], []>} : vector<8x16xbf16>, vector<16x384xbf16>, vector<8x384xf32> -> vector<8x384xf32>
    %34 = arith.addf %28, %33 : vector<8x384xf32>
    %c6 = arith.constant 6 : index
    %c0_29 = arith.constant 0 : index
    %c0_30 = arith.constant 0 : index
    %35 = vector.load %arg2[%c6, %c0_29, %c0_30] : memref<25x8x16xbf16, #tpu.memory_space<vmem>>, vector<1x8x16xbf16>
    %36 = vector.shape_cast %35 : vector<1x8x16xbf16> to vector<8x16xbf16>
    %c0_31 = arith.constant 0 : index
    %c0_32 = arith.constant 0 : index
    %c143 = arith.constant 143 : index
    %37 = vector.load %arg1[%c0_31, %c0_32, %c143] : memref<1x16x624xbf16, #tpu.memory_space<vmem>>, vector<1x16x384xbf16>
    %38 = vector.shape_cast %37 : vector<1x16x384xbf16> to vector<16x384xbf16>
    %cst_33 = arith.constant dense<0.000000e+00> : vector<8x384xf32>
    %39 = tpu.matmul %36, %38, %cst_33 {dimension_numbers = #tpu.dot_dimension_numbers<[1], [0], [0], [1], [0, 0, 1, 1], [], []>} : vector<8x16xbf16>, vector<16x384xbf16>, vector<8x384xf32> -> vector<8x384xf32>
    %40 = arith.addf %34, %39 : vector<8x384xf32>
    %c7 = arith.constant 7 : index
    %c0_34 = arith.constant 0 : index
    %c0_35 = arith.constant 0 : index
    %41 = vector.load %arg2[%c7, %c0_34, %c0_35] : memref<25x8x16xbf16, #tpu.memory_space<vmem>>, vector<1x8x16xbf16>
    %42 = vector.shape_cast %41 : vector<1x8x16xbf16> to vector<8x16xbf16>
    %c0_36 = arith.constant 0 : index
    %c0_37 = arith.constant 0 : index
    %c144 = arith.constant 144 : index
    %43 = vector.load %arg1[%c0_36, %c0_37, %c144] : memref<1x16x624xbf16, #tpu.memory_space<vmem>>, vector<1x16x384xbf16>
    %44 = vector.shape_cast %43 : vector<1x16x384xbf16> to vector<16x384xbf16>
    %cst_38 = arith.constant dense<0.000000e+00> : vector<8x384xf32>
    %45 = tpu.matmul %42, %44, %cst_38 {dimension_numbers = #tpu.dot_dimension_numbers<[1], [0], [0], [1], [0, 0, 1, 1], [], []>} : vector<8x16xbf16>, vector<16x384xbf16>, vector<8x384xf32> -> vector<8x384xf32>
    %46 = arith.addf %40, %45 : vector<8x384xf32>
    %c8 = arith.constant 8 : index
    %c0_39 = arith.constant 0 : index
    %c0_40 = arith.constant 0 : index
    %47 = vector.load %arg2[%c8, %c0_39, %c0_40] : memref<25x8x16xbf16, #tpu.memory_space<vmem>>, vector<1x8x16xbf16>
    %48 = vector.shape_cast %47 : vector<1x8x16xbf16> to vector<8x16xbf16>
    %c0_41 = arith.constant 0 : index
    %c0_42 = arith.constant 0 : index
    %c145 = arith.constant 145 : index
    %49 = vector.load %arg1[%c0_41, %c0_42, %c145] : memref<1x16x624xbf16, #tpu.memory_space<vmem>>, vector<1x16x384xbf16>
    %50 = vector.shape_cast %49 : vector<1x16x384xbf16> to vector<16x384xbf16>
    %cst_43 = arith.constant dense<0.000000e+00> : vector<8x384xf32>
    %51 = tpu.matmul %48, %50, %cst_43 {dimension_numbers = #tpu.dot_dimension_numbers<[1], [0], [0], [1], [0, 0, 1, 1], [], []>} : vector<8x16xbf16>, vector<16x384xbf16>, vector<8x384xf32> -> vector<8x384xf32>
    %52 = arith.addf %46, %51 : vector<8x384xf32>
    %c9 = arith.constant 9 : index
    %c0_44 = arith.constant 0 : index
    %c0_45 = arith.constant 0 : index
    %53 = vector.load %arg2[%c9, %c0_44, %c0_45] : memref<25x8x16xbf16, #tpu.memory_space<vmem>>, vector<1x8x16xbf16>
    %54 = vector.shape_cast %53 : vector<1x8x16xbf16> to vector<8x16xbf16>
    %c0_46 = arith.constant 0 : index
    %c0_47 = arith.constant 0 : index
    %c70 = arith.constant 70 : index
    %55 = vector.load %arg1[%c0_46, %c0_47, %c70] : memref<1x16x624xbf16, #tpu.memory_space<vmem>>, vector<1x16x384xbf16>
    %56 = vector.shape_cast %55 : vector<1x16x384xbf16> to vector<16x384xbf16>
    %cst_48 = arith.constant dense<0.000000e+00> : vector<8x384xf32>
    %57 = tpu.matmul %54, %56, %cst_48 {dimension_numbers = #tpu.dot_dimension_numbers<[1], [0], [0], [1], [0, 0, 1, 1], [], []>} : vector<8x16xbf16>, vector<16x384xbf16>, vector<8x384xf32> -> vector<8x384xf32>
    %58 = arith.addf %52, %57 : vector<8x384xf32>
    %c10 = arith.constant 10 : index
    %c0_49 = arith.constant 0 : index
    %c0_50 = arith.constant 0 : index
    %59 = vector.load %arg2[%c10, %c0_49, %c0_50] : memref<25x8x16xbf16, #tpu.memory_space<vmem>>, vector<1x8x16xbf16>
    %60 = vector.shape_cast %59 : vector<1x8x16xbf16> to vector<8x16xbf16>
    %c0_51 = arith.constant 0 : index
    %c0_52 = arith.constant 0 : index
    %c72 = arith.constant 72 : index
    %61 = vector.load %arg1[%c0_51, %c0_52, %c72] : memref<1x16x624xbf16, #tpu.memory_space<vmem>>, vector<1x16x384xbf16>
    %62 = vector.shape_cast %61 : vector<1x16x384xbf16> to vector<16x384xbf16>
    %cst_53 = arith.constant dense<0.000000e+00> : vector<8x384xf32>
    %63 = tpu.matmul %60, %62, %cst_53 {dimension_numbers = #tpu.dot_dimension_numbers<[1], [0], [0], [1], [0, 0, 1, 1], [], []>} : vector<8x16xbf16>, vector<16x384xbf16>, vector<8x384xf32> -> vector<8x384xf32>
    %64 = arith.addf %58, %63 : vector<8x384xf32>
    %c11 = arith.constant 11 : index
    %c0_54 = arith.constant 0 : index
    %c0_55 = arith.constant 0 : index
    %65 = vector.load %arg2[%c11, %c0_54, %c0_55] : memref<25x8x16xbf16, #tpu.memory_space<vmem>>, vector<1x8x16xbf16>
    %66 = vector.shape_cast %65 : vector<1x8x16xbf16> to vector<8x16xbf16>
    %c0_56 = arith.constant 0 : index
    %c0_57 = arith.constant 0 : index
    %c74 = arith.constant 74 : index
    %67 = vector.load %arg1[%c0_56, %c0_57, %c74] : memref<1x16x624xbf16, #tpu.memory_space<vmem>>, vector<1x16x384xbf16>
    %68 = vector.shape_cast %67 : vector<1x16x384xbf16> to vector<16x384xbf16>
    %cst_58 = arith.constant dense<0.000000e+00> : vector<8x384xf32>
    %69 = tpu.matmul %66, %68, %cst_58 {dimension_numbers = #tpu.dot_dimension_numbers<[1], [0], [0], [1], [0, 0, 1, 1], [], []>} : vector<8x16xbf16>, vector<16x384xbf16>, vector<8x384xf32> -> vector<8x384xf32>
    %70 = arith.addf %64, %69 : vector<8x384xf32>
    %c12 = arith.constant 12 : index
    %c0_59 = arith.constant 0 : index
    %c0_60 = arith.constant 0 : index
    %71 = vector.load %arg2[%c12, %c0_59, %c0_60] : memref<25x8x16xbf16, #tpu.memory_space<vmem>>, vector<1x8x16xbf16>
    %72 = vector.shape_cast %71 : vector<1x8x16xbf16> to vector<8x16xbf16>
    %c0_61 = arith.constant 0 : index
    %c0_62 = arith.constant 0 : index
    %c118 = arith.constant 118 : index
    %73 = vector.load %arg1[%c0_61, %c0_62, %c118] : memref<1x16x624xbf16, #tpu.memory_space<vmem>>, vector<1x16x384xbf16>
    %74 = vector.shape_cast %73 : vector<1x16x384xbf16> to vector<16x384xbf16>
    %cst_63 = arith.constant dense<0.000000e+00> : vector<8x384xf32>
    %75 = tpu.matmul %72, %74, %cst_63 {dimension_numbers = #tpu.dot_dimension_numbers<[1], [0], [0], [1], [0, 0, 1, 1], [], []>} : vector<8x16xbf16>, vector<16x384xbf16>, vector<8x384xf32> -> vector<8x384xf32>
    %76 = arith.addf %70, %75 : vector<8x384xf32>
    %c13 = arith.constant 13 : index
    %c0_64 = arith.constant 0 : index
    %c0_65 = arith.constant 0 : index
    %77 = vector.load %arg2[%c13, %c0_64, %c0_65] : memref<25x8x16xbf16, #tpu.memory_space<vmem>>, vector<1x8x16xbf16>
    %78 = vector.shape_cast %77 : vector<1x8x16xbf16> to vector<8x16xbf16>
    %c0_66 = arith.constant 0 : index
    %c0_67 = arith.constant 0 : index
    %c122 = arith.constant 122 : index
    %79 = vector.load %arg1[%c0_66, %c0_67, %c122] : memref<1x16x624xbf16, #tpu.memory_space<vmem>>, vector<1x16x384xbf16>
    %80 = vector.shape_cast %79 : vector<1x16x384xbf16> to vector<16x384xbf16>
    %cst_68 = arith.constant dense<0.000000e+00> : vector<8x384xf32>
    %81 = tpu.matmul %78, %80, %cst_68 {dimension_numbers = #tpu.dot_dimension_numbers<[1], [0], [0], [1], [0, 0, 1, 1], [], []>} : vector<8x16xbf16>, vector<16x384xbf16>, vector<8x384xf32> -> vector<8x384xf32>
    %82 = arith.addf %76, %81 : vector<8x384xf32>
    %c14 = arith.constant 14 : index
    %c0_69 = arith.constant 0 : index
    %c0_70 = arith.constant 0 : index
    %83 = vector.load %arg2[%c14, %c0_69, %c0_70] : memref<25x8x16xbf16, #tpu.memory_space<vmem>>, vector<1x8x16xbf16>
    %84 = vector.shape_cast %83 : vector<1x8x16xbf16> to vector<8x16xbf16>
    %c0_71 = arith.constant 0 : index
    %c0_72 = arith.constant 0 : index
    %c166 = arith.constant 166 : index
    %85 = vector.load %arg1[%c0_71, %c0_72, %c166] : memref<1x16x624xbf16, #tpu.memory_space<vmem>>, vector<1x16x384xbf16>
    %86 = vector.shape_cast %85 : vector<1x16x384xbf16> to vector<16x384xbf16>
    %cst_73 = arith.constant dense<0.000000e+00> : vector<8x384xf32>
    %87 = tpu.matmul %84, %86, %cst_73 {dimension_numbers = #tpu.dot_dimension_numbers<[1], [0], [0], [1], [0, 0, 1, 1], [], []>} : vector<8x16xbf16>, vector<16x384xbf16>, vector<8x384xf32> -> vector<8x384xf32>
    %88 = arith.addf %82, %87 : vector<8x384xf32>
    %c15 = arith.constant 15 : index
    %c0_74 = arith.constant 0 : index
    %c0_75 = arith.constant 0 : index
    %89 = vector.load %arg2[%c15, %c0_74, %c0_75] : memref<25x8x16xbf16, #tpu.memory_space<vmem>>, vector<1x8x16xbf16>
    %90 = vector.shape_cast %89 : vector<1x8x16xbf16> to vector<8x16xbf16>
    %c0_76 = arith.constant 0 : index
    %c0_77 = arith.constant 0 : index
    %c168 = arith.constant 168 : index
    %91 = vector.load %arg1[%c0_76, %c0_77, %c168] : memref<1x16x624xbf16, #tpu.memory_space<vmem>>, vector<1x16x384xbf16>
    %92 = vector.shape_cast %91 : vector<1x16x384xbf16> to vector<16x384xbf16>
    %cst_78 = arith.constant dense<0.000000e+00> : vector<8x384xf32>
    %93 = tpu.matmul %90, %92, %cst_78 {dimension_numbers = #tpu.dot_dimension_numbers<[1], [0], [0], [1], [0, 0, 1, 1], [], []>} : vector<8x16xbf16>, vector<16x384xbf16>, vector<8x384xf32> -> vector<8x384xf32>
    %94 = arith.addf %88, %93 : vector<8x384xf32>
    %c16 = arith.constant 16 : index
    %c0_79 = arith.constant 0 : index
    %c0_80 = arith.constant 0 : index
    %95 = vector.load %arg2[%c16, %c0_79, %c0_80] : memref<25x8x16xbf16, #tpu.memory_space<vmem>>, vector<1x8x16xbf16>
    %96 = vector.shape_cast %95 : vector<1x8x16xbf16> to vector<8x16xbf16>
    %c0_81 = arith.constant 0 : index
    %c0_82 = arith.constant 0 : index
    %c170 = arith.constant 170 : index
    %97 = vector.load %arg1[%c0_81, %c0_82, %c170] : memref<1x16x624xbf16, #tpu.memory_space<vmem>>, vector<1x16x384xbf16>
    %98 = vector.shape_cast %97 : vector<1x16x384xbf16> to vector<16x384xbf16>
    %cst_83 = arith.constant dense<0.000000e+00> : vector<8x384xf32>
    %99 = tpu.matmul %96, %98, %cst_83 {dimension_numbers = #tpu.dot_dimension_numbers<[1], [0], [0], [1], [0, 0, 1, 1], [], []>} : vector<8x16xbf16>, vector<16x384xbf16>, vector<8x384xf32> -> vector<8x384xf32>
    %100 = arith.addf %94, %99 : vector<8x384xf32>
    %c17 = arith.constant 17 : index
    %c0_84 = arith.constant 0 : index
    %c0_85 = arith.constant 0 : index
    %101 = vector.load %arg2[%c17, %c0_84, %c0_85] : memref<25x8x16xbf16, #tpu.memory_space<vmem>>, vector<1x8x16xbf16>
    %102 = vector.shape_cast %101 : vector<1x8x16xbf16> to vector<8x16xbf16>
    %c0_86 = arith.constant 0 : index
    %c0_87 = arith.constant 0 : index
    %c20 = arith.constant 20 : index
    %103 = vector.load %arg1[%c0_86, %c0_87, %c20] : memref<1x16x624xbf16, #tpu.memory_space<vmem>>, vector<1x16x384xbf16>
    %104 = vector.shape_cast %103 : vector<1x16x384xbf16> to vector<16x384xbf16>
    %cst_88 = arith.constant dense<0.000000e+00> : vector<8x384xf32>
    %105 = tpu.matmul %102, %104, %cst_88 {dimension_numbers = #tpu.dot_dimension_numbers<[1], [0], [0], [1], [0, 0, 1, 1], [], []>} : vector<8x16xbf16>, vector<16x384xbf16>, vector<8x384xf32> -> vector<8x384xf32>
    %106 = arith.addf %100, %105 : vector<8x384xf32>
    %c18 = arith.constant 18 : index
    %c0_89 = arith.constant 0 : index
    %c0_90 = arith.constant 0 : index
    %107 = vector.load %arg2[%c18, %c0_89, %c0_90] : memref<25x8x16xbf16, #tpu.memory_space<vmem>>, vector<1x8x16xbf16>
    %108 = vector.shape_cast %107 : vector<1x8x16xbf16> to vector<8x16xbf16>
    %c0_91 = arith.constant 0 : index
    %c0_92 = arith.constant 0 : index
    %c24 = arith.constant 24 : index
    %109 = vector.load %arg1[%c0_91, %c0_92, %c24] : memref<1x16x624xbf16, #tpu.memory_space<vmem>>, vector<1x16x384xbf16>
    %110 = vector.shape_cast %109 : vector<1x16x384xbf16> to vector<16x384xbf16>
    %cst_93 = arith.constant dense<0.000000e+00> : vector<8x384xf32>
    %111 = tpu.matmul %108, %110, %cst_93 {dimension_numbers = #tpu.dot_dimension_numbers<[1], [0], [0], [1], [0, 0, 1, 1], [], []>} : vector<8x16xbf16>, vector<16x384xbf16>, vector<8x384xf32> -> vector<8x384xf32>
    %112 = arith.addf %106, %111 : vector<8x384xf32>
    %c19 = arith.constant 19 : index
    %c0_94 = arith.constant 0 : index
    %c0_95 = arith.constant 0 : index
    %113 = vector.load %arg2[%c19, %c0_94, %c0_95] : memref<25x8x16xbf16, #tpu.memory_space<vmem>>, vector<1x8x16xbf16>
    %114 = vector.shape_cast %113 : vector<1x8x16xbf16> to vector<8x16xbf16>
    %c0_96 = arith.constant 0 : index
    %c0_97 = arith.constant 0 : index
    %c28 = arith.constant 28 : index
    %115 = vector.load %arg1[%c0_96, %c0_97, %c28] : memref<1x16x624xbf16, #tpu.memory_space<vmem>>, vector<1x16x384xbf16>
    %116 = vector.shape_cast %115 : vector<1x16x384xbf16> to vector<16x384xbf16>
    %cst_98 = arith.constant dense<0.000000e+00> : vector<8x384xf32>
    %117 = tpu.matmul %114, %116, %cst_98 {dimension_numbers = #tpu.dot_dimension_numbers<[1], [0], [0], [1], [0, 0, 1, 1], [], []>} : vector<8x16xbf16>, vector<16x384xbf16>, vector<8x384xf32> -> vector<8x384xf32>
    %118 = arith.addf %112, %117 : vector<8x384xf32>
    %c20_99 = arith.constant 20 : index
    %c0_100 = arith.constant 0 : index
    %c0_101 = arith.constant 0 : index
    %119 = vector.load %arg2[%c20_99, %c0_100, %c0_101] : memref<25x8x16xbf16, #tpu.memory_space<vmem>>, vector<1x8x16xbf16>
    %120 = vector.shape_cast %119 : vector<1x8x16xbf16> to vector<8x16xbf16>
    %c0_102 = arith.constant 0 : index
    %c0_103 = arith.constant 0 : index
    %c116 = arith.constant 116 : index
    %121 = vector.load %arg1[%c0_102, %c0_103, %c116] : memref<1x16x624xbf16, #tpu.memory_space<vmem>>, vector<1x16x384xbf16>
    %122 = vector.shape_cast %121 : vector<1x16x384xbf16> to vector<16x384xbf16>
    %cst_104 = arith.constant dense<0.000000e+00> : vector<8x384xf32>
    %123 = tpu.matmul %120, %122, %cst_104 {dimension_numbers = #tpu.dot_dimension_numbers<[1], [0], [0], [1], [0, 0, 1, 1], [], []>} : vector<8x16xbf16>, vector<16x384xbf16>, vector<8x384xf32> -> vector<8x384xf32>
    %124 = arith.addf %118, %123 : vector<8x384xf32>
    %c21 = arith.constant 21 : index
    %c0_105 = arith.constant 0 : index
    %c0_106 = arith.constant 0 : index
    %125 = vector.load %arg2[%c21, %c0_105, %c0_106] : memref<25x8x16xbf16, #tpu.memory_space<vmem>>, vector<1x8x16xbf16>
    %126 = vector.shape_cast %125 : vector<1x8x16xbf16> to vector<8x16xbf16>
    %c0_107 = arith.constant 0 : index
    %c0_108 = arith.constant 0 : index
    %c124 = arith.constant 124 : index
    %127 = vector.load %arg1[%c0_107, %c0_108, %c124] : memref<1x16x624xbf16, #tpu.memory_space<vmem>>, vector<1x16x384xbf16>
    %128 = vector.shape_cast %127 : vector<1x16x384xbf16> to vector<16x384xbf16>
    %cst_109 = arith.constant dense<0.000000e+00> : vector<8x384xf32>
    %129 = tpu.matmul %126, %128, %cst_109 {dimension_numbers = #tpu.dot_dimension_numbers<[1], [0], [0], [1], [0, 0, 1, 1], [], []>} : vector<8x16xbf16>, vector<16x384xbf16>, vector<8x384xf32> -> vector<8x384xf32>
    %130 = arith.addf %124, %129 : vector<8x384xf32>
    %c22 = arith.constant 22 : index
    %c0_110 = arith.constant 0 : index
    %c0_111 = arith.constant 0 : index
    %131 = vector.load %arg2[%c22, %c0_110, %c0_111] : memref<25x8x16xbf16, #tpu.memory_space<vmem>>, vector<1x8x16xbf16>
    %132 = vector.shape_cast %131 : vector<1x8x16xbf16> to vector<8x16xbf16>
    %c0_112 = arith.constant 0 : index
    %c0_113 = arith.constant 0 : index
    %c212 = arith.constant 212 : index
    %133 = vector.load %arg1[%c0_112, %c0_113, %c212] : memref<1x16x624xbf16, #tpu.memory_space<vmem>>, vector<1x16x384xbf16>
    %134 = vector.shape_cast %133 : vector<1x16x384xbf16> to vector<16x384xbf16>
    %cst_114 = arith.constant dense<0.000000e+00> : vector<8x384xf32>
    %135 = tpu.matmul %132, %134, %cst_114 {dimension_numbers = #tpu.dot_dimension_numbers<[1], [0], [0], [1], [0, 0, 1, 1], [], []>} : vector<8x16xbf16>, vector<16x384xbf16>, vector<8x384xf32> -> vector<8x384xf32>
    %136 = arith.addf %130, %135 : vector<8x384xf32>
    %c23 = arith.constant 23 : index
    %c0_115 = arith.constant 0 : index
    %c0_116 = arith.constant 0 : index
    %137 = vector.load %arg2[%c23, %c0_115, %c0_116] : memref<25x8x16xbf16, #tpu.memory_space<vmem>>, vector<1x8x16xbf16>
    %138 = vector.shape_cast %137 : vector<1x8x16xbf16> to vector<8x16xbf16>
    %c0_117 = arith.constant 0 : index
    %c0_118 = arith.constant 0 : index
    %c216 = arith.constant 216 : index
    %139 = vector.load %arg1[%c0_117, %c0_118, %c216] : memref<1x16x624xbf16, #tpu.memory_space<vmem>>, vector<1x16x384xbf16>
    %140 = vector.shape_cast %139 : vector<1x16x384xbf16> to vector<16x384xbf16>
    %cst_119 = arith.constant dense<0.000000e+00> : vector<8x384xf32>
    %141 = tpu.matmul %138, %140, %cst_119 {dimension_numbers = #tpu.dot_dimension_numbers<[1], [0], [0], [1], [0, 0, 1, 1], [], []>} : vector<8x16xbf16>, vector<16x384xbf16>, vector<8x384xf32> -> vector<8x384xf32>
    %142 = arith.addf %136, %141 : vector<8x384xf32>
    %c24_120 = arith.constant 24 : index
    %c0_121 = arith.constant 0 : index
    %c0_122 = arith.constant 0 : index
    %143 = vector.load %arg2[%c24_120, %c0_121, %c0_122] : memref<25x8x16xbf16, #tpu.memory_space<vmem>>, vector<1x8x16xbf16>
    %144 = vector.shape_cast %143 : vector<1x8x16xbf16> to vector<8x16xbf16>
    %c0_123 = arith.constant 0 : index
    %c0_124 = arith.constant 0 : index
    %c220 = arith.constant 220 : index
    %145 = vector.load %arg1[%c0_123, %c0_124, %c220] : memref<1x16x624xbf16, #tpu.memory_space<vmem>>, vector<1x16x384xbf16>
    %146 = vector.shape_cast %145 : vector<1x16x384xbf16> to vector<16x384xbf16>
    %cst_125 = arith.constant dense<0.000000e+00> : vector<8x384xf32>
    %147 = tpu.matmul %144, %146, %cst_125 {dimension_numbers = #tpu.dot_dimension_numbers<[1], [0], [0], [1], [0, 0, 1, 1], [], []>} : vector<8x16xbf16>, vector<16x384xbf16>, vector<8x384xf32> -> vector<8x384xf32>
    %148 = arith.addf %142, %147 : vector<8x384xf32>
    %c0_126 = arith.constant 0 : index
    %c0_127 = arith.constant 0 : index
    %149 = vector.load %arg3[%c0_126, %c0_127] : memref<8x1xf32, #tpu.memory_space<vmem>>, vector<8x1xf32>
    %150 = vector.broadcast %149 : vector<8x1xf32> to vector<8x384xf32>
    %151 = arith.addf %148, %150 : vector<8x384xf32>
    %c0_128 = arith.constant 0 : index
    %c0_129 = arith.constant 0 : index
    %c0_130 = arith.constant 0 : index
    %152 = vector.load %arg4[%c0_128, %c0_129, %c0_130] : memref<1x8x384xf32, #tpu.memory_space<vmem>>, vector<1x8x384xf32>
    %153 = vector.shape_cast %152 : vector<1x8x384xf32> to vector<8x384xf32>
    %154 = vector.shape_cast %151 : vector<8x384xf32> to vector<1x8x384xf32>
    tpu.vector_store %arg4[%c0_128, %c0_129, %c0_130], %154 {strides = array<i32>} : memref<1x8x384xf32, #tpu.memory_space<vmem>>, vector<1x8x384xf32>,
    return
  }
  func.func @transform_0(%arg0: i32) -> (i32, i32, i32) {
    %c0_i32 = arith.constant 0 : i32
    %c0_i32_0 = arith.constant 0 : i32
    %c0_i32_1 = arith.constant 0 : i32
    return %arg0, %c0_i32, %c0_i32_0 : i32, i32, i32
  }
  func.func @transform_1(%arg0: i32) -> (i32, i32, i32) {
    %c0_i32 = arith.constant 0 : i32
    %c0_i32_0 = arith.constant 0 : i32
    %c0_i32_1 = arith.constant 0 : i32
    %c0_i32_2 = arith.constant 0 : i32
    return %c0_i32, %c0_i32_0, %c0_i32_1 : i32, i32, i32
  }
  func.func @transform_2(%arg0: i32) -> (i32, i32) {
    %c0_i32 = arith.constant 0 : i32
    %c0_i32_0 = arith.constant 0 : i32
    %c0_i32_1 = arith.constant 0 : i32
    return %c0_i32, %c0_i32_0 : i32, i32
  }
  func.func @transform_3(%arg0: i32) -> (i32, i32, i32) {
    %c0_i32 = arith.constant 0 : i32
    %c0_i32_0 = arith.constant 0 : i32
    %c0_i32_1 = arith.constant 0 : i32
    return %arg0, %c0_i32, %c0_i32_0 : i32, i32, i32
  }
}

</mosaic_0001>

<llo_original>
// kernel: tpu_custom_call.1
$region0: #{tpu_custom_call.1}
  #allocation0 [shape = 'u32[]', space=smem, size = 0x4, offset = 0x4, fixed_abs, tag = 'smem constant byte address 0x4 - core index']
  #allocation1 [shape = 'u32[144,128]{1,0:T(1,128)}', space=vmem, size = 0x12000, scoped, tag = 'internal scratch']
  %s0 = inlined_call_operand.vmem [shape: bf16[2,16,624], index: 0, kind: input, shape index: {}]
  %s1 = inlined_call_operand.vmem [shape: bf16[25,8,16], index: 1, kind: input, shape index: {}]
  %s2 = inlined_call_operand.vmem [shape: f32[8,1], index: 2, kind: input, shape index: {}]
  %s3 = inlined_call_operand.hbm [shape: f32[2,8,384], index: 3, kind: output, shape index: {}]
  %s4 = sld [smem:[#allocation0]]
  $region45: #{tpu_custom_call.1} parent=0
    _
  %s6 = ssub.s32 1, %s4
  %s7 = scalar_select 0, %s6, %s4
  $region1: #{tpu_custom_call.1} parent=0
    #allocation2 [shape = 'u8[24576]{0}', space=vmem, size = 0x6000, scoped, tag = 'output window, operand 0']
    #allocation3 [shape = 's32[2]{0}', space=sflag, size = 0x8, scoped, tag = 'scoped memory for tpu_custom_call.1']
    %8 = vsyncpa [#allocation3], 0
    %s9 = scalar_lea.sflag [#allocation3], 1
    %10 = vsyncpa %s9, 0
    loop: start=0, step=1, limit=4
    $region2: #{tpu_custom_call.1} parent=1 // loop_pre_header
      _
    $region3: #{tpu_custom_call.1} parent=1 // loop_header
      %s12 = sphi 0, %s16
      %p13 = scmp.ge.s32.totalorder %s12, 4
      %s22 = sphi 0, %s24
      %s25 = sphi 0, %s22
      %s26 = sphi 0, %s25
      %s42 = sphi 0, %s26
      %s46 = sphi 0, %s46
      %s48 = sphi 0, %s46
      %s49 = sphi 0, %s48
      %s63 = sphi 0, %s49
      %s67 = sphi 0, %s67
      %s69 = sphi 0, %s67
      %s70 = sphi 0, %s69
      %s84 = sphi 0, %s70
      %s90 = sphi 0, %s92
      %s93 = sphi 0, %s90
      %s94 = sphi 0, %s93
      %s110 = sphi 0, %s94
    $region4: #{tpu_custom_call.1} parent=1 // loop_header_branch
      %15 = sbr.rel (%p13) target = $region8
    $region5: #{tpu_custom_call.1} parent=1 // loop_body
      %s17 = ssub.s32 %s12, 1
      %s18 = ssub.s32 %s12, 2
      %s19 = sadd.s32 %s12, 1
      %s20 = ssub.s32 %s12, %s19
      %p21 = scmp.eq.s32.totalorder %s20, 0
      %s23 = sadd.s32 %s22, 1
      %s24 = scalar_select %p21, %s22, %s23
      %p27 = pneg %p21
      %p28 = scmp.eq.s32.totalorder %s12, 1
      %p29 = por %p27, %p28
      %p30 = scmp.ne.s32.totalorder %s22, %s25
      %p31 = scmp.eq.s32.totalorder %s12, 0
      %p32 = por %p30, %p31
      %p33 = scmp.ne.s32.totalorder %s22, %s25
      %p34 = scmp.eq.s32.totalorder %s17, 1
      %p35 = por %p33, %p34
      %p36 = scmp.ne.s32.totalorder %s25, %s26
      %p37 = scmp.eq.s32.totalorder %s17, 0
      %p38 = por %p36, %p37
      %p39 = scmp.ne.s32.totalorder %s25, %s26
      %p40 = scmp.eq.s32.totalorder %s18, 1
      %p41 = por %p39, %p40
      %p43 = scmp.ne.s32.totalorder %s26, %s42
      %p44 = scmp.eq.s32.totalorder %s18, 0
      %p45 = por %p43, %p44
      %s47 = sadd.s32 %s46, 1
      %p50 = scmp.eq.s32.totalorder %s12, 1
      %p51 = scmp.ne.s32.totalorder %s46, %s48
      %p52 = scmp.eq.s32.totalorder %s12, 0
      %p53 = por %p51, %p52
      %p54 = scmp.ne.s32.totalorder %s46, %s48
      %p55 = scmp.eq.s32.totalorder %s17, 1
      %p56 = por %p54, %p55
      %p57 = scmp.ne.s32.totalorder %s48, %s49
      %p58 = scmp.eq.s32.totalorder %s17, 0
      %p59 = por %p57, %p58
      %p60 = scmp.ne.s32.totalorder %s48, %s49
      %p61 = scmp.eq.s32.totalorder %s18, 1
      %p62 = por %p60, %p61
      %p64 = scmp.ne.s32.totalorder %s49, %s63
      %p65 = scmp.eq.s32.totalorder %s18, 0
      %p66 = por %p64, %p65
      %s68 = sadd.s32 %s67, 1
      %p71 = scmp.eq.s32.totalorder %s12, 1
      %p72 = scmp.ne.s32.totalorder %s67, %s69
      %p73 = scmp.eq.s32.totalorder %s12, 0
      %p74 = por %p72, %p73
      %p75 = scmp.ne.s32.totalorder %s67, %s69
      %p76 = scmp.eq.s32.totalorder %s17, 1
      %p77 = por %p75, %p76
      %p78 = scmp.ne.s32.totalorder %s69, %s70
      %p79 = scmp.eq.s32.totalorder %s17, 0
      %p80 = por %p78, %p79
      %p81 = scmp.ne.s32.totalorder %s69, %s70
      %p82 = scmp.eq.s32.totalorder %s18, 1
      %p83 = por %p81, %p82
      %p85 = scmp.ne.s32.totalorder %s70, %s84
      %p86 = scmp.eq.s32.totalorder %s18, 0
      %p87 = por %p85, %p86
      %s88 = ssub.s32 %s12, %s19
      %p89 = scmp.eq.s32.totalorder %s88, 0
      %s91 = sadd.s32 %s90, 1
      %s92 = scalar_select %p89, %s90, %s91
      %p95 = pneg %p89
      %p96 = scmp.eq.s32.totalorder %s12, 1
      %p97 = por %p95, %p96
      %p98 = scmp.ne.s32.totalorder %s90, %s93
      %p99 = scmp.eq.s32.totalorder %s12, 0
      %p100 = por %p98, %p99
      %p101 = scmp.ne.s32.totalorder %s90, %s93
      %p102 = scmp.eq.s32.totalorder %s17, 1
      %p103 = por %p101, %p102
      %p104 = scmp.ne.s32.totalorder %s93, %s94
      %p105 = scmp.eq.s32.totalorder %s17, 0
      %p106 = por %p104, %p105
      %p107 = scmp.ne.s32.totalorder %s93, %s94
      %p108 = scmp.eq.s32.totalorder %s18, 1
      %p109 = por %p107, %p108
      %p111 = scmp.ne.s32.totalorder %s94, %s110
      %p112 = scmp.eq.s32.totalorder %s18, 0
      %p113 = por %p111, %p112
      %p114 = scmp.le.s32.totalorder 1, %s12
      %p115 = scmp.lt.s32.totalorder %s12, 3
      %p116 = pnand %p114, %p115
      %p117 = pneg %p116
      // Predicated region
      $region9: #{tpu_custom_call.1} parent=5 // pred_check
        _
      $region10: #{tpu_custom_call.1} parent=5 // pred_check_branch
        %119 = sbr.rel (%p116) target = $region12
      $region11: #{tpu_custom_call.1} parent=5 // pred_region
        %s120 = ssub.s32 %s12, 1
        // Predicated region
        $region13: #{tpu_custom_call.1} parent=11 // pred_check
          %p121 = pneg %p59
        $region14: #{tpu_custom_call.1} parent=11 // pred_check_branch
          %123 = sbr.rel (%p121) target = $region16
        $region15: #{tpu_custom_call.1} parent=11 // pred_region
          _
        $region16: #{tpu_custom_call.1} parent=11 // pred_fallthru
          _
        // Predicated region
        $region17: #{tpu_custom_call.1} parent=11 // pred_check
          %p124 = pneg %p80
        $region18: #{tpu_custom_call.1} parent=11 // pred_check_branch
          %126 = sbr.rel (%p124) target = $region20
        $region19: #{tpu_custom_call.1} parent=11 // pred_region
          _
        $region20: #{tpu_custom_call.1} parent=11 // pred_fallthru
          _
      $region12: #{tpu_custom_call.1} parent=5 // pred_fallthru
        _
      %p127 = scmp.lt.s32.totalorder %s12, 2
      // Predicated region
      $region21: #{tpu_custom_call.1} parent=5 // pred_check
        %p128 = pneg %p127
      $region22: #{tpu_custom_call.1} parent=5 // pred_check_branch
        %130 = sbr.rel (%p128) target = $region24
      $region23: #{tpu_custom_call.1} parent=5 // pred_region
        // Predicated region
        $region25: #{tpu_custom_call.1} parent=23 // pred_check
          %p131 = pneg %p32
        $region26: #{tpu_custom_call.1} parent=23 // pred_check_branch
          %133 = sbr.rel (%p131) target = $region28
        $region27: #{tpu_custom_call.1} parent=23 // pred_region
          %p134 = scmp.lt.s32.totalorder %s12, 1
          %s135 = scalar_select %p134, %s12, 1
          %s136 = smul.addr %s135, 10
          %s137 = smul.addr %s136, 4
          %s138 = scalar_lea.vmem %s0, %s137
        $region28: #{tpu_custom_call.1} parent=23 // pred_fallthru
          _
      $region24: #{tpu_custom_call.1} parent=5 // pred_fallthru
        _
      %p139 = scmp.le.s32.totalorder 1, %s12
      %p140 = scmp.lt.s32.totalorder %s12, 3
      %p141 = pnand %p139, %p140
      %p142 = pneg %p141
      // Predicated region
      $region29: #{tpu_custom_call.1} parent=5 // pred_check
        _
      $region30: #{tpu_custom_call.1} parent=5 // pred_check_branch
        %144 = sbr.rel (%p141) target = $region32
      $region31: #{tpu_custom_call.1} parent=5 // pred_region
        %s145 = ssub.s32 %s12, 1
        %p146 = scmp.lt.s32.totalorder %s17, 1
        %s147 = scalar_select %p146, %s17, 1
        %s148 = smul.addr %s147, 10
        %s149 = smul.addr %s148, 4
        %s150 = scalar_lea.vmem %s0, %s149
        %p151 = pneg %p38
        %p152 = pneg %p35
        %p153 = pneg %p59
        %p154 = pneg %p56
        %p155 = pneg %p80
        %p156 = pneg %p77
        %p157 = pneg %p106
        %p158 = pneg %p103
        %s159 = sand.u32 %s93, 1
        %s160 = scalar_lea.sflag [#allocation3], %s159
        %s161 = sand.u32 %s93, 1
        %s162 = smul.addr %s161, 24
        %s163 = scalar_lea.vmem [#allocation2], %s162
        %p164 = scmp.lt.s32.totalorder %s17, 1
        %s165 = scalar_select %p164, %s17, 1
        %s166 = smul.addr %s165, 10
        %s167 = smul.addr %s166, 4
        %s168 = scalar_lea.vmem %s0, %s167
        %v170 = vld [vmem:[%s1] sm:$0xf]
        %v171 = vld [vmem:[%s168] sm:$0xff]
        %v172 = vld [vmem:[%s168 + $0x8] sm:$0xff]
        %v173 = vld [vmem:[%s168 + $0x14] sm:$0xff]
        %v174 = vld [vmem:[%s168 + $0x1c] sm:$0xff]
        %s175 = scalar_lea.vmem %s1, 4
        %v176 = vld [vmem:[%s175] sm:$0xf]
        %v181 = vunpack.c.l.b16 %v171
        %v182 = vunpack.c.h.b16 %v171
        %v183 = vunpack.c.l.b16 %v172
        %v184 = vunpack.c.h.b16 %v172
        %v185 = vunpack.c.l.b16 %v173
        %v186 = vunpack.c.h.b16 %v173
        %v187 = vunpack.c.l.b16 %v174
        %v188 = vunpack.c.h.b16 %v174
        %v189 = vpack.c.b16 %v185, %v181
        %v190 = vpack.c.b16 %v186, %v182
        %v191 = vpack.c.b16 %v187, %v183
        %v192 = vpack.c.b16 %v188, %v184
        %193 = vrot.lane.b32.xlu0 %v189, 32
        %v194 = vpop.permute.xlu0 %193
        %195 = vrot.lane.b32.xlu0 %v190, 32
        %v196 = vpop.permute.xlu0 %195
        %197 = vrot.lane.b32.xlu0 %v191, 32
        %v198 = vpop.permute.xlu0 %197
        %199 = vrot.lane.b32.xlu0 %v192, 32
        %v200 = vpop.permute.xlu0 %199
        %vm201 = vcmask 261120
        %v202 = vsel %vm201, %v194, %v196
        %v203 = vsel %vm201, %v196, %v198
        %v204 = vsel %vm201, %v198, %v200
        %vm208 = vcmask 130048
        %v210 = vsel %vm208, %v176, 0
        %212 = vmatprep.subr.bf16.mxu0 %v203
        %213 = vmatpush1.bf16.msra.mxu0 %v202
        %214 = vmatprep.subr.bf16.mxu0 0
        %215 = vmatpush1.bf16.msra.mxu0 0
        %216 = vmatprep.subr.bf16.mxu0 0
        %217 = vmatpush1.bf16.msra.mxu0 0
        %218 = vmatprep.subr.bf16.mxu0 0
        %219 = vmatpush1.bf16.msra.mxu0 0
        %220 = vmatprep.subr.bf16.mxu0 0
        %221 = vmatpush1.bf16.msra.mxu0 0
        %222 = vmatprep.subr.bf16.mxu0 0
        %223 = vmatpush1.bf16.msra.mxu0 0
        %224 = vmatprep.subr.bf16.mxu0 0
        %225 = vmatpush1.bf16.msra.mxu0 0
        %226 = vmatprep.subr.bf16.mxu0 0
        %227 = vmatpush1.bf16.msra.mxu0 0
        %228 = vmatprep.subr.bf16.mxu0 0
        %229 = vmatpush1.bf16.msra.mxu0 0
        %230 = vmatprep.subr.bf16.mxu0 0
        %231 = vmatpush1.bf16.msra.mxu0 0
        %232 = vmatprep.subr.bf16.mxu0 0
        %233 = vmatpush1.bf16.msra.mxu0 0
        %234 = vmatprep.subr.bf16.mxu0 0
        %235 = vmatpush1.bf16.msra.mxu0 0
        %236 = vmatprep.subr.bf16.mxu0 0
        %237 = vmatpush1.bf16.msra.mxu0 0
        %238 = vmatprep.subr.bf16.mxu0 0
        %239 = vmatpush1.bf16.msra.mxu0 0
        %240 = vmatprep.subr.bf16.mxu0 0
        %241 = vmatpush1.bf16.msra.mxu0 0
        %242 = vmatprep.subr.bf16.mxu0 0
        %243 = vmatpush1.bf16.msra.mxu0 0
        %244 = vmatprep.mubr.bf16.mxu0 0
        %245 = vmatmul.mubr.bf16.gmra.mrb[0].mxu0 %v210
        %v246 = vpop.f32.mrb[0].mxu0
        %v247 = vadd.f32 0.0, %v246
        %v248 = vpop.f32.mrb[0].mxu0
        %v249 = vadd.f32 0.0, %v248
        %v250 = vpop.f32.mrb[0].mxu0
        %v251 = vpop.f32.mrb[0].mxu0
        %252 = vdwg.mxu0
        %253 = vmatprep.subr.bf16.mxu0 0
        %254 = vmatpush1.bf16.msra.mxu0 %v204
        %255 = vmatprep.subr.bf16.mxu0 0
        %256 = vmatpush1.bf16.msra.mxu0 0
        %257 = vmatprep.subr.bf16.mxu0 0
        %258 = vmatpush1.bf16.msra.mxu0 0
        %259 = vmatprep.subr.bf16.mxu0 0
        %260 = vmatpush1.bf16.msra.mxu0 0
        %261 = vmatprep.subr.bf16.mxu0 0
        %262 = vmatpush1.bf16.msra.mxu0 0
        %263 = vmatprep.subr.bf16.mxu0 0
        %264 = vmatpush1.bf16.msra.mxu0 0
        %265 = vmatprep.subr.bf16.mxu0 0
        %266 = vmatpush1.bf16.msra.mxu0 0
        %267 = vmatprep.subr.bf16.mxu0 0
        %268 = vmatpush1.bf16.msra.mxu0 0
        %269 = vmatprep.subr.bf16.mxu0 0
        %270 = vmatpush1.bf16.msra.mxu0 0
        %271 = vmatprep.subr.bf16.mxu0 0
        %272 = vmatpush1.bf16.msra.mxu0 0
        %273 = vmatprep.subr.bf16.mxu0 0
        %274 = vmatpush1.bf16.msra.mxu0 0
        %275 = vmatprep.subr.bf16.mxu0 0
        %276 = vmatpush1.bf16.msra.mxu0 0
        %277 = vmatprep.subr.bf16.mxu0 0
        %278 = vmatpush1.bf16.msra.mxu0 0
        %279 = vmatprep.subr.bf16.mxu0 0
        %280 = vmatpush1.bf16.msra.mxu0 0
        %281 = vmatprep.subr.bf16.mxu0 0
        %282 = vmatpush1.bf16.msra.mxu0 0
        %283 = vmatprep.subr.bf16.mxu0 0
        %284 = vmatpush1.bf16.msra.mxu0 0
        %285 = vmatprep.mubr.bf16.mxu0 0
        %286 = vmatmul.mubr.bf16.gmra.mrb[0].mxu0 %v210
        %v287 = vpop.f32.mrb[0].mxu0
        %v288 = vadd.f32 0.0, %v287
        %v289 = vpop.f32.mrb[0].mxu0
        %v290 = vpop.f32.mrb[0].mxu0
        %v291 = vpop.f32.mrb[0].mxu0
        %292 = vdwg.mxu0
        %293 = vrot.lane.b32.xlu0 %v189, 33
        %v294 = vpop.permute.xlu0 %293
        %295 = vrot.lane.b32.xlu0 %v190, 33
        %v296 = vpop.permute.xlu0 %295
        %297 = vrot.lane.b32.xlu0 %v191, 33
        %v298 = vpop.permute.xlu0 %297
        %299 = vrot.lane.b32.xlu0 %v192, 33
        %v300 = vpop.permute.xlu0 %299
        %vm301 = vcmask 269312
        %v302 = vsel %vm301, %v294, %v296
        %v303 = vsel %vm301, %v296, %v298
        %v304 = vsel %vm301, %v298, %v300
        %v309 = vsel %vm208, %v170, 0
        %311 = vmatprep.subr.bf16.mxu0 %v303
        %312 = vmatpush1.bf16.msra.mxu0 %v302
        %313 = vmatprep.subr.bf16.mxu0 0
        %314 = vmatpush1.bf16.msra.mxu0 0
        %315 = vmatprep.subr.bf16.mxu0 0
        %316 = vmatpush1.bf16.msra.mxu0 0
        %317 = vmatprep.subr.bf16.mxu0 0
        %318 = vmatpush1.bf16.msra.mxu0 0
        %319 = vmatprep.subr.bf16.mxu0 0
        %320 = vmatpush1.bf16.msra.mxu0 0
        %321 = vmatprep.subr.bf16.mxu0 0
        %322 = vmatpush1.bf16.msra.mxu0 0
        %323 = vmatprep.subr.bf16.mxu0 0
        %324 = vmatpush1.bf16.msra.mxu0 0
        %325 = vmatprep.subr.bf16.mxu0 0
        %326 = vmatpush1.bf16.msra.mxu0 0
        %327 = vmatprep.subr.bf16.mxu0 0
        %328 = vmatpush1.bf16.msra.mxu0 0
        %329 = vmatprep.subr.bf16.mxu0 0
        %330 = vmatpush1.bf16.msra.mxu0 0
        %331 = vmatprep.subr.bf16.mxu0 0
        %332 = vmatpush1.bf16.msra.mxu0 0
        %333 = vmatprep.subr.bf16.mxu0 0
        %334 = vmatpush1.bf16.msra.mxu0 0
        %335 = vmatprep.subr.bf16.mxu0 0
        %336 = vmatpush1.bf16.msra.mxu0 0
        %337 = vmatprep.subr.bf16.mxu0 0
        %338 = vmatpush1.bf16.msra.mxu0 0
        %339 = vmatprep.subr.bf16.mxu0 0
        %340 = vmatpush1.bf16.msra.mxu0 0
        %341 = vmatprep.subr.bf16.mxu0 0
        %342 = vmatpush1.bf16.msra.mxu0 0
        %343 = vmatprep.mubr.bf16.mxu0 0
        %344 = vmatmul.mubr.bf16.gmra.mrb[0].mxu0 %v309
        %v345 = vpop.f32.mrb[0].mxu0
        %v346 = vadd.f32 %v247, %v345
        %v347 = vpop.f32.mrb[0].mxu0
        %v348 = vadd.f32 %v249, %v347
        %v349 = vpop.f32.mrb[0].mxu0
        %v350 = vpop.f32.mrb[0].mxu0
        %351 = vdwg.mxu0
        %352 = vmatprep.subr.bf16.mxu0 0
        %353 = vmatpush1.bf16.msra.mxu0 %v304
        %354 = vmatprep.subr.bf16.mxu0 0
        %355 = vmatpush1.bf16.msra.mxu0 0
        %356 = vmatprep.subr.bf16.mxu0 0
        %357 = vmatpush1.bf16.msra.mxu0 0
        %358 = vmatprep.subr.bf16.mxu0 0
        %359 = vmatpush1.bf16.msra.mxu0 0
        %360 = vmatprep.subr.bf16.mxu0 0
        %361 = vmatpush1.bf16.msra.mxu0 0
        %362 = vmatprep.subr.bf16.mxu0 0
        %363 = vmatpush1.bf16.msra.mxu0 0
        %364 = vmatprep.subr.bf16.mxu0 0
        %365 = vmatpush1.bf16.msra.mxu0 0
        %366 = vmatprep.subr.bf16.mxu0 0
        %367 = vmatpush1.bf16.msra.mxu0 0
        %368 = vmatprep.subr.bf16.mxu0 0
        %369 = vmatpush1.bf16.msra.mxu0 0
        %370 = vmatprep.subr.bf16.mxu0 0
        %371 = vmatpush1.bf16.msra.mxu0 0
        %372 = vmatprep.subr.bf16.mxu0 0
        %373 = vmatpush1.bf16.msra.mxu0 0
        %374 = vmatprep.subr.bf16.mxu0 0
        %375 = vmatpush1.bf16.msra.mxu0 0
        %376 = vmatprep.subr.bf16.mxu0 0
        %377 = vmatpush1.bf16.msra.mxu0 0
        %378 = vmatprep.subr.bf16.mxu0 0
        %379 = vmatpush1.bf16.msra.mxu0 0
        %380 = vmatprep.subr.bf16.mxu0 0
        %381 = vmatpush1.bf16.msra.mxu0 0
        %382 = vmatprep.subr.bf16.mxu0 0
        %383 = vmatpush1.bf16.msra.mxu0 0
        %384 = vmatprep.mubr.bf16.mxu0 0
        %385 = vmatmul.mubr.bf16.gmra.mrb[0].mxu0 %v309
        %v386 = vpop.f32.mrb[0].mxu0
        %v387 = vadd.f32 %v288, %v386
        %v388 = vpop.f32.mrb[0].mxu0
        %v389 = vpop.f32.mrb[0].mxu0
        %v390 = vpop.f32.mrb[0].mxu0
        %391 = vdwg.mxu0
        %s392 = scalar_lea.vmem %s1, 8
        %v393 = vld [vmem:[%s392] sm:$0xf]
        %394 = vrot.lane.b32.xlu0 %v189, 31
        %v395 = vpop.permute.xlu0 %394
        %396 = vrot.lane.b32.xlu0 %v190, 31
        %v397 = vpop.permute.xlu0 %396
        %398 = vrot.lane.b32.xlu0 %v191, 31
        %v399 = vpop.permute.xlu0 %398
        %400 = vrot.lane.b32.xlu0 %v192, 31
        %v401 = vpop.permute.xlu0 %400
        %vm402 = vcmask 252928
        %v403 = vsel %vm402, %v395, %v397
        %v404 = vsel %vm402, %v397, %v399
        %v405 = vsel %vm402, %v399, %v401
        %v410 = vsel %vm208, %v393, 0
        %412 = vmatprep.subr.bf16.mxu0 %v404
        %413 = vmatpush1.bf16.msra.mxu0 %v403
        %414 = vmatprep.subr.bf16.mxu0 0
        %415 = vmatpush1.bf16.msra.mxu0 0
        %416 = vmatprep.subr.bf16.mxu0 0
        %417 = vmatpush1.bf16.msra.mxu0 0
        %418 = vmatprep.subr.bf16.mxu0 0
        %419 = vmatpush1.bf16.msra.mxu0 0
        %420 = vmatprep.subr.bf16.mxu0 0
        %421 = vmatpush1.bf16.msra.mxu0 0
        %422 = vmatprep.subr.bf16.mxu0 0
        %423 = vmatpush1.bf16.msra.mxu0 0
        %424 = vmatprep.subr.bf16.mxu0 0
        %425 = vmatpush1.bf16.msra.mxu0 0
        %426 = vmatprep.subr.bf16.mxu0 0
        %427 = vmatpush1.bf16.msra.mxu0 0
        %428 = vmatprep.subr.bf16.mxu0 0
        %429 = vmatpush1.bf16.msra.mxu0 0
        %430 = vmatprep.subr.bf16.mxu0 0
        %431 = vmatpush1.bf16.msra.mxu0 0
        %432 = vmatprep.subr.bf16.mxu0 0
        %433 = vmatpush1.bf16.msra.mxu0 0
        %434 = vmatprep.subr.bf16.mxu0 0
        %435 = vmatpush1.bf16.msra.mxu0 0
        %436 = vmatprep.subr.bf16.mxu0 0
        %437 = vmatpush1.bf16.msra.mxu0 0
        %438 = vmatprep.subr.bf16.mxu0 0
        %439 = vmatpush1.bf16.msra.mxu0 0
        %440 = vmatprep.subr.bf16.mxu0 0
        %441 = vmatpush1.bf16.msra.mxu0 0
        %442 = vmatprep.subr.bf16.mxu0 0
        %443 = vmatpush1.bf16.msra.mxu0 0
        %444 = vmatprep.mubr.bf16.mxu0 0
        %445 = vmatmul.mubr.bf16.gmra.mrb[0].mxu0 %v410
        %v446 = vpop.f32.mrb[0].mxu0
        %v447 = vadd.f32 0.0, %v446
        %v448 = vpop.f32.mrb[0].mxu0
        %v449 = vadd.f32 0.0, %v448
        %v450 = vpop.f32.mrb[0].mxu0
        %v451 = vpop.f32.mrb[0].mxu0
        %452 = vdwg.mxu0
        %453 = vmatprep.subr.bf16.mxu0 0
        %454 = vmatpush1.bf16.msra.mxu0 %v405
        %455 = vmatprep.subr.bf16.mxu0 0
        %456 = vmatpush1.bf16.msra.mxu0 0
        %457 = vmatprep.subr.bf16.mxu0 0
        %458 = vmatpush1.bf16.msra.mxu0 0
        %459 = vmatprep.subr.bf16.mxu0 0
        %460 = vmatpush1.bf16.msra.mxu0 0
        %461 = vmatprep.subr.bf16.mxu0 0
        %462 = vmatpush1.bf16.msra.mxu0 0
        %463 = vmatprep.subr.bf16.mxu0 0
        %464 = vmatpush1.bf16.msra.mxu0 0
        %465 = vmatprep.subr.bf16.mxu0 0
        %466 = vmatpush1.bf16.msra.mxu0 0
        %467 = vmatprep.subr.bf16.mxu0 0
        %468 = vmatpush1.bf16.msra.mxu0 0
        %469 = vmatprep.subr.bf16.mxu0 0
        %470 = vmatpush1.bf16.msra.mxu0 0
        %471 = vmatprep.subr.bf16.mxu0 0
        %472 = vmatpush1.bf16.msra.mxu0 0
        %473 = vmatprep.subr.bf16.mxu0 0
        %474 = vmatpush1.bf16.msra.mxu0 0
        %475 = vmatprep.subr.bf16.mxu0 0
        %476 = vmatpush1.bf16.msra.mxu0 0
        %477 = vmatprep.subr.bf16.mxu0 0
        %478 = vmatpush1.bf16.msra.mxu0 0
        %479 = vmatprep.subr.bf16.mxu0 0
        %480 = vmatpush1.bf16.msra.mxu0 0
        %481 = vmatprep.subr.bf16.mxu0 0
        %482 = vmatpush1.bf16.msra.mxu0 0
        %483 = vmatprep.subr.bf16.mxu0 0
        %484 = vmatpush1.bf16.msra.mxu0 0
        %485 = vmatprep.mubr.bf16.mxu0 0
        %486 = vmatmul.mubr.bf16.gmra.mrb[0].mxu0 %v410
        %v487 = vpop.f32.mrb[0].mxu0
        %v488 = vadd.f32 0.0, %v487
        %v489 = vpop.f32.mrb[0].mxu0
        %v490 = vpop.f32.mrb[0].mxu0
        %v491 = vpop.f32.mrb[0].mxu0
        %492 = vdwg.mxu0
        %v493 = vadd.f32 %v346, %v447
        %v494 = vadd.f32 %v348, %v449
        %v495 = vadd.f32 %v387, %v488
        %s496 = scalar_lea.vmem %s1, 12
        %v497 = vld [vmem:[%s496] sm:$0xf]
        %498 = vrot.lane.b32.xlu0 %v189, 9
        %v499 = vpop.permute.xlu0 %498
        %500 = vrot.lane.b32.xlu0 %v190, 9
        %v501 = vpop.permute.xlu0 %500
        %502 = vrot.lane.b32.xlu0 %v191, 9
        %v503 = vpop.permute.xlu0 %502
        %504 = vrot.lane.b32.xlu0 %v192, 9
        %v505 = vpop.permute.xlu0 %504
        %vm506 = vcmask 72704
        %v507 = vsel %vm506, %v499, %v501
        %v508 = vsel %vm506, %v501, %v503
        %v509 = vsel %vm506, %v503, %v505
        %v514 = vsel %vm208, %v497, 0
        %516 = vmatprep.subr.bf16.mxu0 %v508
        %517 = vmatpush1.bf16.msra.mxu0 %v507
        %518 = vmatprep.subr.bf16.mxu0 0
        %519 = vmatpush1.bf16.msra.mxu0 0
        %520 = vmatprep.subr.bf16.mxu0 0
        %521 = vmatpush1.bf16.msra.mxu0 0
        %522 = vmatprep.subr.bf16.mxu0 0
        %523 = vmatpush1.bf16.msra.mxu0 0
        %524 = vmatprep.subr.bf16.mxu0 0
        %525 = vmatpush1.bf16.msra.mxu0 0
        %526 = vmatprep.subr.bf16.mxu0 0
        %527 = vmatpush1.bf16.msra.mxu0 0
        %528 = vmatprep.subr.bf16.mxu0 0
        %529 = vmatpush1.bf16.msra.mxu0 0
        %530 = vmatprep.subr.bf16.mxu0 0
        %531 = vmatpush1.bf16.msra.mxu0 0
        %532 = vmatprep.subr.bf16.mxu0 0
        %533 = vmatpush1.bf16.msra.mxu0 0
        %534 = vmatprep.subr.bf16.mxu0 0
        %535 = vmatpush1.bf16.msra.mxu0 0
        %536 = vmatprep.subr.bf16.mxu0 0
        %537 = vmatpush1.bf16.msra.mxu0 0
        %538 = vmatprep.subr.bf16.mxu0 0
        %539 = vmatpush1.bf16.msra.mxu0 0
        %540 = vmatprep.subr.bf16.mxu0 0
        %541 = vmatpush1.bf16.msra.mxu0 0
        %542 = vmatprep.subr.bf16.mxu0 0
        %543 = vmatpush1.bf16.msra.mxu0 0
        %544 = vmatprep.subr.bf16.mxu0 0
        %545 = vmatpush1.bf16.msra.mxu0 0
        %546 = vmatprep.subr.bf16.mxu0 0
        %547 = vmatpush1.bf16.msra.mxu0 0
        %548 = vmatprep.mubr.bf16.mxu0 0
        %549 = vmatmul.mubr.bf16.gmra.mrb[0].mxu0 %v514
        %v550 = vpop.f32.mrb[0].mxu0
        %v551 = vadd.f32 0.0, %v550
        %v552 = vpop.f32.mrb[0].mxu0
        %v553 = vadd.f32 0.0, %v552
        %v554 = vpop.f32.mrb[0].mxu0
        %v555 = vpop.f32.mrb[0].mxu0
        %556 = vdwg.mxu0
        %557 = vmatprep.subr.bf16.mxu0 0
        %558 = vmatpush1.bf16.msra.mxu0 %v509
        %559 = vmatprep.subr.bf16.mxu0 0
        %560 = vmatpush1.bf16.msra.mxu0 0
        %561 = vmatprep.subr.bf16.mxu0 0
        %562 = vmatpush1.bf16.msra.mxu0 0
        %563 = vmatprep.subr.bf16.mxu0 0
        %564 = vmatpush1.bf16.msra.mxu0 0
        %565 = vmatprep.subr.bf16.mxu0 0
        %566 = vmatpush1.bf16.msra.mxu0 0
        %567 = vmatprep.subr.bf16.mxu0 0
        %568 = vmatpush1.bf16.msra.mxu0 0
        %569 = vmatprep.subr.bf16.mxu0 0
        %570 = vmatpush1.bf16.msra.mxu0 0
        %571 = vmatprep.subr.bf16.mxu0 0
        %572 = vmatpush1.bf16.msra.mxu0 0
        %573 = vmatprep.subr.bf16.mxu0 0
        %574 = vmatpush1.bf16.msra.mxu0 0
        %575 = vmatprep.subr.bf16.mxu0 0
        %576 = vmatpush1.bf16.msra.mxu0 0
        %577 = vmatprep.subr.bf16.mxu0 0
        %578 = vmatpush1.bf16.msra.mxu0 0
        %579 = vmatprep.subr.bf16.mxu0 0
        %580 = vmatpush1.bf16.msra.mxu0 0
        %581 = vmatprep.subr.bf16.mxu0 0
        %582 = vmatpush1.bf16.msra.mxu0 0
        %583 = vmatprep.subr.bf16.mxu0 0
        %584 = vmatpush1.bf16.msra.mxu0 0
        %585 = vmatprep.subr.bf16.mxu0 0
        %586 = vmatpush1.bf16.msra.mxu0 0
        %587 = vmatprep.subr.bf16.mxu0 0
        %588 = vmatpush1.bf16.msra.mxu0 0
        %589 = vmatprep.mubr.bf16.mxu0 0
        %590 = vmatmul.mubr.bf16.gmra.mrb[0].mxu0 %v514
        %v591 = vpop.f32.mrb[0].mxu0
        %v592 = vadd.f32 0.0, %v591
        %v593 = vpop.f32.mrb[0].mxu0
        %v594 = vpop.f32.mrb[0].mxu0
        %v595 = vpop.f32.mrb[0].mxu0
        %596 = vdwg.mxu0
        %v597 = vadd.f32 %v493, %v551
        %v598 = vadd.f32 %v494, %v553
        %v599 = vadd.f32 %v495, %v592
        %s600 = scalar_lea.vmem %s1, 16
        %v601 = vld [vmem:[%s600] sm:$0xf]
        %602 = vrot.lane.b32.xlu0 %v189, 8
        %v603 = vpop.permute.xlu0 %602
        %604 = vrot.lane.b32.xlu0 %v190, 8
        %v605 = vpop.permute.xlu0 %604
        %606 = vrot.lane.b32.xlu0 %v191, 8
        %v607 = vpop.permute.xlu0 %606
        %608 = vrot.lane.b32.xlu0 %v192, 8
        %v609 = vpop.permute.xlu0 %608
        %vm610 = vcmask 64512
        %v611 = vsel %vm610, %v603, %v605
        %v612 = vsel %vm610, %v605, %v607
        %v613 = vsel %vm610, %v607, %v609
        %v618 = vsel %vm208, %v601, 0
        %620 = vmatprep.subr.bf16.mxu0 %v612
        %621 = vmatpush1.bf16.msra.mxu0 %v611
        %622 = vmatprep.subr.bf16.mxu0 0
        %623 = vmatpush1.bf16.msra.mxu0 0
        %624 = vmatprep.subr.bf16.mxu0 0
        %625 = vmatpush1.bf16.msra.mxu0 0
        %626 = vmatprep.subr.bf16.mxu0 0
        %627 = vmatpush1.bf16.msra.mxu0 0
        %628 = vmatprep.subr.bf16.mxu0 0
        %629 = vmatpush1.bf16.msra.mxu0 0
        %630 = vmatprep.subr.bf16.mxu0 0
        %631 = vmatpush1.bf16.msra.mxu0 0
        %632 = vmatprep.subr.bf16.mxu0 0
        %633 = vmatpush1.bf16.msra.mxu0 0
        %634 = vmatprep.subr.bf16.mxu0 0
        %635 = vmatpush1.bf16.msra.mxu0 0
        %636 = vmatprep.subr.bf16.mxu0 0
        %637 = vmatpush1.bf16.msra.mxu0 0
        %638 = vmatprep.subr.bf16.mxu0 0
        %639 = vmatpush1.bf16.msra.mxu0 0
        %640 = vmatprep.subr.bf16.mxu0 0
        %641 = vmatpush1.bf16.msra.mxu0 0
        %642 = vmatprep.subr.bf16.mxu0 0
        %643 = vmatpush1.bf16.msra.mxu0 0
        %644 = vmatprep.subr.bf16.mxu0 0
        %645 = vmatpush1.bf16.msra.mxu0 0
        %646 = vmatprep.subr.bf16.mxu0 0
        %647 = vmatpush1.bf16.msra.mxu0 0
        %648 = vmatprep.subr.bf16.mxu0 0
        %649 = vmatpush1.bf16.msra.mxu0 0
        %650 = vmatprep.subr.bf16.mxu0 0
        %651 = vmatpush1.bf16.msra.mxu0 0
        %652 = vmatprep.mubr.bf16.mxu0 0
        %653 = vmatmul.mubr.bf16.gmra.mrb[0].mxu0 %v618
        %v654 = vpop.f32.mrb[0].mxu0
        %v655 = vadd.f32 0.0, %v654
        %v656 = vpop.f32.mrb[0].mxu0
        %v657 = vadd.f32 0.0, %v656
        %v658 = vpop.f32.mrb[0].mxu0
        %v659 = vpop.f32.mrb[0].mxu0
        %660 = vdwg.mxu0
        %661 = vmatprep.subr.bf16.mxu0 0
        %662 = vmatpush1.bf16.msra.mxu0 %v613
        %663 = vmatprep.subr.bf16.mxu0 0
        %664 = vmatpush1.bf16.msra.mxu0 0
        %665 = vmatprep.subr.bf16.mxu0 0
        %666 = vmatpush1.bf16.msra.mxu0 0
        %667 = vmatprep.subr.bf16.mxu0 0
        %668 = vmatpush1.bf16.msra.mxu0 0
        %669 = vmatprep.subr.bf16.mxu0 0
        %670 = vmatpush1.bf16.msra.mxu0 0
        %671 = vmatprep.subr.bf16.mxu0 0
        %672 = vmatpush1.bf16.msra.mxu0 0
        %673 = vmatprep.subr.bf16.mxu0 0
        %674 = vmatpush1.bf16.msra.mxu0 0
        %675 = vmatprep.subr.bf16.mxu0 0
        %676 = vmatpush1.bf16.msra.mxu0 0
        %677 = vmatprep.subr.bf16.mxu0 0
        %678 = vmatpush1.bf16.msra.mxu0 0
        %679 = vmatprep.subr.bf16.mxu0 0
        %680 = vmatpush1.bf16.msra.mxu0 0
        %681 = vmatprep.subr.bf16.mxu0 0
        %682 = vmatpush1.bf16.msra.mxu0 0
        %683 = vmatprep.subr.bf16.mxu0 0
        %684 = vmatpush1.bf16.msra.mxu0 0
        %685 = vmatprep.subr.bf16.mxu0 0
        %686 = vmatpush1.bf16.msra.mxu0 0
        %687 = vmatprep.subr.bf16.mxu0 0
        %688 = vmatpush1.bf16.msra.mxu0 0
        %689 = vmatprep.subr.bf16.mxu0 0
        %690 = vmatpush1.bf16.msra.mxu0 0
        %691 = vmatprep.subr.bf16.mxu0 0
        %692 = vmatpush1.bf16.msra.mxu0 0
        %693 = vmatprep.mubr.bf16.mxu0 0
        %694 = vmatmul.mubr.bf16.gmra.mrb[0].mxu0 %v618
        %v695 = vpop.f32.mrb[0].mxu0
        %v696 = vadd.f32 0.0, %v695
        %v697 = vpop.f32.mrb[0].mxu0
        %v698 = vpop.f32.mrb[0].mxu0
        %v699 = vpop.f32.mrb[0].mxu0
        %700 = vdwg.mxu0
        %v701 = vadd.f32 %v597, %v655
        %v702 = vadd.f32 %v598, %v657
        %v703 = vadd.f32 %v599, %v696
        %s704 = scalar_lea.vmem %s1, 20
        %v705 = vld [vmem:[%s704] sm:$0xf]
        %706 = vrot.lane.b32.xlu0 %v189, 7
        %v707 = vpop.permute.xlu0 %706
        %708 = vrot.lane.b32.xlu0 %v190, 7
        %v709 = vpop.permute.xlu0 %708
        %710 = vrot.lane.b32.xlu0 %v191, 7
        %v711 = vpop.permute.xlu0 %710
        %712 = vrot.lane.b32.xlu0 %v192, 7
        %v713 = vpop.permute.xlu0 %712
        %vm714 = vcmask 56320
        %v715 = vsel %vm714, %v707, %v709
        %v716 = vsel %vm714, %v709, %v711
        %v717 = vsel %vm714, %v711, %v713
        %v722 = vsel %vm208, %v705, 0
        %724 = vmatprep.subr.bf16.mxu0 %v716
        %725 = vmatpush1.bf16.msra.mxu0 %v715
        %726 = vmatprep.subr.bf16.mxu0 0
        %727 = vmatpush1.bf16.msra.mxu0 0
        %728 = vmatprep.subr.bf16.mxu0 0
        %729 = vmatpush1.bf16.msra.mxu0 0
        %730 = vmatprep.subr.bf16.mxu0 0
        %731 = vmatpush1.bf16.msra.mxu0 0
        %732 = vmatprep.subr.bf16.mxu0 0
        %733 = vmatpush1.bf16.msra.mxu0 0
        %734 = vmatprep.subr.bf16.mxu0 0
        %735 = vmatpush1.bf16.msra.mxu0 0
        %736 = vmatprep.subr.bf16.mxu0 0
        %737 = vmatpush1.bf16.msra.mxu0 0
        %738 = vmatprep.subr.bf16.mxu0 0
        %739 = vmatpush1.bf16.msra.mxu0 0
        %740 = vmatprep.subr.bf16.mxu0 0
        %741 = vmatpush1.bf16.msra.mxu0 0
        %742 = vmatprep.subr.bf16.mxu0 0
        %743 = vmatpush1.bf16.msra.mxu0 0
        %744 = vmatprep.subr.bf16.mxu0 0
        %745 = vmatpush1.bf16.msra.mxu0 0
        %746 = vmatprep.subr.bf16.mxu0 0
        %747 = vmatpush1.bf16.msra.mxu0 0
        %748 = vmatprep.subr.bf16.mxu0 0
        %749 = vmatpush1.bf16.msra.mxu0 0
        %750 = vmatprep.subr.bf16.mxu0 0
        %751 = vmatpush1.bf16.msra.mxu0 0
        %752 = vmatprep.subr.bf16.mxu0 0
        %753 = vmatpush1.bf16.msra.mxu0 0
        %754 = vmatprep.subr.bf16.mxu0 0
        %755 = vmatpush1.bf16.msra.mxu0 0
        %756 = vmatprep.mubr.bf16.mxu0 0
        %757 = vmatmul.mubr.bf16.gmra.mrb[0].mxu0 %v722
        %v758 = vpop.f32.mrb[0].mxu0
        %v759 = vadd.f32 0.0, %v758
        %v760 = vpop.f32.mrb[0].mxu0
        %v761 = vadd.f32 0.0, %v760
        %v762 = vpop.f32.mrb[0].mxu0
        %v763 = vpop.f32.mrb[0].mxu0
        %764 = vdwg.mxu0
        %765 = vmatprep.subr.bf16.mxu0 0
        %766 = vmatpush1.bf16.msra.mxu0 %v717
        %767 = vmatprep.subr.bf16.mxu0 0
        %768 = vmatpush1.bf16.msra.mxu0 0
        %769 = vmatprep.subr.bf16.mxu0 0
        %770 = vmatpush1.bf16.msra.mxu0 0
        %771 = vmatprep.subr.bf16.mxu0 0
        %772 = vmatpush1.bf16.msra.mxu0 0
        %773 = vmatprep.subr.bf16.mxu0 0
        %774 = vmatpush1.bf16.msra.mxu0 0
        %775 = vmatprep.subr.bf16.mxu0 0
        %776 = vmatpush1.bf16.msra.mxu0 0
        %777 = vmatprep.subr.bf16.mxu0 0
        %778 = vmatpush1.bf16.msra.mxu0 0
        %779 = vmatprep.subr.bf16.mxu0 0
        %780 = vmatpush1.bf16.msra.mxu0 0
        %781 = vmatprep.subr.bf16.mxu0 0
        %782 = vmatpush1.bf16.msra.mxu0 0
        %783 = vmatprep.subr.bf16.mxu0 0
        %784 = vmatpush1.bf16.msra.mxu0 0
        %785 = vmatprep.subr.bf16.mxu0 0
        %786 = vmatpush1.bf16.msra.mxu0 0
        %787 = vmatprep.subr.bf16.mxu0 0
        %788 = vmatpush1.bf16.msra.mxu0 0
        %789 = vmatprep.subr.bf16.mxu0 0
        %790 = vmatpush1.bf16.msra.mxu0 0
        %791 = vmatprep.subr.bf16.mxu0 0
        %792 = vmatpush1.bf16.msra.mxu0 0
        %793 = vmatprep.subr.bf16.mxu0 0
        %794 = vmatpush1.bf16.msra.mxu0 0
        %795 = vmatprep.subr.bf16.mxu0 0
        %796 = vmatpush1.bf16.msra.mxu0 0
        %797 = vmatprep.mubr.bf16.mxu0 0
        %798 = vmatmul.mubr.bf16.gmra.mrb[0].mxu0 %v722
        %v799 = vpop.f32.mrb[0].mxu0
        %v800 = vadd.f32 0.0, %v799
        %v801 = vpop.f32.mrb[0].mxu0
        %v802 = vpop.f32.mrb[0].mxu0
        %v803 = vpop.f32.mrb[0].mxu0
        %804 = vdwg.mxu0
        %v805 = vadd.f32 %v701, %v759
        %v806 = vadd.f32 %v702, %v761
        %v807 = vadd.f32 %v703, %v800
        %s808 = scalar_lea.vmem %s1, 24
        %v809 = vld [vmem:[%s808] sm:$0xf]
        %v810 = vld [vmem:[%s168 + $0x4] sm:$0xff]
        %v811 = vld [vmem:[%s168 + $0xc] sm:$0xff]
        %v812 = vld [vmem:[%s168 + $0x18] sm:$0xff]
        %v813 = vld [vmem:[%s168 + $0x20] sm:$0xff]
        %v818 = vunpack.c.l.b16 %v810
        %v819 = vunpack.c.h.b16 %v810
        %v820 = vunpack.c.l.b16 %v811
        %v821 = vunpack.c.h.b16 %v811
        %v822 = vunpack.c.l.b16 %v812
        %v823 = vunpack.c.h.b16 %v812
        %v824 = vunpack.c.l.b16 %v813
        %v825 = vunpack.c.h.b16 %v813
        %v826 = vpack.c.b16 %v822, %v818
        %v827 = vpack.c.b16 %v823, %v819
        %v828 = vpack.c.b16 %v824, %v820
        %v829 = vpack.c.b16 %v825, %v821
        %830 = vrot.lane.b32.xlu0 %v826, 113
        %v831 = vpop.permute.xlu0 %830
        %832 = vrot.lane.b32.xlu0 %v827, 113
        %v833 = vpop.permute.xlu0 %832
        %834 = vrot.lane.b32.xlu0 %v828, 113
        %v835 = vpop.permute.xlu0 %834
        %836 = vrot.lane.b32.xlu0 %v829, 113
        %v837 = vpop.permute.xlu0 %836
        %vm838 = vcmask 924672
        %v839 = vsel %vm838, %v831, %v833
        %v840 = vsel %vm838, %v833, %v835
        %v841 = vsel %vm838, %v835, %v837
        %v846 = vsel %vm208, %v809, 0
        %848 = vmatprep.subr.bf16.mxu0 %v840
        %849 = vmatpush1.bf16.msra.mxu0 %v839
        %850 = vmatprep.subr.bf16.mxu0 0
        %851 = vmatpush1.bf16.msra.mxu0 0
        %852 = vmatprep.subr.bf16.mxu0 0
        %853 = vmatpush1.bf16.msra.mxu0 0
        %854 = vmatprep.subr.bf16.mxu0 0
        %855 = vmatpush1.bf16.msra.mxu0 0
        %856 = vmatprep.subr.bf16.mxu0 0
        %857 = vmatpush1.bf16.msra.mxu0 0
        %858 = vmatprep.subr.bf16.mxu0 0
        %859 = vmatpush1.bf16.msra.mxu0 0
        %860 = vmatprep.subr.bf16.mxu0 0
        %861 = vmatpush1.bf16.msra.mxu0 0
        %862 = vmatprep.subr.bf16.mxu0 0
        %863 = vmatpush1.bf16.msra.mxu0 0
        %864 = vmatprep.subr.bf16.mxu0 0
        %865 = vmatpush1.bf16.msra.mxu0 0
        %866 = vmatprep.subr.bf16.mxu0 0
        %867 = vmatpush1.bf16.msra.mxu0 0
        %868 = vmatprep.subr.bf16.mxu0 0
        %869 = vmatpush1.bf16.msra.mxu0 0
        %870 = vmatprep.subr.bf16.mxu0 0
        %871 = vmatpush1.bf16.msra.mxu0 0
        %872 = vmatprep.subr.bf16.mxu0 0
        %873 = vmatpush1.bf16.msra.mxu0 0
        %874 = vmatprep.subr.bf16.mxu0 0
        %875 = vmatpush1.bf16.msra.mxu0 0
        %876 = vmatprep.subr.bf16.mxu0 0
        %877 = vmatpush1.bf16.msra.mxu0 0
        %878 = vmatprep.subr.bf16.mxu0 0
        %879 = vmatpush1.bf16.msra.mxu0 0
        %880 = vmatprep.mubr.bf16.mxu0 0
        %881 = vmatmul.mubr.bf16.gmra.mrb[0].mxu0 %v846
        %v882 = vpop.f32.mrb[0].mxu0
        %v883 = vadd.f32 0.0, %v882
        %v884 = vpop.f32.mrb[0].mxu0
        %v885 = vadd.f32 0.0, %v884
        %v886 = vpop.f32.mrb[0].mxu0
        %v887 = vpop.f32.mrb[0].mxu0
        %888 = vdwg.mxu0
        %889 = vmatprep.subr.bf16.mxu0 0
        %890 = vmatpush1.bf16.msra.mxu0 %v841
        %891 = vmatprep.subr.bf16.mxu0 0
        %892 = vmatpush1.bf16.msra.mxu0 0
        %893 = vmatprep.subr.bf16.mxu0 0
        %894 = vmatpush1.bf16.msra.mxu0 0
        %895 = vmatprep.subr.bf16.mxu0 0
        %896 = vmatpush1.bf16.msra.mxu0 0
        %897 = vmatprep.subr.bf16.mxu0 0
        %898 = vmatpush1.bf16.msra.mxu0 0
        %899 = vmatprep.subr.bf16.mxu0 0
        %900 = vmatpush1.bf16.msra.mxu0 0
        %901 = vmatprep.subr.bf16.mxu0 0
        %902 = vmatpush1.bf16.msra.mxu0 0
        %903 = vmatprep.subr.bf16.mxu0 0
        %904 = vmatpush1.bf16.msra.mxu0 0
        %905 = vmatprep.subr.bf16.mxu0 0
        %906 = vmatpush1.bf16.msra.mxu0 0
        %907 = vmatprep.subr.bf16.mxu0 0
        %908 = vmatpush1.bf16.msra.mxu0 0
        %909 = vmatprep.subr.bf16.mxu0 0
        %910 = vmatpush1.bf16.msra.mxu0 0
        %911 = vmatprep.subr.bf16.mxu0 0
        %912 = vmatpush1.bf16.msra.mxu0 0
        %913 = vmatprep.subr.bf16.mxu0 0
        %914 = vmatpush1.bf16.msra.mxu0 0
        %915 = vmatprep.subr.bf16.mxu0 0
        %916 = vmatpush1.bf16.msra.mxu0 0
        %917 = vmatprep.subr.bf16.mxu0 0
        %918 = vmatpush1.bf16.msra.mxu0 0
        %919 = vmatprep.subr.bf16.mxu0 0
        %920 = vmatpush1.bf16.msra.mxu0 0
        %921 = vmatprep.mubr.bf16.mxu0 0
        %922 = vmatmul.mubr.bf16.gmra.mrb[0].mxu0 %v846
        %v923 = vpop.f32.mrb[0].mxu0
        %v924 = vadd.f32 0.0, %v923
        %v925 = vpop.f32.mrb[0].mxu0
        %v926 = vpop.f32.mrb[0].mxu0
        %v927 = vpop.f32.mrb[0].mxu0
        %928 = vdwg.mxu0
        %v929 = vadd.f32 %v805, %v883
        %v930 = vadd.f32 %v806, %v885
        %v931 = vadd.f32 %v807, %v924
        %s932 = scalar_lea.vmem %s1, 28
        %v933 = vld [vmem:[%s932] sm:$0xf]
        %934 = vrot.lane.b32.xlu0 %v826, 112
        %v935 = vpop.permute.xlu0 %934
        %936 = vrot.lane.b32.xlu0 %v827, 112
        %v937 = vpop.permute.xlu0 %936
        %938 = vrot.lane.b32.xlu0 %v828, 112
        %v939 = vpop.permute.xlu0 %938
        %940 = vrot.lane.b32.xlu0 %v829, 112
        %v941 = vpop.permute.xlu0 %940
        %vm942 = vcmask 916480
        %v943 = vsel %vm942, %v935, %v937
        %v944 = vsel %vm942, %v937, %v939
        %v945 = vsel %vm942, %v939, %v941
        %v950 = vsel %vm208, %v933, 0
        %952 = vmatprep.subr.bf16.mxu0 %v944
        %953 = vmatpush1.bf16.msra.mxu0 %v943
        %954 = vmatprep.subr.bf16.mxu0 0
        %955 = vmatpush1.bf16.msra.mxu0 0
        %956 = vmatprep.subr.bf16.mxu0 0
        %957 = vmatpush1.bf16.msra.mxu0 0
        %958 = vmatprep.subr.bf16.mxu0 0
        %959 = vmatpush1.bf16.msra.mxu0 0
        %960 = vmatprep.subr.bf16.mxu0 0
        %961 = vmatpush1.bf16.msra.mxu0 0
        %962 = vmatprep.subr.bf16.mxu0 0
        %963 = vmatpush1.bf16.msra.mxu0 0
        %964 = vmatprep.subr.bf16.mxu0 0
        %965 = vmatpush1.bf16.msra.mxu0 0
        %966 = vmatprep.subr.bf16.mxu0 0
        %967 = vmatpush1.bf16.msra.mxu0 0
        %968 = vmatprep.subr.bf16.mxu0 0
        %969 = vmatpush1.bf16.msra.mxu0 0
        %970 = vmatprep.subr.bf16.mxu0 0
        %971 = vmatpush1.bf16.msra.mxu0 0
        %972 = vmatprep.subr.bf16.mxu0 0
        %973 = vmatpush1.bf16.msra.mxu0 0
        %974 = vmatprep.subr.bf16.mxu0 0
        %975 = vmatpush1.bf16.msra.mxu0 0
        %976 = vmatprep.subr.bf16.mxu0 0
        %977 = vmatpush1.bf16.msra.mxu0 0
        %978 = vmatprep.subr.bf16.mxu0 0
        %979 = vmatpush1.bf16.msra.mxu0 0
        %980 = vmatprep.subr.bf16.mxu0 0
        %981 = vmatpush1.bf16.msra.mxu0 0
        %982 = vmatprep.subr.bf16.mxu0 0
        %983 = vmatpush1.bf16.msra.mxu0 0
        %984 = vmatprep.mubr.bf16.mxu0 0
        %985 = vmatmul.mubr.bf16.gmra.mrb[0].mxu0 %v950
        %v986 = vpop.f32.mrb[0].mxu0
        %v987 = vadd.f32 0.0, %v986
        %v988 = vpop.f32.mrb[0].mxu0
        %v989 = vadd.f32 0.0, %v988
        %v990 = vpop.f32.mrb[0].mxu0
        %v991 = vpop.f32.mrb[0].mxu0
        %992 = vdwg.mxu0
        %993 = vmatprep.subr.bf16.mxu0 0
        %994 = vmatpush1.bf16.msra.mxu0 %v945
        %995 = vmatprep.subr.bf16.mxu0 0
        %996 = vmatpush1.bf16.msra.mxu0 0
        %997 = vmatprep.subr.bf16.mxu0 0
        %998 = vmatpush1.bf16.msra.mxu0 0
        %999 = vmatprep.subr.bf16.mxu0 0
        %1000 = vmatpush1.bf16.msra.mxu0 0
        %1001 = vmatprep.subr.bf16.mxu0 0
        %1002 = vmatpush1.bf16.msra.mxu0 0
        %1003 = vmatprep.subr.bf16.mxu0 0
        %1004 = vmatpush1.bf16.msra.mxu0 0
        %1005 = vmatprep.subr.bf16.mxu0 0
        %1006 = vmatpush1.bf16.msra.mxu0 0
        %1007 = vmatprep.subr.bf16.mxu0 0
        %1008 = vmatpush1.bf16.msra.mxu0 0
        %1009 = vmatprep.subr.bf16.mxu0 0
        %1010 = vmatpush1.bf16.msra.mxu0 0
        %1011 = vmatprep.subr.bf16.mxu0 0
        %1012 = vmatpush1.bf16.msra.mxu0 0
        %1013 = vmatprep.subr.bf16.mxu0 0
        %1014 = vmatpush1.bf16.msra.mxu0 0
        %1015 = vmatprep.subr.bf16.mxu0 0
        %1016 = vmatpush1.bf16.msra.mxu0 0
        %1017 = vmatprep.subr.bf16.mxu0 0
        %1018 = vmatpush1.bf16.msra.mxu0 0
        %1019 = vmatprep.subr.bf16.mxu0 0
        %1020 = vmatpush1.bf16.msra.mxu0 0
        %1021 = vmatprep.subr.bf16.mxu0 0
        %1022 = vmatpush1.bf16.msra.mxu0 0
        %1023 = vmatprep.subr.bf16.mxu0 0
        %1024 = vmatpush1.bf16.msra.mxu0 0
        %1025 = vmatprep.mubr.bf16.mxu0 0
        %1026 = vmatmul.mubr.bf16.gmra.mrb[0].mxu0 %v950
        %v1027 = vpop.f32.mrb[0].mxu0
        %v1028 = vadd.f32 0.0, %v1027
        %v1029 = vpop.f32.mrb[0].mxu0
        %v1030 = vpop.f32.mrb[0].mxu0
        %v1031 = vpop.f32.mrb[0].mxu0
        %1032 = vdwg.mxu0
        %v1033 = vadd.f32 %v929, %v987
        %v1034 = vadd.f32 %v930, %v989
        %v1035 = vadd.f32 %v931, %v1028
        %s1036 = scalar_lea.vmem %s1, 32
        %v1037 = vld [vmem:[%s1036] sm:$0xf]
        %1038 = vrot.lane.b32.xlu0 %v826, 111
        %v1039 = vpop.permute.xlu0 %1038
        %1040 = vrot.lane.b32.xlu0 %v827, 111
        %v1041 = vpop.permute.xlu0 %1040
        %1042 = vrot.lane.b32.xlu0 %v828, 111
        %v1043 = vpop.permute.xlu0 %1042
        %1044 = vrot.lane.b32.xlu0 %v829, 111
        %v1045 = vpop.permute.xlu0 %1044
        %vm1046 = vcmask 908288
        %v1047 = vsel %vm1046, %v1039, %v1041
        %v1048 = vsel %vm1046, %v1041, %v1043
        %v1049 = vsel %vm1046, %v1043, %v1045
        %v1054 = vsel %vm208, %v1037, 0
        %1056 = vmatprep.subr.bf16.mxu0 %v1048
        %1057 = vmatpush1.bf16.msra.mxu0 %v1047
        %1058 = vmatprep.subr.bf16.mxu0 0
        %1059 = vmatpush1.bf16.msra.mxu0 0
        %1060 = vmatprep.subr.bf16.mxu0 0
        %1061 = vmatpush1.bf16.msra.mxu0 0
        %1062 = vmatprep.subr.bf16.mxu0 0
        %1063 = vmatpush1.bf16.msra.mxu0 0
        %1064 = vmatprep.subr.bf16.mxu0 0
        %1065 = vmatpush1.bf16.msra.mxu0 0
        %1066 = vmatprep.subr.bf16.mxu0 0
        %1067 = vmatpush1.bf16.msra.mxu0 0
        %1068 = vmatprep.subr.bf16.mxu0 0
        %1069 = vmatpush1.bf16.msra.mxu0 0
        %1070 = vmatprep.subr.bf16.mxu0 0
        %1071 = vmatpush1.bf16.msra.mxu0 0
        %1072 = vmatprep.subr.bf16.mxu0 0
        %1073 = vmatpush1.bf16.msra.mxu0 0
        %1074 = vmatprep.subr.bf16.mxu0 0
        %1075 = vmatpush1.bf16.msra.mxu0 0
        %1076 = vmatprep.subr.bf16.mxu0 0
        %1077 = vmatpush1.bf16.msra.mxu0 0
        %1078 = vmatprep.subr.bf16.mxu0 0
        %1079 = vmatpush1.bf16.msra.mxu0 0
        %1080 = vmatprep.subr.bf16.mxu0 0
        %1081 = vmatpush1.bf16.msra.mxu0 0
        %1082 = vmatprep.subr.bf16.mxu0 0
        %1083 = vmatpush1.bf16.msra.mxu0 0
        %1084 = vmatprep.subr.bf16.mxu0 0
        %1085 = vmatpush1.bf16.msra.mxu0 0
        %1086 = vmatprep.subr.bf16.mxu0 0
        %1087 = vmatpush1.bf16.msra.mxu0 0
        %1088 = vmatprep.mubr.bf16.mxu0 0
        %1089 = vmatmul.mubr.bf16.gmra.mrb[0].mxu0 %v1054
        %v1090 = vpop.f32.mrb[0].mxu0
        %v1091 = vadd.f32 0.0, %v1090
        %v1092 = vpop.f32.mrb[0].mxu0
        %v1093 = vadd.f32 0.0, %v1092
        %v1094 = vpop.f32.mrb[0].mxu0
        %v1095 = vpop.f32.mrb[0].mxu0
        %1096 = vdwg.mxu0
        %1097 = vmatprep.subr.bf16.mxu0 0
        %1098 = vmatpush1.bf16.msra.mxu0 %v1049
        %1099 = vmatprep.subr.bf16.mxu0 0
        %1100 = vmatpush1.bf16.msra.mxu0 0
        %1101 = vmatprep.subr.bf16.mxu0 0
        %1102 = vmatpush1.bf16.msra.mxu0 0
        %1103 = vmatprep.subr.bf16.mxu0 0
        %1104 = vmatpush1.bf16.msra.mxu0 0
        %1105 = vmatprep.subr.bf16.mxu0 0
        %1106 = vmatpush1.bf16.msra.mxu0 0
        %1107 = vmatprep.subr.bf16.mxu0 0
        %1108 = vmatpush1.bf16.msra.mxu0 0
        %1109 = vmatprep.subr.bf16.mxu0 0
        %1110 = vmatpush1.bf16.msra.mxu0 0
        %1111 = vmatprep.subr.bf16.mxu0 0
        %1112 = vmatpush1.bf16.msra.mxu0 0
        %1113 = vmatprep.subr.bf16.mxu0 0
        %1114 = vmatpush1.bf16.msra.mxu0 0
        %1115 = vmatprep.subr.bf16.mxu0 0
        %1116 = vmatpush1.bf16.msra.mxu0 0
        %1117 = vmatprep.subr.bf16.mxu0 0
        %1118 = vmatpush1.bf16.msra.mxu0 0
        %1119 = vmatprep.subr.bf16.mxu0 0
        %1120 = vmatpush1.bf16.msra.mxu0 0
        %1121 = vmatprep.subr.bf16.mxu0 0
        %1122 = vmatpush1.bf16.msra.mxu0 0
        %1123 = vmatprep.subr.bf16.mxu0 0
        %1124 = vmatpush1.bf16.msra.mxu0 0
        %1125 = vmatprep.subr.bf16.mxu0 0
        %1126 = vmatpush1.bf16.msra.mxu0 0
        %1127 = vmatprep.subr.bf16.mxu0 0
        %1128 = vmatpush1.bf16.msra.mxu0 0
        %1129 = vmatprep.mubr.bf16.mxu0 0
        %1130 = vmatmul.mubr.bf16.gmra.mrb[0].mxu0 %v1054
        %v1131 = vpop.f32.mrb[0].mxu0
        %v1132 = vadd.f32 0.0, %v1131
        %v1133 = vpop.f32.mrb[0].mxu0
        %v1134 = vpop.f32.mrb[0].mxu0
        %v1135 = vpop.f32.mrb[0].mxu0
        %1136 = vdwg.mxu0
        %v1137 = vadd.f32 %v1033, %v1091
        %v1138 = vadd.f32 %v1034, %v1093
        %v1139 = vadd.f32 %v1035, %v1132
        %s1140 = scalar_lea.vmem %s1, 36
        %v1141 = vld [vmem:[%s1140] sm:$0xf]
        %1142 = vrot.lane.b32.xlu0 %v189, 58
        %v1143 = vpop.permute.xlu0 %1142
        %1144 = vrot.lane.b32.xlu0 %v190, 58
        %v1145 = vpop.permute.xlu0 %1144
        %1146 = vrot.lane.b32.xlu0 %v191, 58
        %v1147 = vpop.permute.xlu0 %1146
        %1148 = vrot.lane.b32.xlu0 %v192, 58
        %v1149 = vpop.permute.xlu0 %1148
        %vm1150 = vcmask 474112
        %v1151 = vsel %vm1150, %v1143, %v1145
        %v1152 = vsel %vm1150, %v1145, %v1147
        %v1153 = vsel %vm1150, %v1147, %v1149
        %v1158 = vsel %vm208, %v1141, 0
        %1160 = vmatprep.subr.bf16.mxu0 %v1152
        %1161 = vmatpush1.bf16.msra.mxu0 %v1151
        %1162 = vmatprep.subr.bf16.mxu0 0
        %1163 = vmatpush1.bf16.msra.mxu0 0
        %1164 = vmatprep.subr.bf16.mxu0 0
        %1165 = vmatpush1.bf16.msra.mxu0 0
        %1166 = vmatprep.subr.bf16.mxu0 0
        %1167 = vmatpush1.bf16.msra.mxu0 0
        %1168 = vmatprep.subr.bf16.mxu0 0
        %1169 = vmatpush1.bf16.msra.mxu0 0
        %1170 = vmatprep.subr.bf16.mxu0 0
        %1171 = vmatpush1.bf16.msra.mxu0 0
        %1172 = vmatprep.subr.bf16.mxu0 0
        %1173 = vmatpush1.bf16.msra.mxu0 0
        %1174 = vmatprep.subr.bf16.mxu0 0
        %1175 = vmatpush1.bf16.msra.mxu0 0
        %1176 = vmatprep.subr.bf16.mxu0 0
        %1177 = vmatpush1.bf16.msra.mxu0 0
        %1178 = vmatprep.subr.bf16.mxu0 0
        %1179 = vmatpush1.bf16.msra.mxu0 0
        %1180 = vmatprep.subr.bf16.mxu0 0
        %1181 = vmatpush1.bf16.msra.mxu0 0
        %1182 = vmatprep.subr.bf16.mxu0 0
        %1183 = vmatpush1.bf16.msra.mxu0 0
        %1184 = vmatprep.subr.bf16.mxu0 0
        %1185 = vmatpush1.bf16.msra.mxu0 0
        %1186 = vmatprep.subr.bf16.mxu0 0
        %1187 = vmatpush1.bf16.msra.mxu0 0
        %1188 = vmatprep.subr.bf16.mxu0 0
        %1189 = vmatpush1.bf16.msra.mxu0 0
        %1190 = vmatprep.subr.bf16.mxu0 0
        %1191 = vmatpush1.bf16.msra.mxu0 0
        %1192 = vmatprep.mubr.bf16.mxu0 0
        %1193 = vmatmul.mubr.bf16.gmra.mrb[0].mxu0 %v1158
        %v1194 = vpop.f32.mrb[0].mxu0
        %v1195 = vadd.f32 0.0, %v1194
        %v1196 = vpop.f32.mrb[0].mxu0
        %v1197 = vadd.f32 0.0, %v1196
        %v1198 = vpop.f32.mrb[0].mxu0
        %v1199 = vpop.f32.mrb[0].mxu0
        %1200 = vdwg.mxu0
        %1201 = vmatprep.subr.bf16.mxu0 0
        %1202 = vmatpush1.bf16.msra.mxu0 %v1153
        %1203 = vmatprep.subr.bf16.mxu0 0
        %1204 = vmatpush1.bf16.msra.mxu0 0
        %1205 = vmatprep.subr.bf16.mxu0 0
        %1206 = vmatpush1.bf16.msra.mxu0 0
        %1207 = vmatprep.subr.bf16.mxu0 0
        %1208 = vmatpush1.bf16.msra.mxu0 0
        %1209 = vmatprep.subr.bf16.mxu0 0
        %1210 = vmatpush1.bf16.msra.mxu0 0
        %1211 = vmatprep.subr.bf16.mxu0 0
        %1212 = vmatpush1.bf16.msra.mxu0 0
        %1213 = vmatprep.subr.bf16.mxu0 0
        %1214 = vmatpush1.bf16.msra.mxu0 0
        %1215 = vmatprep.subr.bf16.mxu0 0
        %1216 = vmatpush1.bf16.msra.mxu0 0
        %1217 = vmatprep.subr.bf16.mxu0 0
        %1218 = vmatpush1.bf16.msra.mxu0 0
        %1219 = vmatprep.subr.bf16.mxu0 0
        %1220 = vmatpush1.bf16.msra.mxu0 0
        %1221 = vmatprep.subr.bf16.mxu0 0
        %1222 = vmatpush1.bf16.msra.mxu0 0
        %1223 = vmatprep.subr.bf16.mxu0 0
        %1224 = vmatpush1.bf16.msra.mxu0 0
        %1225 = vmatprep.subr.bf16.mxu0 0
        %1226 = vmatpush1.bf16.msra.mxu0 0
        %1227 = vmatprep.subr.bf16.mxu0 0
        %1228 = vmatpush1.bf16.msra.mxu0 0
        %1229 = vmatprep.subr.bf16.mxu0 0
        %1230 = vmatpush1.bf16.msra.mxu0 0
        %1231 = vmatprep.subr.bf16.mxu0 0
        %1232 = vmatpush1.bf16.msra.mxu0 0
        %1233 = vmatprep.mubr.bf16.mxu0 0
        %1234 = vmatmul.mubr.bf16.gmra.mrb[0].mxu0 %v1158
        %v1235 = vpop.f32.mrb[0].mxu0
        %v1236 = vadd.f32 0.0, %v1235
        %v1237 = vpop.f32.mrb[0].mxu0
        %v1238 = vpop.f32.mrb[0].mxu0
        %v1239 = vpop.f32.mrb[0].mxu0
        %1240 = vdwg.mxu0
        %v1241 = vadd.f32 %v1137, %v1195
        %v1242 = vadd.f32 %v1138, %v1197
        %v1243 = vadd.f32 %v1139, %v1236
        %s1244 = scalar_lea.vmem %s1, 40
        %v1245 = vld [vmem:[%s1244] sm:$0xf]
        %1246 = vrot.lane.b32.xlu0 %v189, 56
        %v1247 = vpop.permute.xlu0 %1246
        %1248 = vrot.lane.b32.xlu0 %v190, 56
        %v1249 = vpop.permute.xlu0 %1248
        %1250 = vrot.lane.b32.xlu0 %v191, 56
        %v1251 = vpop.permute.xlu0 %1250
        %1252 = vrot.lane.b32.xlu0 %v192, 56
        %v1253 = vpop.permute.xlu0 %1252
        %vm1254 = vcmask 457728
        %v1255 = vsel %vm1254, %v1247, %v1249
        %v1256 = vsel %vm1254, %v1249, %v1251
        %v1257 = vsel %vm1254, %v1251, %v1253
        %v1262 = vsel %vm208, %v1245, 0
        %1264 = vmatprep.subr.bf16.mxu0 %v1256
        %1265 = vmatpush1.bf16.msra.mxu0 %v1255
        %1266 = vmatprep.subr.bf16.mxu0 0
        %1267 = vmatpush1.bf16.msra.mxu0 0
        %1268 = vmatprep.subr.bf16.mxu0 0
        %1269 = vmatpush1.bf16.msra.mxu0 0
        %1270 = vmatprep.subr.bf16.mxu0 0
        %1271 = vmatpush1.bf16.msra.mxu0 0
        %1272 = vmatprep.subr.bf16.mxu0 0
        %1273 = vmatpush1.bf16.msra.mxu0 0
        %1274 = vmatprep.subr.bf16.mxu0 0
        %1275 = vmatpush1.bf16.msra.mxu0 0
        %1276 = vmatprep.subr.bf16.mxu0 0
        %1277 = vmatpush1.bf16.msra.mxu0 0
        %1278 = vmatprep.subr.bf16.mxu0 0
        %1279 = vmatpush1.bf16.msra.mxu0 0
        %1280 = vmatprep.subr.bf16.mxu0 0
        %1281 = vmatpush1.bf16.msra.mxu0 0
        %1282 = vmatprep.subr.bf16.mxu0 0
        %1283 = vmatpush1.bf16.msra.mxu0 0
        %1284 = vmatprep.subr.bf16.mxu0 0
        %1285 = vmatpush1.bf16.msra.mxu0 0
        %1286 = vmatprep.subr.bf16.mxu0 0
        %1287 = vmatpush1.bf16.msra.mxu0 0
        %1288 = vmatprep.subr.bf16.mxu0 0
        %1289 = vmatpush1.bf16.msra.mxu0 0
        %1290 = vmatprep.subr.bf16.mxu0 0
        %1291 = vmatpush1.bf16.msra.mxu0 0
        %1292 = vmatprep.subr.bf16.mxu0 0
        %1293 = vmatpush1.bf16.msra.mxu0 0
        %1294 = vmatprep.subr.bf16.mxu0 0
        %1295 = vmatpush1.bf16.msra.mxu0 0
        %1296 = vmatprep.mubr.bf16.mxu0 0
        %1297 = vmatmul.mubr.bf16.gmra.mrb[0].mxu0 %v1262
        %v1298 = vpop.f32.mrb[0].mxu0
        %v1299 = vadd.f32 0.0, %v1298
        %v1300 = vpop.f32.mrb[0].mxu0
        %v1301 = vadd.f32 0.0, %v1300
        %v1302 = vpop.f32.mrb[0].mxu0
        %v1303 = vpop.f32.mrb[0].mxu0
        %1304 = vdwg.mxu0
        %1305 = vmatprep.subr.bf16.mxu0 0
        %1306 = vmatpush1.bf16.msra.mxu0 %v1257
        %1307 = vmatprep.subr.bf16.mxu0 0
        %1308 = vmatpush1.bf16.msra.mxu0 0
        %1309 = vmatprep.subr.bf16.mxu0 0
        %1310 = vmatpush1.bf16.msra.mxu0 0
        %1311 = vmatprep.subr.bf16.mxu0 0
        %1312 = vmatpush1.bf16.msra.mxu0 0
        %1313 = vmatprep.subr.bf16.mxu0 0
        %1314 = vmatpush1.bf16.msra.mxu0 0
        %1315 = vmatprep.subr.bf16.mxu0 0
        %1316 = vmatpush1.bf16.msra.mxu0 0
        %1317 = vmatprep.subr.bf16.mxu0 0
        %1318 = vmatpush1.bf16.msra.mxu0 0
        %1319 = vmatprep.subr.bf16.mxu0 0
        %1320 = vmatpush1.bf16.msra.mxu0 0
        %1321 = vmatprep.subr.bf16.mxu0 0
        %1322 = vmatpush1.bf16.msra.mxu0 0
        %1323 = vmatprep.subr.bf16.mxu0 0
        %1324 = vmatpush1.bf16.msra.mxu0 0
        %1325 = vmatprep.subr.bf16.mxu0 0
        %1326 = vmatpush1.bf16.msra.mxu0 0
        %1327 = vmatprep.subr.bf16.mxu0 0
        %1328 = vmatpush1.bf16.msra.mxu0 0
        %1329 = vmatprep.subr.bf16.mxu0 0
        %1330 = vmatpush1.bf16.msra.mxu0 0
        %1331 = vmatprep.subr.bf16.mxu0 0
        %1332 = vmatpush1.bf16.msra.mxu0 0
        %1333 = vmatprep.subr.bf16.mxu0 0
        %1334 = vmatpush1.bf16.msra.mxu0 0
        %1335 = vmatprep.subr.bf16.mxu0 0
        %1336 = vmatpush1.bf16.msra.mxu0 0
        %1337 = vmatprep.mubr.bf16.mxu0 0
        %1338 = vmatmul.mubr.bf16.gmra.mrb[0].mxu0 %v1262
        %v1339 = vpop.f32.mrb[0].mxu0
        %v1340 = vadd.f32 0.0, %v1339
        %v1341 = vpop.f32.mrb[0].mxu0
        %v1342 = vpop.f32.mrb[0].mxu0
        %v1343 = vpop.f32.mrb[0].mxu0
        %1344 = vdwg.mxu0
        %v1345 = vadd.f32 %v1241, %v1299
        %v1346 = vadd.f32 %v1242, %v1301
        %v1347 = vadd.f32 %v1243, %v1340
        %s1348 = scalar_lea.vmem %s1, 44
        %v1349 = vld [vmem:[%s1348] sm:$0xf]
        %1350 = vrot.lane.b32.xlu0 %v189, 54
        %v1351 = vpop.permute.xlu0 %1350
        %1352 = vrot.lane.b32.xlu0 %v190, 54
        %v1353 = vpop.permute.xlu0 %1352
        %1354 = vrot.lane.b32.xlu0 %v191, 54
        %v1355 = vpop.permute.xlu0 %1354
        %1356 = vrot.lane.b32.xlu0 %v192, 54
        %v1357 = vpop.permute.xlu0 %1356
        %vm1358 = vcmask 441344
        %v1359 = vsel %vm1358, %v1351, %v1353
        %v1360 = vsel %vm1358, %v1353, %v1355
        %v1361 = vsel %vm1358, %v1355, %v1357
        %v1366 = vsel %vm208, %v1349, 0
        %1368 = vmatprep.subr.bf16.mxu0 %v1360
        %1369 = vmatpush1.bf16.msra.mxu0 %v1359
        %1370 = vmatprep.subr.bf16.mxu0 0
        %1371 = vmatpush1.bf16.msra.mxu0 0
        %1372 = vmatprep.subr.bf16.mxu0 0
        %1373 = vmatpush1.bf16.msra.mxu0 0
        %1374 = vmatprep.subr.bf16.mxu0 0
        %1375 = vmatpush1.bf16.msra.mxu0 0
        %1376 = vmatprep.subr.bf16.mxu0 0
        %1377 = vmatpush1.bf16.msra.mxu0 0
        %1378 = vmatprep.subr.bf16.mxu0 0
        %1379 = vmatpush1.bf16.msra.mxu0 0
        %1380 = vmatprep.subr.bf16.mxu0 0
        %1381 = vmatpush1.bf16.msra.mxu0 0
        %1382 = vmatprep.subr.bf16.mxu0 0
        %1383 = vmatpush1.bf16.msra.mxu0 0
        %1384 = vmatprep.subr.bf16.mxu0 0
        %1385 = vmatpush1.bf16.msra.mxu0 0
        %1386 = vmatprep.subr.bf16.mxu0 0
        %1387 = vmatpush1.bf16.msra.mxu0 0
        %1388 = vmatprep.subr.bf16.mxu0 0
        %1389 = vmatpush1.bf16.msra.mxu0 0
        %1390 = vmatprep.subr.bf16.mxu0 0
        %1391 = vmatpush1.bf16.msra.mxu0 0
        %1392 = vmatprep.subr.bf16.mxu0 0
        %1393 = vmatpush1.bf16.msra.mxu0 0
        %1394 = vmatprep.subr.bf16.mxu0 0
        %1395 = vmatpush1.bf16.msra.mxu0 0
        %1396 = vmatprep.subr.bf16.mxu0 0
        %1397 = vmatpush1.bf16.msra.mxu0 0
        %1398 = vmatprep.subr.bf16.mxu0 0
        %1399 = vmatpush1.bf16.msra.mxu0 0
        %1400 = vmatprep.mubr.bf16.mxu0 0
        %1401 = vmatmul.mubr.bf16.gmra.mrb[0].mxu0 %v1366
        %v1402 = vpop.f32.mrb[0].mxu0
        %v1403 = vadd.f32 0.0, %v1402
        %v1404 = vpop.f32.mrb[0].mxu0
        %v1405 = vadd.f32 0.0, %v1404
        %v1406 = vpop.f32.mrb[0].mxu0
        %v1407 = vpop.f32.mrb[0].mxu0
        %1408 = vdwg.mxu0
        %1409 = vmatprep.subr.bf16.mxu0 0
        %1410 = vmatpush1.bf16.msra.mxu0 %v1361
        %1411 = vmatprep.subr.bf16.mxu0 0
        %1412 = vmatpush1.bf16.msra.mxu0 0
        %1413 = vmatprep.subr.bf16.mxu0 0
        %1414 = vmatpush1.bf16.msra.mxu0 0
        %1415 = vmatprep.subr.bf16.mxu0 0
        %1416 = vmatpush1.bf16.msra.mxu0 0
        %1417 = vmatprep.subr.bf16.mxu0 0
        %1418 = vmatpush1.bf16.msra.mxu0 0
        %1419 = vmatprep.subr.bf16.mxu0 0
        %1420 = vmatpush1.bf16.msra.mxu0 0
        %1421 = vmatprep.subr.bf16.mxu0 0
        %1422 = vmatpush1.bf16.msra.mxu0 0
        %1423 = vmatprep.subr.bf16.mxu0 0
        %1424 = vmatpush1.bf16.msra.mxu0 0
        %1425 = vmatprep.subr.bf16.mxu0 0
        %1426 = vmatpush1.bf16.msra.mxu0 0
        %1427 = vmatprep.subr.bf16.mxu0 0
        %1428 = vmatpush1.bf16.msra.mxu0 0
        %1429 = vmatprep.subr.bf16.mxu0 0
        %1430 = vmatpush1.bf16.msra.mxu0 0
        %1431 = vmatprep.subr.bf16.mxu0 0
        %1432 = vmatpush1.bf16.msra.mxu0 0
        %1433 = vmatprep.subr.bf16.mxu0 0
        %1434 = vmatpush1.bf16.msra.mxu0 0
        %1435 = vmatprep.subr.bf16.mxu0 0
        %1436 = vmatpush1.bf16.msra.mxu0 0
        %1437 = vmatprep.subr.bf16.mxu0 0
        %1438 = vmatpush1.bf16.msra.mxu0 0
        %1439 = vmatprep.subr.bf16.mxu0 0
        %1440 = vmatpush1.bf16.msra.mxu0 0
        %1441 = vmatprep.mubr.bf16.mxu0 0
        %1442 = vmatmul.mubr.bf16.gmra.mrb[0].mxu0 %v1366
        %v1443 = vpop.f32.mrb[0].mxu0
        %v1444 = vadd.f32 0.0, %v1443
        %v1445 = vpop.f32.mrb[0].mxu0
        %v1446 = vpop.f32.mrb[0].mxu0
        %v1447 = vpop.f32.mrb[0].mxu0
        %1448 = vdwg.mxu0
        %v1449 = vadd.f32 %v1345, %v1403
        %v1450 = vadd.f32 %v1346, %v1405
        %v1451 = vadd.f32 %v1347, %v1444
        %s1452 = scalar_lea.vmem %s1, 48
        %v1453 = vld [vmem:[%s1452] sm:$0xf]
        %1454 = vrot.lane.b32.xlu0 %v189, 10
        %v1455 = vpop.permute.xlu0 %1454
        %1456 = vrot.lane.b32.xlu0 %v190, 10
        %v1457 = vpop.permute.xlu0 %1456
        %1458 = vrot.lane.b32.xlu0 %v191, 10
        %v1459 = vpop.permute.xlu0 %1458
        %1460 = vrot.lane.b32.xlu0 %v192, 10
        %v1461 = vpop.permute.xlu0 %1460
        %vm1462 = vcmask 80896
        %v1463 = vsel %vm1462, %v1455, %v1457
        %v1464 = vsel %vm1462, %v1457, %v1459
        %v1465 = vsel %vm1462, %v1459, %v1461
        %v1470 = vsel %vm208, %v1453, 0
        %1472 = vmatprep.subr.bf16.mxu0 %v1464
        %1473 = vmatpush1.bf16.msra.mxu0 %v1463
        %1474 = vmatprep.subr.bf16.mxu0 0
        %1475 = vmatpush1.bf16.msra.mxu0 0
        %1476 = vmatprep.subr.bf16.mxu0 0
        %1477 = vmatpush1.bf16.msra.mxu0 0
        %1478 = vmatprep.subr.bf16.mxu0 0
        %1479 = vmatpush1.bf16.msra.mxu0 0
        %1480 = vmatprep.subr.bf16.mxu0 0
        %1481 = vmatpush1.bf16.msra.mxu0 0
        %1482 = vmatprep.subr.bf16.mxu0 0
        %1483 = vmatpush1.bf16.msra.mxu0 0
        %1484 = vmatprep.subr.bf16.mxu0 0
        %1485 = vmatpush1.bf16.msra.mxu0 0
        %1486 = vmatprep.subr.bf16.mxu0 0
        %1487 = vmatpush1.bf16.msra.mxu0 0
        %1488 = vmatprep.subr.bf16.mxu0 0
        %1489 = vmatpush1.bf16.msra.mxu0 0
        %1490 = vmatprep.subr.bf16.mxu0 0
        %1491 = vmatpush1.bf16.msra.mxu0 0
        %1492 = vmatprep.subr.bf16.mxu0 0
        %1493 = vmatpush1.bf16.msra.mxu0 0
        %1494 = vmatprep.subr.bf16.mxu0 0
        %1495 = vmatpush1.bf16.msra.mxu0 0
        %1496 = vmatprep.subr.bf16.mxu0 0
        %1497 = vmatpush1.bf16.msra.mxu0 0
        %1498 = vmatprep.subr.bf16.mxu0 0
        %1499 = vmatpush1.bf16.msra.mxu0 0
        %1500 = vmatprep.subr.bf16.mxu0 0
        %1501 = vmatpush1.bf16.msra.mxu0 0
        %1502 = vmatprep.subr.bf16.mxu0 0
        %1503 = vmatpush1.bf16.msra.mxu0 0
        %1504 = vmatprep.mubr.bf16.mxu0 0
        %1505 = vmatmul.mubr.bf16.gmra.mrb[0].mxu0 %v1470
        %v1506 = vpop.f32.mrb[0].mxu0
        %v1507 = vadd.f32 0.0, %v1506
        %v1508 = vpop.f32.mrb[0].mxu0
        %v1509 = vadd.f32 0.0, %v1508
        %v1510 = vpop.f32.mrb[0].mxu0
        %v1511 = vpop.f32.mrb[0].mxu0
        %1512 = vdwg.mxu0
        %1513 = vmatprep.subr.bf16.mxu0 0
        %1514 = vmatpush1.bf16.msra.mxu0 %v1465
        %1515 = vmatprep.subr.bf16.mxu0 0
        %1516 = vmatpush1.bf16.msra.mxu0 0
        %1517 = vmatprep.subr.bf16.mxu0 0
        %1518 = vmatpush1.bf16.msra.mxu0 0
        %1519 = vmatprep.subr.bf16.mxu0 0
        %1520 = vmatpush1.bf16.msra.mxu0 0
        %1521 = vmatprep.subr.bf16.mxu0 0
        %1522 = vmatpush1.bf16.msra.mxu0 0
        %1523 = vmatprep.subr.bf16.mxu0 0
        %1524 = vmatpush1.bf16.msra.mxu0 0
        %1525 = vmatprep.subr.bf16.mxu0 0
        %1526 = vmatpush1.bf16.msra.mxu0 0
        %1527 = vmatprep.subr.bf16.mxu0 0
        %1528 = vmatpush1.bf16.msra.mxu0 0
        %1529 = vmatprep.subr.bf16.mxu0 0
        %1530 = vmatpush1.bf16.msra.mxu0 0
        %1531 = vmatprep.subr.bf16.mxu0 0
        %1532 = vmatpush1.bf16.msra.mxu0 0
        %1533 = vmatprep.subr.bf16.mxu0 0
        %1534 = vmatpush1.bf16.msra.mxu0 0
        %1535 = vmatprep.subr.bf16.mxu0 0
        %1536 = vmatpush1.bf16.msra.mxu0 0
        %1537 = vmatprep.subr.bf16.mxu0 0
        %1538 = vmatpush1.bf16.msra.mxu0 0
        %1539 = vmatprep.subr.bf16.mxu0 0
        %1540 = vmatpush1.bf16.msra.mxu0 0
        %1541 = vmatprep.subr.bf16.mxu0 0
        %1542 = vmatpush1.bf16.msra.mxu0 0
        %1543 = vmatprep.subr.bf16.mxu0 0
        %1544 = vmatpush1.bf16.msra.mxu0 0
        %1545 = vmatprep.mubr.bf16.mxu0 0
        %1546 = vmatmul.mubr.bf16.gmra.mrb[0].mxu0 %v1470
        %v1547 = vpop.f32.mrb[0].mxu0
        %v1548 = vadd.f32 0.0, %v1547
        %v1549 = vpop.f32.mrb[0].mxu0
        %v1550 = vpop.f32.mrb[0].mxu0
        %v1551 = vpop.f32.mrb[0].mxu0
        %1552 = vdwg.mxu0
        %v1553 = vadd.f32 %v1449, %v1507
        %v1554 = vadd.f32 %v1450, %v1509
        %v1555 = vadd.f32 %v1451, %v1548
        %s1556 = scalar_lea.vmem %s1, 52
        %v1557 = vld [vmem:[%s1556] sm:$0xf]
        %1558 = vrot.lane.b32.xlu0 %v189, 6
        %v1559 = vpop.permute.xlu0 %1558
        %1560 = vrot.lane.b32.xlu0 %v190, 6
        %v1561 = vpop.permute.xlu0 %1560
        %1562 = vrot.lane.b32.xlu0 %v191, 6
        %v1563 = vpop.permute.xlu0 %1562
        %1564 = vrot.lane.b32.xlu0 %v192, 6
        %v1565 = vpop.permute.xlu0 %1564
        %vm1566 = vcmask 48128
        %v1567 = vsel %vm1566, %v1559, %v1561
        %v1568 = vsel %vm1566, %v1561, %v1563
        %v1569 = vsel %vm1566, %v1563, %v1565
        %v1574 = vsel %vm208, %v1557, 0
        %1576 = vmatprep.subr.bf16.mxu0 %v1568
        %1577 = vmatpush1.bf16.msra.mxu0 %v1567
        %1578 = vmatprep.subr.bf16.mxu0 0
        %1579 = vmatpush1.bf16.msra.mxu0 0
        %1580 = vmatprep.subr.bf16.mxu0 0
        %1581 = vmatpush1.bf16.msra.mxu0 0
        %1582 = vmatprep.subr.bf16.mxu0 0
        %1583 = vmatpush1.bf16.msra.mxu0 0
        %1584 = vmatprep.subr.bf16.mxu0 0
        %1585 = vmatpush1.bf16.msra.mxu0 0
        %1586 = vmatprep.subr.bf16.mxu0 0
        %1587 = vmatpush1.bf16.msra.mxu0 0
        %1588 = vmatprep.subr.bf16.mxu0 0
        %1589 = vmatpush1.bf16.msra.mxu0 0
        %1590 = vmatprep.subr.bf16.mxu0 0
        %1591 = vmatpush1.bf16.msra.mxu0 0
        %1592 = vmatprep.subr.bf16.mxu0 0
        %1593 = vmatpush1.bf16.msra.mxu0 0
        %1594 = vmatprep.subr.bf16.mxu0 0
        %1595 = vmatpush1.bf16.msra.mxu0 0
        %1596 = vmatprep.subr.bf16.mxu0 0
        %1597 = vmatpush1.bf16.msra.mxu0 0
        %1598 = vmatprep.subr.bf16.mxu0 0
        %1599 = vmatpush1.bf16.msra.mxu0 0
        %1600 = vmatprep.subr.bf16.mxu0 0
        %1601 = vmatpush1.bf16.msra.mxu0 0
        %1602 = vmatprep.subr.bf16.mxu0 0
        %1603 = vmatpush1.bf16.msra.mxu0 0
        %1604 = vmatprep.subr.bf16.mxu0 0
        %1605 = vmatpush1.bf16.msra.mxu0 0
        %1606 = vmatprep.subr.bf16.mxu0 0
        %1607 = vmatpush1.bf16.msra.mxu0 0
        %1608 = vmatprep.mubr.bf16.mxu0 0
        %1609 = vmatmul.mubr.bf16.gmra.mrb[0].mxu0 %v1574
        %v1610 = vpop.f32.mrb[0].mxu0
        %v1611 = vadd.f32 0.0, %v1610
        %v1612 = vpop.f32.mrb[0].mxu0
        %v1613 = vadd.f32 0.0, %v1612
        %v1614 = vpop.f32.mrb[0].mxu0
        %v1615 = vpop.f32.mrb[0].mxu0
        %1616 = vdwg.mxu0
        %1617 = vmatprep.subr.bf16.mxu0 0
        %1618 = vmatpush1.bf16.msra.mxu0 %v1569
        %1619 = vmatprep.subr.bf16.mxu0 0
        %1620 = vmatpush1.bf16.msra.mxu0 0
        %1621 = vmatprep.subr.bf16.mxu0 0
        %1622 = vmatpush1.bf16.msra.mxu0 0
        %1623 = vmatprep.subr.bf16.mxu0 0
        %1624 = vmatpush1.bf16.msra.mxu0 0
        %1625 = vmatprep.subr.bf16.mxu0 0
        %1626 = vmatpush1.bf16.msra.mxu0 0
        %1627 = vmatprep.subr.bf16.mxu0 0
        %1628 = vmatpush1.bf16.msra.mxu0 0
        %1629 = vmatprep.subr.bf16.mxu0 0
        %1630 = vmatpush1.bf16.msra.mxu0 0
        %1631 = vmatprep.subr.bf16.mxu0 0
        %1632 = vmatpush1.bf16.msra.mxu0 0
        %1633 = vmatprep.subr.bf16.mxu0 0
        %1634 = vmatpush1.bf16.msra.mxu0 0
        %1635 = vmatprep.subr.bf16.mxu0 0
        %1636 = vmatpush1.bf16.msra.mxu0 0
        %1637 = vmatprep.subr.bf16.mxu0 0
        %1638 = vmatpush1.bf16.msra.mxu0 0
        %1639 = vmatprep.subr.bf16.mxu0 0
        %1640 = vmatpush1.bf16.msra.mxu0 0
        %1641 = vmatprep.subr.bf16.mxu0 0
        %1642 = vmatpush1.bf16.msra.mxu0 0
        %1643 = vmatprep.subr.bf16.mxu0 0
        %1644 = vmatpush1.bf16.msra.mxu0 0
        %1645 = vmatprep.subr.bf16.mxu0 0
        %1646 = vmatpush1.bf16.msra.mxu0 0
        %1647 = vmatprep.subr.bf16.mxu0 0
        %1648 = vmatpush1.bf16.msra.mxu0 0
        %1649 = vmatprep.mubr.bf16.mxu0 0
        %1650 = vmatmul.mubr.bf16.gmra.mrb[0].mxu0 %v1574
        %v1651 = vpop.f32.mrb[0].mxu0
        %v1652 = vadd.f32 0.0, %v1651
        %v1653 = vpop.f32.mrb[0].mxu0
        %v1654 = vpop.f32.mrb[0].mxu0
        %v1655 = vpop.f32.mrb[0].mxu0
        %1656 = vdwg.mxu0
        %v1657 = vadd.f32 %v1553, %v1611
        %v1658 = vadd.f32 %v1554, %v1613
        %v1659 = vadd.f32 %v1555, %v1652
        %s1660 = scalar_lea.vmem %s1, 56
        %v1661 = vld [vmem:[%s1660] sm:$0xf]
        %1662 = vrot.lane.b32.xlu0 %v826, 90
        %v1663 = vpop.permute.xlu0 %1662
        %1664 = vrot.lane.b32.xlu0 %v827, 90
        %v1665 = vpop.permute.xlu0 %1664
        %1666 = vrot.lane.b32.xlu0 %v828, 90
        %v1667 = vpop.permute.xlu0 %1666
        %1668 = vrot.lane.b32.xlu0 %v829, 90
        %v1669 = vpop.permute.xlu0 %1668
        %vm1670 = vcmask 736256
        %v1671 = vsel %vm1670, %v1663, %v1665
        %v1672 = vsel %vm1670, %v1665, %v1667
        %v1673 = vsel %vm1670, %v1667, %v1669
        %v1678 = vsel %vm208, %v1661, 0
        %1680 = vmatprep.subr.bf16.mxu0 %v1672
        %1681 = vmatpush1.bf16.msra.mxu0 %v1671
        %1682 = vmatprep.subr.bf16.mxu0 0
        %1683 = vmatpush1.bf16.msra.mxu0 0
        %1684 = vmatprep.subr.bf16.mxu0 0
        %1685 = vmatpush1.bf16.msra.mxu0 0
        %1686 = vmatprep.subr.bf16.mxu0 0
        %1687 = vmatpush1.bf16.msra.mxu0 0
        %1688 = vmatprep.subr.bf16.mxu0 0
        %1689 = vmatpush1.bf16.msra.mxu0 0
        %1690 = vmatprep.subr.bf16.mxu0 0
        %1691 = vmatpush1.bf16.msra.mxu0 0
        %1692 = vmatprep.subr.bf16.mxu0 0
        %1693 = vmatpush1.bf16.msra.mxu0 0
        %1694 = vmatprep.subr.bf16.mxu0 0
        %1695 = vmatpush1.bf16.msra.mxu0 0
        %1696 = vmatprep.subr.bf16.mxu0 0
        %1697 = vmatpush1.bf16.msra.mxu0 0
        %1698 = vmatprep.subr.bf16.mxu0 0
        %1699 = vmatpush1.bf16.msra.mxu0 0
        %1700 = vmatprep.subr.bf16.mxu0 0
        %1701 = vmatpush1.bf16.msra.mxu0 0
        %1702 = vmatprep.subr.bf16.mxu0 0
        %1703 = vmatpush1.bf16.msra.mxu0 0
        %1704 = vmatprep.subr.bf16.mxu0 0
        %1705 = vmatpush1.bf16.msra.mxu0 0
        %1706 = vmatprep.subr.bf16.mxu0 0
        %1707 = vmatpush1.bf16.msra.mxu0 0
        %1708 = vmatprep.subr.bf16.mxu0 0
        %1709 = vmatpush1.bf16.msra.mxu0 0
        %1710 = vmatprep.subr.bf16.mxu0 0
        %1711 = vmatpush1.bf16.msra.mxu0 0
        %1712 = vmatprep.mubr.bf16.mxu0 0
        %1713 = vmatmul.mubr.bf16.gmra.mrb[0].mxu0 %v1678
        %v1714 = vpop.f32.mrb[0].mxu0
        %v1715 = vadd.f32 0.0, %v1714
        %v1716 = vpop.f32.mrb[0].mxu0
        %v1717 = vadd.f32 0.0, %v1716
        %v1718 = vpop.f32.mrb[0].mxu0
        %v1719 = vpop.f32.mrb[0].mxu0
        %1720 = vdwg.mxu0
        %1721 = vmatprep.subr.bf16.mxu0 0
        %1722 = vmatpush1.bf16.msra.mxu0 %v1673
        %1723 = vmatprep.subr.bf16.mxu0 0
        %1724 = vmatpush1.bf16.msra.mxu0 0
        %1725 = vmatprep.subr.bf16.mxu0 0
        %1726 = vmatpush1.bf16.msra.mxu0 0
        %1727 = vmatprep.subr.bf16.mxu0 0
        %1728 = vmatpush1.bf16.msra.mxu0 0
        %1729 = vmatprep.subr.bf16.mxu0 0
        %1730 = vmatpush1.bf16.msra.mxu0 0
        %1731 = vmatprep.subr.bf16.mxu0 0
        %1732 = vmatpush1.bf16.msra.mxu0 0
        %1733 = vmatprep.subr.bf16.mxu0 0
        %1734 = vmatpush1.bf16.msra.mxu0 0
        %1735 = vmatprep.subr.bf16.mxu0 0
        %1736 = vmatpush1.bf16.msra.mxu0 0
        %1737 = vmatprep.subr.bf16.mxu0 0
        %1738 = vmatpush1.bf16.msra.mxu0 0
        %1739 = vmatprep.subr.bf16.mxu0 0
        %1740 = vmatpush1.bf16.msra.mxu0 0
        %1741 = vmatprep.subr.bf16.mxu0 0
        %1742 = vmatpush1.bf16.msra.mxu0 0
        %1743 = vmatprep.subr.bf16.mxu0 0
        %1744 = vmatpush1.bf16.msra.mxu0 0
        %1745 = vmatprep.subr.bf16.mxu0 0
        %1746 = vmatpush1.bf16.msra.mxu0 0
        %1747 = vmatprep.subr.bf16.mxu0 0
        %1748 = vmatpush1.bf16.msra.mxu0 0
        %1749 = vmatprep.subr.bf16.mxu0 0
        %1750 = vmatpush1.bf16.msra.mxu0 0
        %1751 = vmatprep.subr.bf16.mxu0 0
        %1752 = vmatpush1.bf16.msra.mxu0 0
        %1753 = vmatprep.mubr.bf16.mxu0 0
        %1754 = vmatmul.mubr.bf16.gmra.mrb[0].mxu0 %v1678
        %v1755 = vpop.f32.mrb[0].mxu0
        %v1756 = vadd.f32 0.0, %v1755
        %v1757 = vpop.f32.mrb[0].mxu0
        %v1758 = vpop.f32.mrb[0].mxu0
        %v1759 = vpop.f32.mrb[0].mxu0
        %1760 = vdwg.mxu0
        %v1761 = vadd.f32 %v1657, %v1715
        %v1762 = vadd.f32 %v1658, %v1717
        %v1763 = vadd.f32 %v1659, %v1756
        %s1764 = scalar_lea.vmem %s1, 60
        %v1765 = vld [vmem:[%s1764] sm:$0xf]
        %1766 = vrot.lane.b32.xlu0 %v826, 88
        %v1767 = vpop.permute.xlu0 %1766
        %1768 = vrot.lane.b32.xlu0 %v827, 88
        %v1769 = vpop.permute.xlu0 %1768
        %1770 = vrot.lane.b32.xlu0 %v828, 88
        %v1771 = vpop.permute.xlu0 %1770
        %1772 = vrot.lane.b32.xlu0 %v829, 88
        %v1773 = vpop.permute.xlu0 %1772
        %vm1774 = vcmask 719872
        %v1775 = vsel %vm1774, %v1767, %v1769
        %v1776 = vsel %vm1774, %v1769, %v1771
        %v1777 = vsel %vm1774, %v1771, %v1773
        %v1782 = vsel %vm208, %v1765, 0
        %1784 = vmatprep.subr.bf16.mxu0 %v1776
        %1785 = vmatpush1.bf16.msra.mxu0 %v1775
        %1786 = vmatprep.subr.bf16.mxu0 0
        %1787 = vmatpush1.bf16.msra.mxu0 0
        %1788 = vmatprep.subr.bf16.mxu0 0
        %1789 = vmatpush1.bf16.msra.mxu0 0
        %1790 = vmatprep.subr.bf16.mxu0 0
        %1791 = vmatpush1.bf16.msra.mxu0 0
        %1792 = vmatprep.subr.bf16.mxu0 0
        %1793 = vmatpush1.bf16.msra.mxu0 0
        %1794 = vmatprep.subr.bf16.mxu0 0
        %1795 = vmatpush1.bf16.msra.mxu0 0
        %1796 = vmatprep.subr.bf16.mxu0 0
        %1797 = vmatpush1.bf16.msra.mxu0 0
        %1798 = vmatprep.subr.bf16.mxu0 0
        %1799 = vmatpush1.bf16.msra.mxu0 0
        %1800 = vmatprep.subr.bf16.mxu0 0
        %1801 = vmatpush1.bf16.msra.mxu0 0
        %1802 = vmatprep.subr.bf16.mxu0 0
        %1803 = vmatpush1.bf16.msra.mxu0 0
        %1804 = vmatprep.subr.bf16.mxu0 0
        %1805 = vmatpush1.bf16.msra.mxu0 0
        %1806 = vmatprep.subr.bf16.mxu0 0
        %1807 = vmatpush1.bf16.msra.mxu0 0
        %1808 = vmatprep.subr.bf16.mxu0 0
        %1809 = vmatpush1.bf16.msra.mxu0 0
        %1810 = vmatprep.subr.bf16.mxu0 0
        %1811 = vmatpush1.bf16.msra.mxu0 0
        %1812 = vmatprep.subr.bf16.mxu0 0
        %1813 = vmatpush1.bf16.msra.mxu0 0
        %1814 = vmatprep.subr.bf16.mxu0 0
        %1815 = vmatpush1.bf16.msra.mxu0 0
        %1816 = vmatprep.mubr.bf16.mxu0 0
        %1817 = vmatmul.mubr.bf16.gmra.mrb[0].mxu0 %v1782
        %v1818 = vpop.f32.mrb[0].mxu0
        %v1819 = vadd.f32 0.0, %v1818
        %v1820 = vpop.f32.mrb[0].mxu0
        %v1821 = vadd.f32 0.0, %v1820
        %v1822 = vpop.f32.mrb[0].mxu0
        %v1823 = vpop.f32.mrb[0].mxu0
        %1824 = vdwg.mxu0
        %1825 = vmatprep.subr.bf16.mxu0 0
        %1826 = vmatpush1.bf16.msra.mxu0 %v1777
        %1827 = vmatprep.subr.bf16.mxu0 0
        %1828 = vmatpush1.bf16.msra.mxu0 0
        %1829 = vmatprep.subr.bf16.mxu0 0
        %1830 = vmatpush1.bf16.msra.mxu0 0
        %1831 = vmatprep.subr.bf16.mxu0 0
        %1832 = vmatpush1.bf16.msra.mxu0 0
        %1833 = vmatprep.subr.bf16.mxu0 0
        %1834 = vmatpush1.bf16.msra.mxu0 0
        %1835 = vmatprep.subr.bf16.mxu0 0
        %1836 = vmatpush1.bf16.msra.mxu0 0
        %1837 = vmatprep.subr.bf16.mxu0 0
        %1838 = vmatpush1.bf16.msra.mxu0 0
        %1839 = vmatprep.subr.bf16.mxu0 0
        %1840 = vmatpush1.bf16.msra.mxu0 0
        %1841 = vmatprep.subr.bf16.mxu0 0
        %1842 = vmatpush1.bf16.msra.mxu0 0
        %1843 = vmatprep.subr.bf16.mxu0 0
        %1844 = vmatpush1.bf16.msra.mxu0 0
        %1845 = vmatprep.subr.bf16.mxu0 0
        %1846 = vmatpush1.bf16.msra.mxu0 0
        %1847 = vmatprep.subr.bf16.mxu0 0
        %1848 = vmatpush1.bf16.msra.mxu0 0
        %1849 = vmatprep.subr.bf16.mxu0 0
        %1850 = vmatpush1.bf16.msra.mxu0 0
        %1851 = vmatprep.subr.bf16.mxu0 0
        %1852 = vmatpush1.bf16.msra.mxu0 0
        %1853 = vmatprep.subr.bf16.mxu0 0
        %1854 = vmatpush1.bf16.msra.mxu0 0
        %1855 = vmatprep.subr.bf16.mxu0 0
        %1856 = vmatpush1.bf16.msra.mxu0 0
        %1857 = vmatprep.mubr.bf16.mxu0 0
        %1858 = vmatmul.mubr.bf16.gmra.mrb[0].mxu0 %v1782
        %v1859 = vpop.f32.mrb[0].mxu0
        %v1860 = vadd.f32 0.0, %v1859
        %v1861 = vpop.f32.mrb[0].mxu0
        %v1862 = vpop.f32.mrb[0].mxu0
        %v1863 = vpop.f32.mrb[0].mxu0
        %1864 = vdwg.mxu0
        %v1865 = vadd.f32 %v1761, %v1819
        %v1866 = vadd.f32 %v1762, %v1821
        %v1867 = vadd.f32 %v1763, %v1860
        %s1868 = scalar_lea.vmem %s1, 64
        %v1869 = vld [vmem:[%s1868] sm:$0xf]
        %1870 = vrot.lane.b32.xlu0 %v826, 86
        %v1871 = vpop.permute.xlu0 %1870
        %1872 = vrot.lane.b32.xlu0 %v827, 86
        %v1873 = vpop.permute.xlu0 %1872
        %1874 = vrot.lane.b32.xlu0 %v828, 86
        %v1875 = vpop.permute.xlu0 %1874
        %1876 = vrot.lane.b32.xlu0 %v829, 86
        %v1877 = vpop.permute.xlu0 %1876
        %vm1878 = vcmask 703488
        %v1879 = vsel %vm1878, %v1871, %v1873
        %v1880 = vsel %vm1878, %v1873, %v1875
        %v1881 = vsel %vm1878, %v1875, %v1877
        %v1886 = vsel %vm208, %v1869, 0
        %1888 = vmatprep.subr.bf16.mxu0 %v1880
        %1889 = vmatpush1.bf16.msra.mxu0 %v1879
        %1890 = vmatprep.subr.bf16.mxu0 0
        %1891 = vmatpush1.bf16.msra.mxu0 0
        %1892 = vmatprep.subr.bf16.mxu0 0
        %1893 = vmatpush1.bf16.msra.mxu0 0
        %1894 = vmatprep.subr.bf16.mxu0 0
        %1895 = vmatpush1.bf16.msra.mxu0 0
        %1896 = vmatprep.subr.bf16.mxu0 0
        %1897 = vmatpush1.bf16.msra.mxu0 0
        %1898 = vmatprep.subr.bf16.mxu0 0
        %1899 = vmatpush1.bf16.msra.mxu0 0
        %1900 = vmatprep.subr.bf16.mxu0 0
        %1901 = vmatpush1.bf16.msra.mxu0 0
        %1902 = vmatprep.subr.bf16.mxu0 0
        %1903 = vmatpush1.bf16.msra.mxu0 0
        %1904 = vmatprep.subr.bf16.mxu0 0
        %1905 = vmatpush1.bf16.msra.mxu0 0
        %1906 = vmatprep.subr.bf16.mxu0 0
        %1907 = vmatpush1.bf16.msra.mxu0 0
        %1908 = vmatprep.subr.bf16.mxu0 0
        %1909 = vmatpush1.bf16.msra.mxu0 0
        %1910 = vmatprep.subr.bf16.mxu0 0
        %1911 = vmatpush1.bf16.msra.mxu0 0
        %1912 = vmatprep.subr.bf16.mxu0 0
        %1913 = vmatpush1.bf16.msra.mxu0 0
        %1914 = vmatprep.subr.bf16.mxu0 0
        %1915 = vmatpush1.bf16.msra.mxu0 0
        %1916 = vmatprep.subr.bf16.mxu0 0
        %1917 = vmatpush1.bf16.msra.mxu0 0
        %1918 = vmatprep.subr.bf16.mxu0 0
        %1919 = vmatpush1.bf16.msra.mxu0 0
        %1920 = vmatprep.mubr.bf16.mxu0 0
        %1921 = vmatmul.mubr.bf16.gmra.mrb[0].mxu0 %v1886
        %v1922 = vpop.f32.mrb[0].mxu0
        %v1923 = vadd.f32 0.0, %v1922
        %v1924 = vpop.f32.mrb[0].mxu0
        %v1925 = vadd.f32 0.0, %v1924
        %v1926 = vpop.f32.mrb[0].mxu0
        %v1927 = vpop.f32.mrb[0].mxu0
        %1928 = vdwg.mxu0
        %1929 = vmatprep.subr.bf16.mxu0 0
        %1930 = vmatpush1.bf16.msra.mxu0 %v1881
        %1931 = vmatprep.subr.bf16.mxu0 0
        %1932 = vmatpush1.bf16.msra.mxu0 0
        %1933 = vmatprep.subr.bf16.mxu0 0
        %1934 = vmatpush1.bf16.msra.mxu0 0
        %1935 = vmatprep.subr.bf16.mxu0 0
        %1936 = vmatpush1.bf16.msra.mxu0 0
        %1937 = vmatprep.subr.bf16.mxu0 0
        %1938 = vmatpush1.bf16.msra.mxu0 0
        %1939 = vmatprep.subr.bf16.mxu0 0
        %1940 = vmatpush1.bf16.msra.mxu0 0
        %1941 = vmatprep.subr.bf16.mxu0 0
        %1942 = vmatpush1.bf16.msra.mxu0 0
        %1943 = vmatprep.subr.bf16.mxu0 0
        %1944 = vmatpush1.bf16.msra.mxu0 0
        %1945 = vmatprep.subr.bf16.mxu0 0
        %1946 = vmatpush1.bf16.msra.mxu0 0
        %1947 = vmatprep.subr.bf16.mxu0 0
        %1948 = vmatpush1.bf16.msra.mxu0 0
        %1949 = vmatprep.subr.bf16.mxu0 0
        %1950 = vmatpush1.bf16.msra.mxu0 0
        %1951 = vmatprep.subr.bf16.mxu0 0
        %1952 = vmatpush1.bf16.msra.mxu0 0
        %1953 = vmatprep.subr.bf16.mxu0 0
        %1954 = vmatpush1.bf16.msra.mxu0 0
        %1955 = vmatprep.subr.bf16.mxu0 0
        %1956 = vmatpush1.bf16.msra.mxu0 0
        %1957 = vmatprep.subr.bf16.mxu0 0
        %1958 = vmatpush1.bf16.msra.mxu0 0
        %1959 = vmatprep.subr.bf16.mxu0 0
        %1960 = vmatpush1.bf16.msra.mxu0 0
        %1961 = vmatprep.mubr.bf16.mxu0 0
        %1962 = vmatmul.mubr.bf16.gmra.mrb[0].mxu0 %v1886
        %v1963 = vpop.f32.mrb[0].mxu0
        %v1964 = vadd.f32 0.0, %v1963
        %v1965 = vpop.f32.mrb[0].mxu0
        %v1966 = vpop.f32.mrb[0].mxu0
        %v1967 = vpop.f32.mrb[0].mxu0
        %1968 = vdwg.mxu0
        %v1969 = vadd.f32 %v1865, %v1923
        %v1970 = vadd.f32 %v1866, %v1925
        %v1971 = vadd.f32 %v1867, %v1964
        %s1972 = scalar_lea.vmem %s1, 68
        %v1973 = vld [vmem:[%s1972] sm:$0xf]
        %1974 = vrot.lane.b32.xlu0 %v189, 108
        %v1975 = vpop.permute.xlu0 %1974
        %1976 = vrot.lane.b32.xlu0 %v190, 108
        %v1977 = vpop.permute.xlu0 %1976
        %1978 = vrot.lane.b32.xlu0 %v191, 108
        %v1979 = vpop.permute.xlu0 %1978
        %1980 = vrot.lane.b32.xlu0 %v192, 108
        %v1981 = vpop.permute.xlu0 %1980
        %vm1982 = vcmask 883712
        %v1983 = vsel %vm1982, %v1975, %v1977
        %v1984 = vsel %vm1982, %v1977, %v1979
        %v1985 = vsel %vm1982, %v1979, %v1981
        %v1990 = vsel %vm208, %v1973, 0
        %1992 = vmatprep.subr.bf16.mxu0 %v1984
        %1993 = vmatpush1.bf16.msra.mxu0 %v1983
        %1994 = vmatprep.subr.bf16.mxu0 0
        %1995 = vmatpush1.bf16.msra.mxu0 0
        %1996 = vmatprep.subr.bf16.mxu0 0
        %1997 = vmatpush1.bf16.msra.mxu0 0
        %1998 = vmatprep.subr.bf16.mxu0 0
        %1999 = vmatpush1.bf16.msra.mxu0 0
        %2000 = vmatprep.subr.bf16.mxu0 0
        %2001 = vmatpush1.bf16.msra.mxu0 0
        %2002 = vmatprep.subr.bf16.mxu0 0
        %2003 = vmatpush1.bf16.msra.mxu0 0
        %2004 = vmatprep.subr.bf16.mxu0 0
        %2005 = vmatpush1.bf16.msra.mxu0 0
        %2006 = vmatprep.subr.bf16.mxu0 0
        %2007 = vmatpush1.bf16.msra.mxu0 0
        %2008 = vmatprep.subr.bf16.mxu0 0
        %2009 = vmatpush1.bf16.msra.mxu0 0
        %2010 = vmatprep.subr.bf16.mxu0 0
        %2011 = vmatpush1.bf16.msra.mxu0 0
        %2012 = vmatprep.subr.bf16.mxu0 0
        %2013 = vmatpush1.bf16.msra.mxu0 0
        %2014 = vmatprep.subr.bf16.mxu0 0
        %2015 = vmatpush1.bf16.msra.mxu0 0
        %2016 = vmatprep.subr.bf16.mxu0 0
        %2017 = vmatpush1.bf16.msra.mxu0 0
        %2018 = vmatprep.subr.bf16.mxu0 0
        %2019 = vmatpush1.bf16.msra.mxu0 0
        %2020 = vmatprep.subr.bf16.mxu0 0
        %2021 = vmatpush1.bf16.msra.mxu0 0
        %2022 = vmatprep.subr.bf16.mxu0 0
        %2023 = vmatpush1.bf16.msra.mxu0 0
        %2024 = vmatprep.mubr.bf16.mxu0 0
        %2025 = vmatmul.mubr.bf16.gmra.mrb[0].mxu0 %v1990
        %v2026 = vpop.f32.mrb[0].mxu0
        %v2027 = vadd.f32 0.0, %v2026
        %v2028 = vpop.f32.mrb[0].mxu0
        %v2029 = vadd.f32 0.0, %v2028
        %v2030 = vpop.f32.mrb[0].mxu0
        %v2031 = vpop.f32.mrb[0].mxu0
        %2032 = vdwg.mxu0
        %2033 = vmatprep.subr.bf16.mxu0 0
        %2034 = vmatpush1.bf16.msra.mxu0 %v1985
        %2035 = vmatprep.subr.bf16.mxu0 0
        %2036 = vmatpush1.bf16.msra.mxu0 0
        %2037 = vmatprep.subr.bf16.mxu0 0
        %2038 = vmatpush1.bf16.msra.mxu0 0
        %2039 = vmatprep.subr.bf16.mxu0 0
        %2040 = vmatpush1.bf16.msra.mxu0 0
        %2041 = vmatprep.subr.bf16.mxu0 0
        %2042 = vmatpush1.bf16.msra.mxu0 0
        %2043 = vmatprep.subr.bf16.mxu0 0
        %2044 = vmatpush1.bf16.msra.mxu0 0
        %2045 = vmatprep.subr.bf16.mxu0 0
        %2046 = vmatpush1.bf16.msra.mxu0 0
        %2047 = vmatprep.subr.bf16.mxu0 0
        %2048 = vmatpush1.bf16.msra.mxu0 0
        %2049 = vmatprep.subr.bf16.mxu0 0
        %2050 = vmatpush1.bf16.msra.mxu0 0
        %2051 = vmatprep.subr.bf16.mxu0 0
        %2052 = vmatpush1.bf16.msra.mxu0 0
        %2053 = vmatprep.subr.bf16.mxu0 0
        %2054 = vmatpush1.bf16.msra.mxu0 0
        %2055 = vmatprep.subr.bf16.mxu0 0
        %2056 = vmatpush1.bf16.msra.mxu0 0
        %2057 = vmatprep.subr.bf16.mxu0 0
        %2058 = vmatpush1.bf16.msra.mxu0 0
        %2059 = vmatprep.subr.bf16.mxu0 0
        %2060 = vmatpush1.bf16.msra.mxu0 0
        %2061 = vmatprep.subr.bf16.mxu0 0
        %2062 = vmatpush1.bf16.msra.mxu0 0
        %2063 = vmatprep.subr.bf16.mxu0 0
        %2064 = vmatpush1.bf16.msra.mxu0 0
        %2065 = vmatprep.mubr.bf16.mxu0 0
        %2066 = vmatmul.mubr.bf16.gmra.mrb[0].mxu0 %v1990
        %v2067 = vpop.f32.mrb[0].mxu0
        %v2068 = vadd.f32 0.0, %v2067
        %v2069 = vpop.f32.mrb[0].mxu0
        %v2070 = vpop.f32.mrb[0].mxu0
        %v2071 = vpop.f32.mrb[0].mxu0
        %2072 = vdwg.mxu0
        %v2073 = vadd.f32 %v1969, %v2027
        %v2074 = vadd.f32 %v1970, %v2029
        %v2075 = vadd.f32 %v1971, %v2068
        %s2076 = scalar_lea.vmem %s1, 72
        %v2077 = vld [vmem:[%s2076] sm:$0xf]
        %2078 = vrot.lane.b32.xlu0 %v189, 104
        %v2079 = vpop.permute.xlu0 %2078
        %2080 = vrot.lane.b32.xlu0 %v190, 104
        %v2081 = vpop.permute.xlu0 %2080
        %2082 = vrot.lane.b32.xlu0 %v191, 104
        %v2083 = vpop.permute.xlu0 %2082
        %2084 = vrot.lane.b32.xlu0 %v192, 104
        %v2085 = vpop.permute.xlu0 %2084
        %vm2086 = vcmask 850944
        %v2087 = vsel %vm2086, %v2079, %v2081
        %v2088 = vsel %vm2086, %v2081, %v2083
        %v2089 = vsel %vm2086, %v2083, %v2085
        %v2094 = vsel %vm208, %v2077, 0
        %2096 = vmatprep.subr.bf16.mxu0 %v2088
        %2097 = vmatpush1.bf16.msra.mxu0 %v2087
        %2098 = vmatprep.subr.bf16.mxu0 0
        %2099 = vmatpush1.bf16.msra.mxu0 0
        %2100 = vmatprep.subr.bf16.mxu0 0
        %2101 = vmatpush1.bf16.msra.mxu0 0
        %2102 = vmatprep.subr.bf16.mxu0 0
        %2103 = vmatpush1.bf16.msra.mxu0 0
        %2104 = vmatprep.subr.bf16.mxu0 0
        %2105 = vmatpush1.bf16.msra.mxu0 0
        %2106 = vmatprep.subr.bf16.mxu0 0
        %2107 = vmatpush1.bf16.msra.mxu0 0
        %2108 = vmatprep.subr.bf16.mxu0 0
        %2109 = vmatpush1.bf16.msra.mxu0 0
        %2110 = vmatprep.subr.bf16.mxu0 0
        %2111 = vmatpush1.bf16.msra.mxu0 0
        %2112 = vmatprep.subr.bf16.mxu0 0
        %2113 = vmatpush1.bf16.msra.mxu0 0
        %2114 = vmatprep.subr.bf16.mxu0 0
        %2115 = vmatpush1.bf16.msra.mxu0 0
        %2116 = vmatprep.subr.bf16.mxu0 0
        %2117 = vmatpush1.bf16.msra.mxu0 0
        %2118 = vmatprep.subr.bf16.mxu0 0
        %2119 = vmatpush1.bf16.msra.mxu0 0
        %2120 = vmatprep.subr.bf16.mxu0 0
        %2121 = vmatpush1.bf16.msra.mxu0 0
        %2122 = vmatprep.subr.bf16.mxu0 0
        %2123 = vmatpush1.bf16.msra.mxu0 0
        %2124 = vmatprep.subr.bf16.mxu0 0
        %2125 = vmatpush1.bf16.msra.mxu0 0
        %2126 = vmatprep.subr.bf16.mxu0 0
        %2127 = vmatpush1.bf16.msra.mxu0 0
        %2128 = vmatprep.mubr.bf16.mxu0 0
        %2129 = vmatmul.mubr.bf16.gmra.mrb[0].mxu0 %v2094
        %v2130 = vpop.f32.mrb[0].mxu0
        %v2131 = vadd.f32 0.0, %v2130
        %v2132 = vpop.f32.mrb[0].mxu0
        %v2133 = vadd.f32 0.0, %v2132
        %v2134 = vpop.f32.mrb[0].mxu0
        %v2135 = vpop.f32.mrb[0].mxu0
        %2136 = vdwg.mxu0
        %2137 = vmatprep.subr.bf16.mxu0 0
        %2138 = vmatpush1.bf16.msra.mxu0 %v2089
        %2139 = vmatprep.subr.bf16.mxu0 0
        %2140 = vmatpush1.bf16.msra.mxu0 0
        %2141 = vmatprep.subr.bf16.mxu0 0
        %2142 = vmatpush1.bf16.msra.mxu0 0
        %2143 = vmatprep.subr.bf16.mxu0 0
        %2144 = vmatpush1.bf16.msra.mxu0 0
        %2145 = vmatprep.subr.bf16.mxu0 0
        %2146 = vmatpush1.bf16.msra.mxu0 0
        %2147 = vmatprep.subr.bf16.mxu0 0
        %2148 = vmatpush1.bf16.msra.mxu0 0
        %2149 = vmatprep.subr.bf16.mxu0 0
        %2150 = vmatpush1.bf16.msra.mxu0 0
        %2151 = vmatprep.subr.bf16.mxu0 0
        %2152 = vmatpush1.bf16.msra.mxu0 0
        %2153 = vmatprep.subr.bf16.mxu0 0
        %2154 = vmatpush1.bf16.msra.mxu0 0
        %2155 = vmatprep.subr.bf16.mxu0 0
        %2156 = vmatpush1.bf16.msra.mxu0 0
        %2157 = vmatprep.subr.bf16.mxu0 0
        %2158 = vmatpush1.bf16.msra.mxu0 0
        %2159 = vmatprep.subr.bf16.mxu0 0
        %2160 = vmatpush1.bf16.msra.mxu0 0
        %2161 = vmatprep.subr.bf16.mxu0 0
        %2162 = vmatpush1.bf16.msra.mxu0 0
        %2163 = vmatprep.subr.bf16.mxu0 0
        %2164 = vmatpush1.bf16.msra.mxu0 0
        %2165 = vmatprep.subr.bf16.mxu0 0
        %2166 = vmatpush1.bf16.msra.mxu0 0
        %2167 = vmatprep.subr.bf16.mxu0 0
        %2168 = vmatpush1.bf16.msra.mxu0 0
        %2169 = vmatprep.mubr.bf16.mxu0 0
        %2170 = vmatmul.mubr.bf16.gmra.mrb[0].mxu0 %v2094
        %v2171 = vpop.f32.mrb[0].mxu0
        %v2172 = vadd.f32 0.0, %v2171
        %v2173 = vpop.f32.mrb[0].mxu0
        %v2174 = vpop.f32.mrb[0].mxu0
        %v2175 = vpop.f32.mrb[0].mxu0
        %2176 = vdwg.mxu0
        %v2177 = vadd.f32 %v2073, %v2131
        %v2178 = vadd.f32 %v2074, %v2133
        %v2179 = vadd.f32 %v2075, %v2172
        %s2180 = scalar_lea.vmem %s1, 76
        %v2181 = vld [vmem:[%s2180] sm:$0xf]
        %2182 = vrot.lane.b32.xlu0 %v189, 100
        %v2183 = vpop.permute.xlu0 %2182
        %2184 = vrot.lane.b32.xlu0 %v190, 100
        %v2185 = vpop.permute.xlu0 %2184
        %2186 = vrot.lane.b32.xlu0 %v191, 100
        %v2187 = vpop.permute.xlu0 %2186
        %2188 = vrot.lane.b32.xlu0 %v192, 100
        %v2189 = vpop.permute.xlu0 %2188
        %vm2190 = vcmask 818176
        %v2191 = vsel %vm2190, %v2183, %v2185
        %v2192 = vsel %vm2190, %v2185, %v2187
        %v2193 = vsel %vm2190, %v2187, %v2189
        %v2198 = vsel %vm208, %v2181, 0
        %2200 = vmatprep.subr.bf16.mxu0 %v2192
        %2201 = vmatpush1.bf16.msra.mxu0 %v2191
        %2202 = vmatprep.subr.bf16.mxu0 0
        %2203 = vmatpush1.bf16.msra.mxu0 0
        %2204 = vmatprep.subr.bf16.mxu0 0
        %2205 = vmatpush1.bf16.msra.mxu0 0
        %2206 = vmatprep.subr.bf16.mxu0 0
        %2207 = vmatpush1.bf16.msra.mxu0 0
        %2208 = vmatprep.subr.bf16.mxu0 0
        %2209 = vmatpush1.bf16.msra.mxu0 0
        %2210 = vmatprep.subr.bf16.mxu0 0
        %2211 = vmatpush1.bf16.msra.mxu0 0
        %2212 = vmatprep.subr.bf16.mxu0 0
        %2213 = vmatpush1.bf16.msra.mxu0 0
        %2214 = vmatprep.subr.bf16.mxu0 0
        %2215 = vmatpush1.bf16.msra.mxu0 0
        %2216 = vmatprep.subr.bf16.mxu0 0
        %2217 = vmatpush1.bf16.msra.mxu0 0
        %2218 = vmatprep.subr.bf16.mxu0 0
        %2219 = vmatpush1.bf16.msra.mxu0 0
        %2220 = vmatprep.subr.bf16.mxu0 0
        %2221 = vmatpush1.bf16.msra.mxu0 0
        %2222 = vmatprep.subr.bf16.mxu0 0
        %2223 = vmatpush1.bf16.msra.mxu0 0
        %2224 = vmatprep.subr.bf16.mxu0 0
        %2225 = vmatpush1.bf16.msra.mxu0 0
        %2226 = vmatprep.subr.bf16.mxu0 0
        %2227 = vmatpush1.bf16.msra.mxu0 0
        %2228 = vmatprep.subr.bf16.mxu0 0
        %2229 = vmatpush1.bf16.msra.mxu0 0
        %2230 = vmatprep.subr.bf16.mxu0 0
        %2231 = vmatpush1.bf16.msra.mxu0 0
        %2232 = vmatprep.mubr.bf16.mxu0 0
        %2233 = vmatmul.mubr.bf16.gmra.mrb[0].mxu0 %v2198
        %v2234 = vpop.f32.mrb[0].mxu0
        %v2235 = vadd.f32 0.0, %v2234
        %v2236 = vpop.f32.mrb[0].mxu0
        %v2237 = vadd.f32 0.0, %v2236
        %v2238 = vpop.f32.mrb[0].mxu0
        %v2239 = vpop.f32.mrb[0].mxu0
        %2240 = vdwg.mxu0
        %2241 = vmatprep.subr.bf16.mxu0 0
        %2242 = vmatpush1.bf16.msra.mxu0 %v2193
        %2243 = vmatprep.subr.bf16.mxu0 0
        %2244 = vmatpush1.bf16.msra.mxu0 0
        %2245 = vmatprep.subr.bf16.mxu0 0
        %2246 = vmatpush1.bf16.msra.mxu0 0
        %2247 = vmatprep.subr.bf16.mxu0 0
        %2248 = vmatpush1.bf16.msra.mxu0 0
        %2249 = vmatprep.subr.bf16.mxu0 0
        %2250 = vmatpush1.bf16.msra.mxu0 0
        %2251 = vmatprep.subr.bf16.mxu0 0
        %2252 = vmatpush1.bf16.msra.mxu0 0
        %2253 = vmatprep.subr.bf16.mxu0 0
        %2254 = vmatpush1.bf16.msra.mxu0 0
        %2255 = vmatprep.subr.bf16.mxu0 0
        %2256 = vmatpush1.bf16.msra.mxu0 0
        %2257 = vmatprep.subr.bf16.mxu0 0
        %2258 = vmatpush1.bf16.msra.mxu0 0
        %2259 = vmatprep.subr.bf16.mxu0 0
        %2260 = vmatpush1.bf16.msra.mxu0 0
        %2261 = vmatprep.subr.bf16.mxu0 0
        %2262 = vmatpush1.bf16.msra.mxu0 0
        %2263 = vmatprep.subr.bf16.mxu0 0
        %2264 = vmatpush1.bf16.msra.mxu0 0
        %2265 = vmatprep.subr.bf16.mxu0 0
        %2266 = vmatpush1.bf16.msra.mxu0 0
        %2267 = vmatprep.subr.bf16.mxu0 0
        %2268 = vmatpush1.bf16.msra.mxu0 0
        %2269 = vmatprep.subr.bf16.mxu0 0
        %2270 = vmatpush1.bf16.msra.mxu0 0
        %2271 = vmatprep.subr.bf16.mxu0 0
        %2272 = vmatpush1.bf16.msra.mxu0 0
        %2273 = vmatprep.mubr.bf16.mxu0 0
        %2274 = vmatmul.mubr.bf16.gmra.mrb[0].mxu0 %v2198
        %v2275 = vpop.f32.mrb[0].mxu0
        %v2276 = vadd.f32 0.0, %v2275
        %v2277 = vpop.f32.mrb[0].mxu0
        %v2278 = vpop.f32.mrb[0].mxu0
        %v2279 = vpop.f32.mrb[0].mxu0
        %2280 = vdwg.mxu0
        %v2281 = vadd.f32 %v2177, %v2235
        %v2282 = vadd.f32 %v2178, %v2237
        %v2283 = vadd.f32 %v2179, %v2276
        %s2284 = scalar_lea.vmem %s1, 80
        %v2285 = vld [vmem:[%s2284] sm:$0xf]
        %2286 = vrot.lane.b32.xlu0 %v189, 12
        %v2287 = vpop.permute.xlu0 %2286
        %2288 = vrot.lane.b32.xlu0 %v190, 12
        %v2289 = vpop.permute.xlu0 %2288
        %2290 = vrot.lane.b32.xlu0 %v191, 12
        %v2291 = vpop.permute.xlu0 %2290
        %2292 = vrot.lane.b32.xlu0 %v192, 12
        %v2293 = vpop.permute.xlu0 %2292
        %vm2294 = vcmask 97280
        %v2295 = vsel %vm2294, %v2287, %v2289
        %v2296 = vsel %vm2294, %v2289, %v2291
        %v2297 = vsel %vm2294, %v2291, %v2293
        %v2302 = vsel %vm208, %v2285, 0
        %2304 = vmatprep.subr.bf16.mxu0 %v2296
        %2305 = vmatpush1.bf16.msra.mxu0 %v2295
        %2306 = vmatprep.subr.bf16.mxu0 0
        %2307 = vmatpush1.bf16.msra.mxu0 0
        %2308 = vmatprep.subr.bf16.mxu0 0
        %2309 = vmatpush1.bf16.msra.mxu0 0
        %2310 = vmatprep.subr.bf16.mxu0 0
        %2311 = vmatpush1.bf16.msra.mxu0 0
        %2312 = vmatprep.subr.bf16.mxu0 0
        %2313 = vmatpush1.bf16.msra.mxu0 0
        %2314 = vmatprep.subr.bf16.mxu0 0
        %2315 = vmatpush1.bf16.msra.mxu0 0
        %2316 = vmatprep.subr.bf16.mxu0 0
        %2317 = vmatpush1.bf16.msra.mxu0 0
        %2318 = vmatprep.subr.bf16.mxu0 0
        %2319 = vmatpush1.bf16.msra.mxu0 0
        %2320 = vmatprep.subr.bf16.mxu0 0
        %2321 = vmatpush1.bf16.msra.mxu0 0
        %2322 = vmatprep.subr.bf16.mxu0 0
        %2323 = vmatpush1.bf16.msra.mxu0 0
        %2324 = vmatprep.subr.bf16.mxu0 0
        %2325 = vmatpush1.bf16.msra.mxu0 0
        %2326 = vmatprep.subr.bf16.mxu0 0
        %2327 = vmatpush1.bf16.msra.mxu0 0
        %2328 = vmatprep.subr.bf16.mxu0 0
        %2329 = vmatpush1.bf16.msra.mxu0 0
        %2330 = vmatprep.subr.bf16.mxu0 0
        %2331 = vmatpush1.bf16.msra.mxu0 0
        %2332 = vmatprep.subr.bf16.mxu0 0
        %2333 = vmatpush1.bf16.msra.mxu0 0
        %2334 = vmatprep.subr.bf16.mxu0 0
        %2335 = vmatpush1.bf16.msra.mxu0 0
        %2336 = vmatprep.mubr.bf16.mxu0 0
        %2337 = vmatmul.mubr.bf16.gmra.mrb[0].mxu0 %v2302
        %v2338 = vpop.f32.mrb[0].mxu0
        %v2339 = vadd.f32 0.0, %v2338
        %v2340 = vpop.f32.mrb[0].mxu0
        %v2341 = vadd.f32 0.0, %v2340
        %v2342 = vpop.f32.mrb[0].mxu0
        %v2343 = vpop.f32.mrb[0].mxu0
        %2344 = vdwg.mxu0
        %2345 = vmatprep.subr.bf16.mxu0 0
        %2346 = vmatpush1.bf16.msra.mxu0 %v2297
        %2347 = vmatprep.subr.bf16.mxu0 0
        %2348 = vmatpush1.bf16.msra.mxu0 0
        %2349 = vmatprep.subr.bf16.mxu0 0
        %2350 = vmatpush1.bf16.msra.mxu0 0
        %2351 = vmatprep.subr.bf16.mxu0 0
        %2352 = vmatpush1.bf16.msra.mxu0 0
        %2353 = vmatprep.subr.bf16.mxu0 0
        %2354 = vmatpush1.bf16.msra.mxu0 0
        %2355 = vmatprep.subr.bf16.mxu0 0
        %2356 = vmatpush1.bf16.msra.mxu0 0
        %2357 = vmatprep.subr.bf16.mxu0 0
        %2358 = vmatpush1.bf16.msra.mxu0 0
        %2359 = vmatprep.subr.bf16.mxu0 0
        %2360 = vmatpush1.bf16.msra.mxu0 0
        %2361 = vmatprep.subr.bf16.mxu0 0
        %2362 = vmatpush1.bf16.msra.mxu0 0
        %2363 = vmatprep.subr.bf16.mxu0 0
        %2364 = vmatpush1.bf16.msra.mxu0 0
        %2365 = vmatprep.subr.bf16.mxu0 0
        %2366 = vmatpush1.bf16.msra.mxu0 0
        %2367 = vmatprep.subr.bf16.mxu0 0
        %2368 = vmatpush1.bf16.msra.mxu0 0
        %2369 = vmatprep.subr.bf16.mxu0 0
        %2370 = vmatpush1.bf16.msra.mxu0 0
        %2371 = vmatprep.subr.bf16.mxu0 0
        %2372 = vmatpush1.bf16.msra.mxu0 0
        %2373 = vmatprep.subr.bf16.mxu0 0
        %2374 = vmatpush1.bf16.msra.mxu0 0
        %2375 = vmatprep.subr.bf16.mxu0 0
        %2376 = vmatpush1.bf16.msra.mxu0 0
        %2377 = vmatprep.mubr.bf16.mxu0 0
        %2378 = vmatmul.mubr.bf16.gmra.mrb[0].mxu0 %v2302
        %v2379 = vpop.f32.mrb[0].mxu0
        %v2380 = vadd.f32 0.0, %v2379
        %v2381 = vpop.f32.mrb[0].mxu0
        %v2382 = vpop.f32.mrb[0].mxu0
        %v2383 = vpop.f32.mrb[0].mxu0
        %2384 = vdwg.mxu0
        %v2385 = vadd.f32 %v2281, %v2339
        %v2386 = vadd.f32 %v2282, %v2341
        %v2387 = vadd.f32 %v2283, %v2380
        %s2388 = scalar_lea.vmem %s1, 84
        %v2389 = vld [vmem:[%s2388] sm:$0xf]
        %2390 = vrot.lane.b32.xlu0 %v189, 4
        %v2391 = vpop.permute.xlu0 %2390
        %2392 = vrot.lane.b32.xlu0 %v190, 4
        %v2393 = vpop.permute.xlu0 %2392
        %2394 = vrot.lane.b32.xlu0 %v191, 4
        %v2395 = vpop.permute.xlu0 %2394
        %2396 = vrot.lane.b32.xlu0 %v192, 4
        %v2397 = vpop.permute.xlu0 %2396
        %vm2398 = vcmask 31744
        %v2399 = vsel %vm2398, %v2391, %v2393
        %v2400 = vsel %vm2398, %v2393, %v2395
        %v2401 = vsel %vm2398, %v2395, %v2397
        %v2406 = vsel %vm208, %v2389, 0
        %2408 = vmatprep.subr.bf16.mxu0 %v2400
        %2409 = vmatpush1.bf16.msra.mxu0 %v2399
        %2410 = vmatprep.subr.bf16.mxu0 0
        %2411 = vmatpush1.bf16.msra.mxu0 0
        %2412 = vmatprep.subr.bf16.mxu0 0
        %2413 = vmatpush1.bf16.msra.mxu0 0
        %2414 = vmatprep.subr.bf16.mxu0 0
        %2415 = vmatpush1.bf16.msra.mxu0 0
        %2416 = vmatprep.subr.bf16.mxu0 0
        %2417 = vmatpush1.bf16.msra.mxu0 0
        %2418 = vmatprep.subr.bf16.mxu0 0
        %2419 = vmatpush1.bf16.msra.mxu0 0
        %2420 = vmatprep.subr.bf16.mxu0 0
        %2421 = vmatpush1.bf16.msra.mxu0 0
        %2422 = vmatprep.subr.bf16.mxu0 0
        %2423 = vmatpush1.bf16.msra.mxu0 0
        %2424 = vmatprep.subr.bf16.mxu0 0
        %2425 = vmatpush1.bf16.msra.mxu0 0
        %2426 = vmatprep.subr.bf16.mxu0 0
        %2427 = vmatpush1.bf16.msra.mxu0 0
        %2428 = vmatprep.subr.bf16.mxu0 0
        %2429 = vmatpush1.bf16.msra.mxu0 0
        %2430 = vmatprep.subr.bf16.mxu0 0
        %2431 = vmatpush1.bf16.msra.mxu0 0
        %2432 = vmatprep.subr.bf16.mxu0 0
        %2433 = vmatpush1.bf16.msra.mxu0 0
        %2434 = vmatprep.subr.bf16.mxu0 0
        %2435 = vmatpush1.bf16.msra.mxu0 0
        %2436 = vmatprep.subr.bf16.mxu0 0
        %2437 = vmatpush1.bf16.msra.mxu0 0
        %2438 = vmatprep.subr.bf16.mxu0 0
        %2439 = vmatpush1.bf16.msra.mxu0 0
        %2440 = vmatprep.mubr.bf16.mxu0 0
        %2441 = vmatmul.mubr.bf16.gmra.mrb[0].mxu0 %v2406
        %v2442 = vpop.f32.mrb[0].mxu0
        %v2443 = vadd.f32 0.0, %v2442
        %v2444 = vpop.f32.mrb[0].mxu0
        %v2445 = vadd.f32 0.0, %v2444
        %v2446 = vpop.f32.mrb[0].mxu0
        %v2447 = vpop.f32.mrb[0].mxu0
        %2448 = vdwg.mxu0
        %2449 = vmatprep.subr.bf16.mxu0 0
        %2450 = vmatpush1.bf16.msra.mxu0 %v2401
        %2451 = vmatprep.subr.bf16.mxu0 0
        %2452 = vmatpush1.bf16.msra.mxu0 0
        %2453 = vmatprep.subr.bf16.mxu0 0
        %2454 = vmatpush1.bf16.msra.mxu0 0
        %2455 = vmatprep.subr.bf16.mxu0 0
        %2456 = vmatpush1.bf16.msra.mxu0 0
        %2457 = vmatprep.subr.bf16.mxu0 0
        %2458 = vmatpush1.bf16.msra.mxu0 0
        %2459 = vmatprep.subr.bf16.mxu0 0
        %2460 = vmatpush1.bf16.msra.mxu0 0
        %2461 = vmatprep.subr.bf16.mxu0 0
        %2462 = vmatpush1.bf16.msra.mxu0 0
        %2463 = vmatprep.subr.bf16.mxu0 0
        %2464 = vmatpush1.bf16.msra.mxu0 0
        %2465 = vmatprep.subr.bf16.mxu0 0
        %2466 = vmatpush1.bf16.msra.mxu0 0
        %2467 = vmatprep.subr.bf16.mxu0 0
        %2468 = vmatpush1.bf16.msra.mxu0 0
        %2469 = vmatprep.subr.bf16.mxu0 0
        %2470 = vmatpush1.bf16.msra.mxu0 0
        %2471 = vmatprep.subr.bf16.mxu0 0
        %2472 = vmatpush1.bf16.msra.mxu0 0
        %2473 = vmatprep.subr.bf16.mxu0 0
        %2474 = vmatpush1.bf16.msra.mxu0 0
        %2475 = vmatprep.subr.bf16.mxu0 0
        %2476 = vmatpush1.bf16.msra.mxu0 0
        %2477 = vmatprep.subr.bf16.mxu0 0
        %2478 = vmatpush1.bf16.msra.mxu0 0
        %2479 = vmatprep.subr.bf16.mxu0 0
        %2480 = vmatpush1.bf16.msra.mxu0 0
        %2481 = vmatprep.mubr.bf16.mxu0 0
        %2482 = vmatmul.mubr.bf16.gmra.mrb[0].mxu0 %v2406
        %v2483 = vpop.f32.mrb[0].mxu0
        %v2484 = vadd.f32 0.0, %v2483
        %v2485 = vpop.f32.mrb[0].mxu0
        %v2486 = vpop.f32.mrb[0].mxu0
        %v2487 = vpop.f32.mrb[0].mxu0
        %2488 = vdwg.mxu0
        %v2489 = vadd.f32 %v2385, %v2443
        %v2490 = vadd.f32 %v2386, %v2445
        %v2491 = vadd.f32 %v2387, %v2484
        %s2492 = scalar_lea.vmem %s1, 88
        %v2493 = vld [vmem:[%s2492] sm:$0xf]
        %2494 = vrot.lane.b32.xlu0 %v826, 44
        %v2495 = vpop.permute.xlu0 %2494
        %2496 = vrot.lane.b32.xlu0 %v827, 44
        %v2497 = vpop.permute.xlu0 %2496
        %2498 = vrot.lane.b32.xlu0 %v828, 44
        %v2499 = vpop.permute.xlu0 %2498
        %2500 = vrot.lane.b32.xlu0 %v829, 44
        %v2501 = vpop.permute.xlu0 %2500
        %vm2502 = vcmask 359424
        %v2503 = vsel %vm2502, %v2495, %v2497
        %v2504 = vsel %vm2502, %v2497, %v2499
        %v2505 = vsel %vm2502, %v2499, %v2501
        %v2510 = vsel %vm208, %v2493, 0
        %2512 = vmatprep.subr.bf16.mxu0 %v2504
        %2513 = vmatpush1.bf16.msra.mxu0 %v2503
        %2514 = vmatprep.subr.bf16.mxu0 0
        %2515 = vmatpush1.bf16.msra.mxu0 0
        %2516 = vmatprep.subr.bf16.mxu0 0
        %2517 = vmatpush1.bf16.msra.mxu0 0
        %2518 = vmatprep.subr.bf16.mxu0 0
        %2519 = vmatpush1.bf16.msra.mxu0 0
        %2520 = vmatprep.subr.bf16.mxu0 0
        %2521 = vmatpush1.bf16.msra.mxu0 0
        %2522 = vmatprep.subr.bf16.mxu0 0
        %2523 = vmatpush1.bf16.msra.mxu0 0
        %2524 = vmatprep.subr.bf16.mxu0 0
        %2525 = vmatpush1.bf16.msra.mxu0 0
        %2526 = vmatprep.subr.bf16.mxu0 0
        %2527 = vmatpush1.bf16.msra.mxu0 0
        %2528 = vmatprep.subr.bf16.mxu0 0
        %2529 = vmatpush1.bf16.msra.mxu0 0
        %2530 = vmatprep.subr.bf16.mxu0 0
        %2531 = vmatpush1.bf16.msra.mxu0 0
        %2532 = vmatprep.subr.bf16.mxu0 0
        %2533 = vmatpush1.bf16.msra.mxu0 0
        %2534 = vmatprep.subr.bf16.mxu0 0
        %2535 = vmatpush1.bf16.msra.mxu0 0
        %2536 = vmatprep.subr.bf16.mxu0 0
        %2537 = vmatpush1.bf16.msra.mxu0 0
        %2538 = vmatprep.subr.bf16.mxu0 0
        %2539 = vmatpush1.bf16.msra.mxu0 0
        %2540 = vmatprep.subr.bf16.mxu0 0
        %2541 = vmatpush1.bf16.msra.mxu0 0
        %2542 = vmatprep.subr.bf16.mxu0 0
        %2543 = vmatpush1.bf16.msra.mxu0 0
        %2544 = vmatprep.mubr.bf16.mxu0 0
        %2545 = vmatmul.mubr.bf16.gmra.mrb[0].mxu0 %v2510
        %v2546 = vpop.f32.mrb[0].mxu0
        %v2547 = vadd.f32 0.0, %v2546
        %v2548 = vpop.f32.mrb[0].mxu0
        %v2549 = vadd.f32 0.0, %v2548
        %v2550 = vpop.f32.mrb[0].mxu0
        %v2551 = vpop.f32.mrb[0].mxu0
        %2552 = vdwg.mxu0
        %2553 = vmatprep.subr.bf16.mxu0 0
        %2554 = vmatpush1.bf16.msra.mxu0 %v2505
        %2555 = vmatprep.subr.bf16.mxu0 0
        %2556 = vmatpush1.bf16.msra.mxu0 0
        %2557 = vmatprep.subr.bf16.mxu0 0
        %2558 = vmatpush1.bf16.msra.mxu0 0
        %2559 = vmatprep.subr.bf16.mxu0 0
        %2560 = vmatpush1.bf16.msra.mxu0 0
        %2561 = vmatprep.subr.bf16.mxu0 0
        %2562 = vmatpush1.bf16.msra.mxu0 0
        %2563 = vmatprep.subr.bf16.mxu0 0
        %2564 = vmatpush1.bf16.msra.mxu0 0
        %2565 = vmatprep.subr.bf16.mxu0 0
        %2566 = vmatpush1.bf16.msra.mxu0 0
        %2567 = vmatprep.subr.bf16.mxu0 0
        %2568 = vmatpush1.bf16.msra.mxu0 0
        %2569 = vmatprep.subr.bf16.mxu0 0
        %2570 = vmatpush1.bf16.msra.mxu0 0
        %2571 = vmatprep.subr.bf16.mxu0 0
        %2572 = vmatpush1.bf16.msra.mxu0 0
        %2573 = vmatprep.subr.bf16.mxu0 0
        %2574 = vmatpush1.bf16.msra.mxu0 0
        %2575 = vmatprep.subr.bf16.mxu0 0
        %2576 = vmatpush1.bf16.msra.mxu0 0
        %2577 = vmatprep.subr.bf16.mxu0 0
        %2578 = vmatpush1.bf16.msra.mxu0 0
        %2579 = vmatprep.subr.bf16.mxu0 0
        %2580 = vmatpush1.bf16.msra.mxu0 0
        %2581 = vmatprep.subr.bf16.mxu0 0
        %2582 = vmatpush1.bf16.msra.mxu0 0
        %2583 = vmatprep.subr.bf16.mxu0 0
        %2584 = vmatpush1.bf16.msra.mxu0 0
        %2585 = vmatprep.mubr.bf16.mxu0 0
        %2586 = vmatmul.mubr.bf16.gmra.mrb[0].mxu0 %v2510
        %v2587 = vpop.f32.mrb[0].mxu0
        %v2588 = vadd.f32 0.0, %v2587
        %v2589 = vpop.f32.mrb[0].mxu0
        %v2590 = vpop.f32.mrb[0].mxu0
        %v2591 = vpop.f32.mrb[0].mxu0
        %2592 = vdwg.mxu0
        %v2593 = vadd.f32 %v2489, %v2547
        %v2594 = vadd.f32 %v2490, %v2549
        %v2595 = vadd.f32 %v2491, %v2588
        %s2596 = scalar_lea.vmem %s1, 92
        %v2597 = vld [vmem:[%s2596] sm:$0xf]
        %2598 = vrot.lane.b32.xlu0 %v826, 40
        %v2599 = vpop.permute.xlu0 %2598
        %2600 = vrot.lane.b32.xlu0 %v827, 40
        %v2601 = vpop.permute.xlu0 %2600
        %2602 = vrot.lane.b32.xlu0 %v828, 40
        %v2603 = vpop.permute.xlu0 %2602
        %2604 = vrot.lane.b32.xlu0 %v829, 40
        %v2605 = vpop.permute.xlu0 %2604
        %vm2606 = vcmask 326656
        %v2607 = vsel %vm2606, %v2599, %v2601
        %v2608 = vsel %vm2606, %v2601, %v2603
        %v2609 = vsel %vm2606, %v2603, %v2605
        %v2614 = vsel %vm208, %v2597, 0
        %2616 = vmatprep.subr.bf16.mxu0 %v2608
        %2617 = vmatpush1.bf16.msra.mxu0 %v2607
        %2618 = vmatprep.subr.bf16.mxu0 0
        %2619 = vmatpush1.bf16.msra.mxu0 0
        %2620 = vmatprep.subr.bf16.mxu0 0
        %2621 = vmatpush1.bf16.msra.mxu0 0
        %2622 = vmatprep.subr.bf16.mxu0 0
        %2623 = vmatpush1.bf16.msra.mxu0 0
        %2624 = vmatprep.subr.bf16.mxu0 0
        %2625 = vmatpush1.bf16.msra.mxu0 0
        %2626 = vmatprep.subr.bf16.mxu0 0
        %2627 = vmatpush1.bf16.msra.mxu0 0
        %2628 = vmatprep.subr.bf16.mxu0 0
        %2629 = vmatpush1.bf16.msra.mxu0 0
        %2630 = vmatprep.subr.bf16.mxu0 0
        %2631 = vmatpush1.bf16.msra.mxu0 0
        %2632 = vmatprep.subr.bf16.mxu0 0
        %2633 = vmatpush1.bf16.msra.mxu0 0
        %2634 = vmatprep.subr.bf16.mxu0 0
        %2635 = vmatpush1.bf16.msra.mxu0 0
        %2636 = vmatprep.subr.bf16.mxu0 0
        %2637 = vmatpush1.bf16.msra.mxu0 0
        %2638 = vmatprep.subr.bf16.mxu0 0
        %2639 = vmatpush1.bf16.msra.mxu0 0
        %2640 = vmatprep.subr.bf16.mxu0 0
        %2641 = vmatpush1.bf16.msra.mxu0 0
        %2642 = vmatprep.subr.bf16.mxu0 0
        %2643 = vmatpush1.bf16.msra.mxu0 0
        %2644 = vmatprep.subr.bf16.mxu0 0
        %2645 = vmatpush1.bf16.msra.mxu0 0
        %2646 = vmatprep.subr.bf16.mxu0 0
        %2647 = vmatpush1.bf16.msra.mxu0 0
        %2648 = vmatprep.mubr.bf16.mxu0 0
        %2649 = vmatmul.mubr.bf16.gmra.mrb[0].mxu0 %v2614
        %v2650 = vpop.f32.mrb[0].mxu0
        %v2651 = vadd.f32 0.0, %v2650
        %v2652 = vpop.f32.mrb[0].mxu0
        %v2653 = vadd.f32 0.0, %v2652
        %v2654 = vpop.f32.mrb[0].mxu0
        %v2655 = vpop.f32.mrb[0].mxu0
        %2656 = vdwg.mxu0
        %2657 = vmatprep.subr.bf16.mxu0 0
        %2658 = vmatpush1.bf16.msra.mxu0 %v2609
        %2659 = vmatprep.subr.bf16.mxu0 0
        %2660 = vmatpush1.bf16.msra.mxu0 0
        %2661 = vmatprep.subr.bf16.mxu0 0
        %2662 = vmatpush1.bf16.msra.mxu0 0
        %2663 = vmatprep.subr.bf16.mxu0 0
        %2664 = vmatpush1.bf16.msra.mxu0 0
        %2665 = vmatprep.subr.bf16.mxu0 0
        %2666 = vmatpush1.bf16.msra.mxu0 0
        %2667 = vmatprep.subr.bf16.mxu0 0
        %2668 = vmatpush1.bf16.msra.mxu0 0
        %2669 = vmatprep.subr.bf16.mxu0 0
        %2670 = vmatpush1.bf16.msra.mxu0 0
        %2671 = vmatprep.subr.bf16.mxu0 0
        %2672 = vmatpush1.bf16.msra.mxu0 0
        %2673 = vmatprep.subr.bf16.mxu0 0
        %2674 = vmatpush1.bf16.msra.mxu0 0
        %2675 = vmatprep.subr.bf16.mxu0 0
        %2676 = vmatpush1.bf16.msra.mxu0 0
        %2677 = vmatprep.subr.bf16.mxu0 0
        %2678 = vmatpush1.bf16.msra.mxu0 0
        %2679 = vmatprep.subr.bf16.mxu0 0
        %2680 = vmatpush1.bf16.msra.mxu0 0
        %2681 = vmatprep.subr.bf16.mxu0 0
        %2682 = vmatpush1.bf16.msra.mxu0 0
        %2683 = vmatprep.subr.bf16.mxu0 0
        %2684 = vmatpush1.bf16.msra.mxu0 0
        %2685 = vmatprep.subr.bf16.mxu0 0
        %2686 = vmatpush1.bf16.msra.mxu0 0
        %2687 = vmatprep.subr.bf16.mxu0 0
        %2688 = vmatpush1.bf16.msra.mxu0 0
        %2689 = vmatprep.mubr.bf16.mxu0 0
        %2690 = vmatmul.mubr.bf16.gmra.mrb[0].mxu0 %v2614
        %v2691 = vpop.f32.mrb[0].mxu0
        %v2692 = vadd.f32 0.0, %v2691
        %v2693 = vpop.f32.mrb[0].mxu0
        %v2694 = vpop.f32.mrb[0].mxu0
        %v2695 = vpop.f32.mrb[0].mxu0
        %2696 = vdwg.mxu0
        %v2697 = vadd.f32 %v2593, %v2651
        %v2698 = vadd.f32 %v2594, %v2653
        %v2699 = vadd.f32 %v2595, %v2692
        %s2700 = scalar_lea.vmem %s1, 96
        %v2701 = vld [vmem:[%s2700] sm:$0xf]
        %2702 = vrot.lane.b32.xlu0 %v826, 36
        %v2703 = vpop.permute.xlu0 %2702
        %2704 = vrot.lane.b32.xlu0 %v827, 36
        %v2705 = vpop.permute.xlu0 %2704
        %2706 = vrot.lane.b32.xlu0 %v828, 36
        %v2707 = vpop.permute.xlu0 %2706
        %2708 = vrot.lane.b32.xlu0 %v829, 36
        %v2709 = vpop.permute.xlu0 %2708
        %vm2710 = vcmask 293888
        %v2711 = vsel %vm2710, %v2703, %v2705
        %v2712 = vsel %vm2710, %v2705, %v2707
        %v2713 = vsel %vm2710, %v2707, %v2709
        %v2718 = vsel %vm208, %v2701, 0
        %2720 = vmatprep.subr.bf16.mxu0 %v2712
        %2721 = vmatpush1.bf16.msra.mxu0 %v2711
        %2722 = vmatprep.subr.bf16.mxu0 0
        %2723 = vmatpush1.bf16.msra.mxu0 0
        %2724 = vmatprep.subr.bf16.mxu0 0
        %2725 = vmatpush1.bf16.msra.mxu0 0
        %2726 = vmatprep.subr.bf16.mxu0 0
        %2727 = vmatpush1.bf16.msra.mxu0 0
        %2728 = vmatprep.subr.bf16.mxu0 0
        %2729 = vmatpush1.bf16.msra.mxu0 0
        %2730 = vmatprep.subr.bf16.mxu0 0
        %2731 = vmatpush1.bf16.msra.mxu0 0
        %2732 = vmatprep.subr.bf16.mxu0 0
        %2733 = vmatpush1.bf16.msra.mxu0 0
        %2734 = vmatprep.subr.bf16.mxu0 0
        %2735 = vmatpush1.bf16.msra.mxu0 0
        %2736 = vmatprep.subr.bf16.mxu0 0
        %2737 = vmatpush1.bf16.msra.mxu0 0
        %2738 = vmatprep.subr.bf16.mxu0 0
        %2739 = vmatpush1.bf16.msra.mxu0 0
        %2740 = vmatprep.subr.bf16.mxu0 0
        %2741 = vmatpush1.bf16.msra.mxu0 0
        %2742 = vmatprep.subr.bf16.mxu0 0
        %2743 = vmatpush1.bf16.msra.mxu0 0
        %2744 = vmatprep.subr.bf16.mxu0 0
        %2745 = vmatpush1.bf16.msra.mxu0 0
        %2746 = vmatprep.subr.bf16.mxu0 0
        %2747 = vmatpush1.bf16.msra.mxu0 0
        %2748 = vmatprep.subr.bf16.mxu0 0
        %2749 = vmatpush1.bf16.msra.mxu0 0
        %2750 = vmatprep.subr.bf16.mxu0 0
        %2751 = vmatpush1.bf16.msra.mxu0 0
        %2752 = vmatprep.mubr.bf16.mxu0 0
        %2753 = vmatmul.mubr.bf16.gmra.mrb[0].mxu0 %v2718
        %v2754 = vpop.f32.mrb[0].mxu0
        %v2755 = vadd.f32 0.0, %v2754
        %v2756 = vpop.f32.mrb[0].mxu0
        %v2757 = vadd.f32 0.0, %v2756
        %v2758 = vpop.f32.mrb[0].mxu0
        %v2759 = vpop.f32.mrb[0].mxu0
        %2760 = vdwg.mxu0
        %2761 = vmatprep.subr.bf16.mxu0 0
        %2762 = vmatpush1.bf16.msra.mxu0 %v2713
        %2763 = vmatprep.subr.bf16.mxu0 0
        %2764 = vmatpush1.bf16.msra.mxu0 0
        %2765 = vmatprep.subr.bf16.mxu0 0
        %2766 = vmatpush1.bf16.msra.mxu0 0
        %2767 = vmatprep.subr.bf16.mxu0 0
        %2768 = vmatpush1.bf16.msra.mxu0 0
        %2769 = vmatprep.subr.bf16.mxu0 0
        %2770 = vmatpush1.bf16.msra.mxu0 0
        %2771 = vmatprep.subr.bf16.mxu0 0
        %2772 = vmatpush1.bf16.msra.mxu0 0
        %2773 = vmatprep.subr.bf16.mxu0 0
        %2774 = vmatpush1.bf16.msra.mxu0 0
        %2775 = vmatprep.subr.bf16.mxu0 0
        %2776 = vmatpush1.bf16.msra.mxu0 0
        %2777 = vmatprep.subr.bf16.mxu0 0
        %2778 = vmatpush1.bf16.msra.mxu0 0
        %2779 = vmatprep.subr.bf16.mxu0 0
        %2780 = vmatpush1.bf16.msra.mxu0 0
        %2781 = vmatprep.subr.bf16.mxu0 0
        %2782 = vmatpush1.bf16.msra.mxu0 0
        %2783 = vmatprep.subr.bf16.mxu0 0
        %2784 = vmatpush1.bf16.msra.mxu0 0
        %2785 = vmatprep.subr.bf16.mxu0 0
        %2786 = vmatpush1.bf16.msra.mxu0 0
        %2787 = vmatprep.subr.bf16.mxu0 0
        %2788 = vmatpush1.bf16.msra.mxu0 0
        %2789 = vmatprep.subr.bf16.mxu0 0
        %2790 = vmatpush1.bf16.msra.mxu0 0
        %2791 = vmatprep.subr.bf16.mxu0 0
        %2792 = vmatpush1.bf16.msra.mxu0 0
        %2793 = vmatprep.mubr.bf16.mxu0 0
        %2794 = vmatmul.mubr.bf16.gmra.mrb[0].mxu0 %v2718
        %v2795 = vpop.f32.mrb[0].mxu0
        %v2796 = vadd.f32 0.0, %v2795
        %v2797 = vpop.f32.mrb[0].mxu0
        %v2798 = vpop.f32.mrb[0].mxu0
        %v2799 = vpop.f32.mrb[0].mxu0
        %2800 = vdwg.mxu0
        %v2801 = vadd.f32 %v2697, %v2755
        %v2802 = vadd.f32 %v2698, %v2757
        %v2803 = vadd.f32 %v2699, %v2796
        %v2804 = vld [vmem:[%s2] sm:$0xff]
        %2806 = vset.pattern.permute.xlu0 0
        %2807 = vperm.xlu0 %2806, %v2804
        %v2808 = vpop.permute.xlu0 %2807
        %v2810 = vadd.f32 %v2801, %v2808
        %v2811 = vadd.f32 %v2802, %v2808
        %v2812 = vadd.f32 %v2803, %v2808
        %2813 = vst [vmem:[%s163] sm:$0xff] %v2810
        %2814 = vst [vmem:[%s163 + $0x8] sm:$0xff] %v2811
        %2815 = vst [vmem:[%s163 + $0x10] sm:$0xff] %v2812
        %s2816 = sand.u32 %s93, 1
        %s2817 = scalar_lea.sflag [#allocation3], %s2816
        %s2818 = sand.u32 %s93, 1
        %s2819 = smul.addr %s2818, 24
        %s2820 = scalar_lea.vmem [#allocation2], %s2819
        // Predicated region
        $region33: #{tpu_custom_call.1} parent=31 // pred_check
          %p2821 = pneg %p103
        $region34: #{tpu_custom_call.1} parent=31 // pred_check_branch
          %2823 = sbr.rel (%p2821) target = $region36
        $region35: #{tpu_custom_call.1} parent=31 // pred_region
          %s2825 = ssub.s32 384, 384
          %2826 = vsyncadd %s2817, %s2825
          %s2827 = smul.addr %s17, 3
          %s2828 = smul.addr %s2827, 128
          %s2829 = scalar_lea.hbm %s3, %s2828
          %s2831 = sshll.u32 %s2820, 4
          %s2832 = int_to_ptr.vmem [resolvable:$true] %s2831
          %2834 = dma.vmem_to_hbm [thread:$0]  %s2832, 384, %s2829, %s2817
        $region36: #{tpu_custom_call.1} parent=31 // pred_fallthru
          _
      $region32: #{tpu_custom_call.1} parent=5 // pred_fallthru
        _
      %p2835 = scmp.le.s32.totalorder 2, %s12
      // Predicated region
      $region37: #{tpu_custom_call.1} parent=5 // pred_check
        %p2836 = pneg %p2835
      $region38: #{tpu_custom_call.1} parent=5 // pred_check_branch
        %2838 = sbr.rel (%p2836) target = $region40
      $region39: #{tpu_custom_call.1} parent=5 // pred_region
        %s2839 = ssub.s32 %s12, 2
        // Predicated region
        $region41: #{tpu_custom_call.1} parent=39 // pred_check
          %p2840 = pneg %p109
        $region42: #{tpu_custom_call.1} parent=39 // pred_check_branch
          %2842 = sbr.rel (%p2840) target = $region44
        $region43: #{tpu_custom_call.1} parent=39 // pred_region
          %s2843 = sand.u32 %s94, 1
          %s2844 = scalar_lea.sflag [#allocation3], %s2843
          %s2845 = sand.u32 %s94, 1
          %s2846 = smul.addr %s2845, 24
          %s2847 = scalar_lea.vmem [#allocation2], %s2846
          %2848 = dma.done %s2844, 384
        $region44: #{tpu_custom_call.1} parent=39 // pred_fallthru
          _
      $region40: #{tpu_custom_call.1} parent=5 // pred_fallthru
        _
    $region6: #{tpu_custom_call.1} parent=1 // loop_footer
      %s16 = sadd.s32 1, %s12
    $region7: #{tpu_custom_call.1} parent=1 // loop_footer_branch
      %11 = sbr.rel target = $region3
    $region8: #{tpu_custom_call.1} parent=1 // loop_exit
      _
    %2849 = vsyncpa [#allocation3], 1
    %s2850 = scalar_lea.sflag [#allocation3], 1
    %2851 = vsyncpa %s2850, 1

</llo_original>
